<compile_context>
chip_gen: v7x
topology: tpu7x:2x2x1
jax: 0.10.0
libtpu: 0.0.40
codegen_flags: <defaults>
</compile_context>

<pallas_src>
import functools

import jax
import jax.numpy as jnp
from jax import lax
from jax.experimental import pallas as pl
from jax.experimental.pallas import tpu as pltpu


def _round_up(x, m):
    return (x + m - 1) // m * m


def _temp_bytes_per_lane(Hp, Wp):
    # rowW + colW + g + a handful of (1, T) coordinate/weight vectors (each
    # padded to 8 sublanes when materialized), all f32.
    return 4 * (_round_up(Hp, 8) + 2 * _round_up(Wp, 8) + 16 * 8)


def _pick_pixel_tile(N, Hp, Wp, budget_bytes=6 << 20):
    """Largest lane-aligned (multiple-of-128) tile whose temporaries fit the budget."""
    per_lane = _temp_bytes_per_lane(Hp, Wp)
    tn = 128
    for cand in (1024, 512, 256):
        if per_lane * cand <= budget_bytes:
            tn = cand
            break
    return min(tn, _round_up(N, 128))


def _warp_kernel(xy_ref, img_ref, out_ref, *, Hp, Wp, C):
    """One (batch, pixel-tile) step of the separable bilinear warp.

    xy_ref  : (2, T)      absolute sample coords in the padded image (row 0 = x, row 1 = y)
    img_ref : (C, Wp, Hp) zero-padded moving image for this batch, channel-major, H last
    out_ref : (C, T)      warped output, channel-major
    """
    xy = xy_ref[...]                         # (2, T) f32
    x = xy[0:1, :]
    y = xy[1:2, :]

    max_x = float(Wp - 1)
    max_y = float(Hp - 1)
    x0 = jnp.floor(x)
    x1 = x0 + 1.0
    y0 = jnp.floor(y)
    y1 = y0 + 1.0
    x0 = jnp.clip(x0, 0.0, max_x)
    x1 = jnp.clip(x1, 0.0, max_x)
    y0 = jnp.clip(y0, 0.0, max_y)
    y1 = jnp.clip(y1, 0.0, max_y)

    # Bilinear weights from the *clamped* x1/y1, exactly as in the torch code.
    wx = x1 - x                              # weight of column x0
    wy = y1 - y                              # weight of row y0

    x0i = x0.astype(jnp.int32)
    x1i = x1.astype(jnp.int32)
    y0i = y0.astype(jnp.int32)
    y1i = y1.astype(jnp.int32)

    # Separable one-hot weight factors.  Coincident indices after clamping sum
    # their weights (the `+`), matching the reference's sum of four gathers.
    # Iotas are (Hp, 1)/(Wp, 1) and broadcast against the (1, T) index vectors
    # (no materialized (P, T) iota).
    h_iota = lax.broadcasted_iota(jnp.int32, (Hp, 1), 0)
    w_iota = lax.broadcasted_iota(jnp.int32, (Wp, 1), 0)
    zero = jnp.float32(0.0)
    rowW = (jnp.where(h_iota == y0i, wy, zero)
            + jnp.where(h_iota == y1i, 1.0 - wy, zero))          # (Hp, T)
    colW = (jnp.where(w_iota == x0i, wx, zero)
            + jnp.where(w_iota == x1i, 1.0 - wx, zero))          # (Wp, T)

    # Stage 1 (MXU): per-channel row selection/weighting, (Wp, Hp) @ (Hp, T).
    # Stage 2 (VPU/XLU): column weighting + reduce over Wp.
    rows = []
    for c in range(C):                       # C is small; static unroll
        g = jnp.dot(img_ref[c], rowW,
                    preferred_element_type=jnp.float32,
                    precision=lax.Precision.HIGHEST)             # (Wp, T)
        rows.append(jnp.sum(g * colW, axis=0, keepdims=True))    # (1, T)
    out_ref[...] = jnp.concatenate(rows, axis=0).astype(out_ref.dtype)


def spatial_transformation(moving_image, deformation_matrix):
    """moving_image: (B, H, W, C); deformation_matrix: (B, H, W, 2) -> (B, H, W, C) float32."""
    B, H, W, C = moving_image.shape
    Hp, Wp = H + 2, W + 2
    N = H * W

    # Zero-pad by 1 on H and W (== F.pad(im, (0,0,1,1,1,1,0,0))); lay the
    # per-batch image out channel-major with H (the matmul-contraction axis) last.
    im_pad = jnp.pad(moving_image.astype(jnp.float32),
                     ((0, 0), (1, 1), (1, 1), (0, 0)))           # (B, Hp, Wp, C)
    imT = jnp.transpose(im_pad, (0, 3, 2, 1))                    # (B, C, Wp, Hp)

    # Fold the identity mesh and the +1 pad shift into the deformation stream on
    # the host (fuses with the layout change above): row 0 = x, row 1 = y in
    # padded-image coordinates.  Same FP op order as the torch reference.
    dx = deformation_matrix[..., 0].astype(jnp.float32)
    dy = deformation_matrix[..., 1].astype(jnp.float32)
    xm = jnp.arange(W, dtype=jnp.float32)[None, None, :]
    ym = jnp.arange(H, dtype=jnp.float32)[None, :, None]
    x = (dx + xm) + 1.0
    y = (dy + ym) + 1.0
    xy = jnp.stack([x.reshape(B, N), y.reshape(B, N)], axis=1)   # (B, 2, N)

    # Lane-dense pixel tile: multiple of 128, sized against in-kernel temporaries.
    tn = _pick_pixel_tile(N, Hp, Wp)
    # Prefer >= 2 grid steps so both v7x TensorCores get work (keep tn a
    # multiple of 128).
    while (B * (_round_up(N, tn) // tn) < 2 and tn >= 256
           and (tn // 2) % 128 == 0):
        tn //= 2
    Npad = _round_up(N, tn)
    if Npad > N:
        xy = jnp.pad(xy, ((0, 0), (0, 0), (0, Npad - N)))

    grid = (B, Npad // tn)

    # VMEM accounting: double-buffered blocks + in-kernel temporaries.
    img_blk = C * _round_up(Wp, 8) * _round_up(Hp, 128) * 4
    xy_blk = 8 * tn * 4
    out_blk = _round_up(C, 8) * tn * 4
    est = 2 * (img_blk + xy_blk + out_blk) + _temp_bytes_per_lane(Hp, Wp) * tn
    vmem_limit = int(min(64 << 20, max(32 << 20, 2 * est)))

    outT = pl.pallas_call(
        functools.partial(_warp_kernel, Hp=Hp, Wp=Wp, C=C),
        out_shape=jax.ShapeDtypeStruct((B, C, Npad), jnp.float32),
        grid_spec=pltpu.PrefetchScalarGridSpec(
            num_scalar_prefetch=0,
            grid=grid,
            in_specs=[
                pl.BlockSpec((None, 2, tn), lambda b, j: (b, 0, j)),         # coord tile
                pl.BlockSpec((None, C, Wp, Hp), lambda b, j: (b, 0, 0, 0)),  # whole padded image (per batch)
            ],
            out_specs=pl.BlockSpec((None, C, tn), lambda b, j: (b, 0, j)),
        ),
        compiler_params=pltpu.CompilerParams(
            dimension_semantics=("parallel", "parallel"),
            vmem_limit_bytes=vmem_limit,
        ),
    )(xy, imT)

    # (B, C, Npad) -> (B, H, W, C); crop the lane padding.
    # TODO(synk): if the consumer accepts channels-first, skip this transpose
    # (and the imT transpose) to save two host-side HBM passes.
    out = outT[:, :, :N]
    return jnp.transpose(out, (0, 2, 1)).reshape(B, H, W, C)


def _reference(moving_image, deformation_matrix):
    """Pure-JAX mirror of the PyTorch forward (for correctness checking)."""
    B, H, W, C = moving_image.shape
    Hp, Wp = H + 2, W + 2
    im = jnp.pad(moving_image.astype(jnp.float32), ((0, 0), (1, 1), (1, 1), (0, 0)))
    imf = im.reshape(B, Hp * Wp, C)

    dx = deformation_matrix[..., 0]
    dy = deformation_matrix[..., 1]
    xm = jnp.tile(jnp.arange(W, dtype=jnp.float32)[None, :], (H, 1))
    ym = jnp.tile(jnp.arange(H, dtype=jnp.float32)[:, None], (1, W))
    x = (dx + xm) + 1.0
    y = (dy + ym) + 1.0
    x0 = jnp.floor(x); x1 = x0 + 1.0
    y0 = jnp.floor(y); y1 = y0 + 1.0
    x0 = jnp.clip(x0, 0.0, Wp - 1); x1 = jnp.clip(x1, 0.0, Wp - 1)
    y0 = jnp.clip(y0, 0.0, Hp - 1); y1 = jnp.clip(y1, 0.0, Hp - 1)
    wx = x1 - x; wy = y1 - y
    wa = wx * wy; wb = wx * (1 - wy); wc = (1 - wx) * wy; wd = (1 - wx) * (1 - wy)

    def gather(yi, xi):
        idx = (yi.astype(jnp.int32) * Wp + xi.astype(jnp.int32)).reshape(B, -1)
        idx = jnp.broadcast_to(idx[..., None], (B, H * W, C))
        return jnp.take_along_axis(imf, idx, axis=1).reshape(B, H, W, C)

    out = (wa[..., None] * gather(y0, x0) + wb[..., None] * gather(y1, x0)
           + wc[..., None] * gather(y0, x1) + wd[..., None] * gather(y1, x1))
    return out


if __name__ == "__main__":
    key = jax.random.PRNGKey(0)
    k_img, k_def = jax.random.split(key)
    B, H, W, C = 2, 16, 16, 4
    moving = jax.random.normal(k_img, (B, H, W, C), dtype=jnp.float32)
    # Displacements of a few pixels, including some that sample outside the
    # image (exercises the zero-pad ring and the clamping path).
    deform = 3.0 * jax.random.normal(k_def, (B, H, W, 2), dtype=jnp.float32)

    out = spatial_transformation(moving, deform)
    out = jax.block_until_ready(out)

    ref = _reference(moving, deform)
    assert out.shape == (B, H, W, C) and out.dtype == jnp.float32
    err = float(jnp.max(jnp.abs(out - ref)))
    assert jnp.allclose(out, ref, atol=1e-4, rtol=1e-4), err

    print("KERNEL_OK")
</pallas_src>

<mosaic_0001>
module attributes {stable_mosaic.version = 11 : i64} {
  func.func @_warp_kernel(%arg0: i32, %arg1: i32, %arg2: memref<1x2x256xf32, #tpu.memory_space<vmem>>, %arg3: memref<1x4x18x18xf32, #tpu.memory_space<vmem>>, %arg4: memref<1x4x256xf32, #tpu.memory_space<vmem>>) attributes {dimension_semantics = [#tpu.dimension_semantics<parallel>, #tpu.dimension_semantics<parallel>], iteration_bounds = array<i64: 2, 1>, scalar_prefetch = 0 : i64, scratch_operands = 0 : i64, tpu.core_type = #tpu.core_type<tc>, window_params = [{transform_indices = @transform_0, window_bounds = array<i64: 1, 2, 256>}, {transform_indices = @transform_1, window_bounds = array<i64: 1, 4, 18, 18>}, {transform_indices = @transform_2, window_bounds = array<i64: 1, 4, 256>}]} {
    %c0 = arith.constant 0 : index
    %c0_0 = arith.constant 0 : index
    %c0_1 = arith.constant 0 : index
    %0 = vector.load %arg2[%c0, %c0_0, %c0_1] : memref<1x2x256xf32, #tpu.memory_space<vmem>>, vector<1x2x256xf32>
    %1 = vector.shape_cast %0 : vector<1x2x256xf32> to vector<2x256xf32>
    %2 = vector.extract_strided_slice %1 {offsets = [0, 0], sizes = [1, 256], strides = [1, 1]} : vector<2x256xf32> to vector<1x256xf32>
    %3 = vector.extract_strided_slice %1 {offsets = [1, 0], sizes = [1, 256], strides = [1, 1]} : vector<2x256xf32> to vector<1x256xf32>
    %4 = math.floor %2 : vector<1x256xf32>
    %cst = arith.constant 1.000000e+00 : f32
    %5 = vector.broadcast %cst : f32 to vector<1x256xf32>
    %6 = arith.addf %4, %5 : vector<1x256xf32>
    %7 = math.floor %3 : vector<1x256xf32>
    %cst_2 = arith.constant 1.000000e+00 : f32
    %8 = vector.broadcast %cst_2 : f32 to vector<1x256xf32>
    %9 = arith.addf %7, %8 : vector<1x256xf32>
    %cst_3 = arith.constant 0.000000e+00 : f32
    %cst_4 = arith.constant 1.700000e+01 : f32
    %10 = vector.broadcast %cst_3 : f32 to vector<1x256xf32>
    %11 = arith.maximumf %10, %4 : vector<1x256xf32>
    %12 = vector.broadcast %cst_4 : f32 to vector<1x256xf32>
    %13 = arith.minimumf %12, %11 : vector<1x256xf32>
    %cst_5 = arith.constant 0.000000e+00 : f32
    %cst_6 = arith.constant 1.700000e+01 : f32
    %14 = vector.broadcast %cst_5 : f32 to vector<1x256xf32>
    %15 = arith.maximumf %14, %6 : vector<1x256xf32>
    %16 = vector.broadcast %cst_6 : f32 to vector<1x256xf32>
    %17 = arith.minimumf %16, %15 : vector<1x256xf32>
    %cst_7 = arith.constant 0.000000e+00 : f32
    %cst_8 = arith.constant 1.700000e+01 : f32
    %18 = vector.broadcast %cst_7 : f32 to vector<1x256xf32>
    %19 = arith.maximumf %18, %7 : vector<1x256xf32>
    %20 = vector.broadcast %cst_8 : f32 to vector<1x256xf32>
    %21 = arith.minimumf %20, %19 : vector<1x256xf32>
    %cst_9 = arith.constant 0.000000e+00 : f32
    %cst_10 = arith.constant 1.700000e+01 : f32
    %22 = vector.broadcast %cst_9 : f32 to vector<1x256xf32>
    %23 = arith.maximumf %22, %9 : vector<1x256xf32>
    %24 = vector.broadcast %cst_10 : f32 to vector<1x256xf32>
    %25 = arith.minimumf %24, %23 : vector<1x256xf32>
    %26 = arith.subf %17, %2 : vector<1x256xf32>
    %27 = arith.subf %25, %3 : vector<1x256xf32>
    %28 = arith.fptosi %13 : vector<1x256xf32> to vector<1x256xi32>
    %29 = arith.fptosi %17 : vector<1x256xf32> to vector<1x256xi32>
    %30 = arith.fptosi %21 : vector<1x256xf32> to vector<1x256xi32>
    %31 = arith.fptosi %25 : vector<1x256xf32> to vector<1x256xi32>
    %32 = tpu.iota {dimensions = array<i32: 0>} : vector<18x1xi32>
    %33 = tpu.iota {dimensions = array<i32: 0>} : vector<18x1xi32>
    %34 = vector.broadcast %32 : vector<18x1xi32> to vector<18x256xi32>
    %35 = vector.broadcast %30 : vector<1x256xi32> to vector<18x256xi32>
    %36 = arith.cmpi eq, %34, %35 : vector<18x256xi32>
    %cst_11 = arith.constant 0.000000e+00 : f32
    %37 = vector.shape_cast %27 : vector<1x256xf32> to vector<1x256xf32>
    %38 = vector.broadcast %37 : vector<1x256xf32> to vector<18x256xf32>
    %39 = vector.broadcast %cst_11 : f32 to vector<18x256xf32>
    %40 = arith.select %36, %38, %39 : vector<18x256xi1>, vector<18x256xf32>
    %41 = vector.broadcast %32 : vector<18x1xi32> to vector<18x256xi32>
    %42 = vector.broadcast %31 : vector<1x256xi32> to vector<18x256xi32>
    %43 = arith.cmpi eq, %41, %42 : vector<18x256xi32>
    %cst_12 = arith.constant 1.000000e+00 : f32
    %44 = vector.broadcast %cst_12 : f32 to vector<1x256xf32>
    %45 = arith.subf %44, %27 : vector<1x256xf32>
    %cst_13 = arith.constant 0.000000e+00 : f32
    %46 = vector.shape_cast %45 : vector<1x256xf32> to vector<1x256xf32>
    %47 = vector.broadcast %46 : vector<1x256xf32> to vector<18x256xf32>
    %48 = vector.broadcast %cst_13 : f32 to vector<18x256xf32>
    %49 = arith.select %43, %47, %48 : vector<18x256xi1>, vector<18x256xf32>
    %50 = arith.addf %40, %49 : vector<18x256xf32>
    %51 = vector.broadcast %33 : vector<18x1xi32> to vector<18x256xi32>
    %52 = vector.broadcast %28 : vector<1x256xi32> to vector<18x256xi32>
    %53 = arith.cmpi eq, %51, %52 : vector<18x256xi32>
    %cst_14 = arith.constant 0.000000e+00 : f32
    %54 = vector.shape_cast %26 : vector<1x256xf32> to vector<1x256xf32>
    %55 = vector.broadcast %54 : vector<1x256xf32> to vector<18x256xf32>
    %56 = vector.broadcast %cst_14 : f32 to vector<18x256xf32>
    %57 = arith.select %53, %55, %56 : vector<18x256xi1>, vector<18x256xf32>
    %58 = vector.broadcast %33 : vector<18x1xi32> to vector<18x256xi32>
    %59 = vector.broadcast %29 : vector<1x256xi32> to vector<18x256xi32>
    %60 = arith.cmpi eq, %58, %59 : vector<18x256xi32>
    %cst_15 = arith.constant 1.000000e+00 : f32
    %61 = vector.broadcast %cst_15 : f32 to vector<1x256xf32>
    %62 = arith.subf %61, %26 : vector<1x256xf32>
    %cst_16 = arith.constant 0.000000e+00 : f32
    %63 = vector.shape_cast %62 : vector<1x256xf32> to vector<1x256xf32>
    %64 = vector.broadcast %63 : vector<1x256xf32> to vector<18x256xf32>
    %65 = vector.broadcast %cst_16 : f32 to vector<18x256xf32>
    %66 = arith.select %60, %64, %65 : vector<18x256xi1>, vector<18x256xf32>
    %67 = arith.addf %57, %66 : vector<18x256xf32>
    %c0_17 = arith.constant 0 : index
    %c0_18 = arith.constant 0 : index
    %c0_19 = arith.constant 0 : index
    %c0_20 = arith.constant 0 : index
    %68 = vector.load %arg3[%c0_17, %c0_18, %c0_19, %c0_20] : memref<1x4x18x18xf32, #tpu.memory_space<vmem>>, vector<1x1x18x18xf32>
    %69 = vector.shape_cast %68 : vector<1x1x18x18xf32> to vector<18x18xf32>
    %cst_21 = arith.constant dense<0.000000e+00> : vector<18x256xf32>
    %70 = tpu.matmul %69, %50, %cst_21 {dimension_numbers = #tpu.dot_dimension_numbers<[1], [0], [0], [1], [0, 0, 1, 1], [], []>, precision = #tpu.contract_precision<fp32>} : vector<18x18xf32>, vector<18x256xf32>, vector<18x256xf32> -> vector<18x256xf32>
    %71 = arith.mulf %70, %67 : vector<18x256xf32>
    %cst_22 = arith.constant dense<0.000000e+00> : vector<256xf32>
    %72 = vector.multi_reduction <add>, %71, %cst_22 [0] : vector<18x256xf32> to vector<256xf32>
    %73 = vector.shape_cast %72 : vector<256xf32> to vector<1x256xf32>
    %c0_23 = arith.constant 0 : index
    %c1 = arith.constant 1 : index
    %c0_24 = arith.constant 0 : index
    %c0_25 = arith.constant 0 : index
    %74 = vector.load %arg3[%c0_23, %c1, %c0_24, %c0_25] : memref<1x4x18x18xf32, #tpu.memory_space<vmem>>, vector<1x1x18x18xf32>
    %75 = vector.shape_cast %74 : vector<1x1x18x18xf32> to vector<18x18xf32>
    %cst_26 = arith.constant dense<0.000000e+00> : vector<18x256xf32>
    %76 = tpu.matmul %75, %50, %cst_26 {dimension_numbers = #tpu.dot_dimension_numbers<[1], [0], [0], [1], [0, 0, 1, 1], [], []>, precision = #tpu.contract_precision<fp32>} : vector<18x18xf32>, vector<18x256xf32>, vector<18x256xf32> -> vector<18x256xf32>
    %77 = arith.mulf %76, %67 : vector<18x256xf32>
    %cst_27 = arith.constant dense<0.000000e+00> : vector<256xf32>
    %78 = vector.multi_reduction <add>, %77, %cst_27 [0] : vector<18x256xf32> to vector<256xf32>
    %79 = vector.shape_cast %78 : vector<256xf32> to vector<1x256xf32>
    %c0_28 = arith.constant 0 : index
    %c2 = arith.constant 2 : index
    %c0_29 = arith.constant 0 : index
    %c0_30 = arith.constant 0 : index
    %80 = vector.load %arg3[%c0_28, %c2, %c0_29, %c0_30] : memref<1x4x18x18xf32, #tpu.memory_space<vmem>>, vector<1x1x18x18xf32>
    %81 = vector.shape_cast %80 : vector<1x1x18x18xf32> to vector<18x18xf32>
    %cst_31 = arith.constant dense<0.000000e+00> : vector<18x256xf32>
    %82 = tpu.matmul %81, %50, %cst_31 {dimension_numbers = #tpu.dot_dimension_numbers<[1], [0], [0], [1], [0, 0, 1, 1], [], []>, precision = #tpu.contract_precision<fp32>} : vector<18x18xf32>, vector<18x256xf32>, vector<18x256xf32> -> vector<18x256xf32>
    %83 = arith.mulf %82, %67 : vector<18x256xf32>
    %cst_32 = arith.constant dense<0.000000e+00> : vector<256xf32>
    %84 = vector.multi_reduction <add>, %83, %cst_32 [0] : vector<18x256xf32> to vector<256xf32>
    %85 = vector.shape_cast %84 : vector<256xf32> to vector<1x256xf32>
    %c0_33 = arith.constant 0 : index
    %c3 = arith.constant 3 : index
    %c0_34 = arith.constant 0 : index
    %c0_35 = arith.constant 0 : index
    %86 = vector.load %arg3[%c0_33, %c3, %c0_34, %c0_35] : memref<1x4x18x18xf32, #tpu.memory_space<vmem>>, vector<1x1x18x18xf32>
    %87 = vector.shape_cast %86 : vector<1x1x18x18xf32> to vector<18x18xf32>
    %cst_36 = arith.constant dense<0.000000e+00> : vector<18x256xf32>
    %88 = tpu.matmul %87, %50, %cst_36 {dimension_numbers = #tpu.dot_dimension_numbers<[1], [0], [0], [1], [0, 0, 1, 1], [], []>, precision = #tpu.contract_precision<fp32>} : vector<18x18xf32>, vector<18x256xf32>, vector<18x256xf32> -> vector<18x256xf32>
    %89 = arith.mulf %88, %67 : vector<18x256xf32>
    %cst_37 = arith.constant dense<0.000000e+00> : vector<256xf32>
    %90 = vector.multi_reduction <add>, %89, %cst_37 [0] : vector<18x256xf32> to vector<256xf32>
    %91 = vector.shape_cast %90 : vector<256xf32> to vector<1x256xf32>
    %92 = tpu.concatenate %73, %79, %85, %91 in 0 : vector<1x256xf32>, vector<1x256xf32>, vector<1x256xf32>, vector<1x256xf32> -> vector<4x256xf32>
    %c0_38 = arith.constant 0 : index
    %c0_39 = arith.constant 0 : index
    %c0_40 = arith.constant 0 : index
    %93 = vector.load %arg4[%c0_38, %c0_39, %c0_40] : memref<1x4x256xf32, #tpu.memory_space<vmem>>, vector<1x4x256xf32>
    %94 = vector.shape_cast %93 : vector<1x4x256xf32> to vector<4x256xf32>
    %95 = vector.shape_cast %92 : vector<4x256xf32> to vector<1x4x256xf32>
    tpu.vector_store %arg4[%c0_38, %c0_39, %c0_40], %95 {strides = array<i32>} : memref<1x4x256xf32, #tpu.memory_space<vmem>>, vector<1x4x256xf32>,
    return
  }
  func.func @transform_0(%arg0: i32, %arg1: i32) -> (i32, i32, i32) {
    %c0_i32 = arith.constant 0 : i32
    %c0_i32_0 = arith.constant 0 : i32
    return %arg0, %c0_i32, %arg1 : i32, i32, i32
  }
  func.func @transform_1(%arg0: i32, %arg1: i32) -> (i32, i32, i32, i32) {
    %c0_i32 = arith.constant 0 : i32
    %c0_i32_0 = arith.constant 0 : i32
    %c0_i32_1 = arith.constant 0 : i32
    %c0_i32_2 = arith.constant 0 : i32
    return %arg0, %c0_i32, %c0_i32_0, %c0_i32_1 : i32, i32, i32, i32
  }
  func.func @transform_2(%arg0: i32, %arg1: i32) -> (i32, i32, i32) {
    %c0_i32 = arith.constant 0 : i32
    %c0_i32_0 = arith.constant 0 : i32
    return %arg0, %c0_i32, %arg1 : i32, i32, i32
  }
}

</mosaic_0001>

<llo_original>
// kernel: tpu_custom_call.1
$region0: #{tpu_custom_call.1}
  #allocation0 [shape = 'u32[]', space=smem, size = 0x4, offset = 0x4, fixed_abs, tag = 'smem constant byte address 0x4 - core index']
  #allocation1 [shape = 'u32[144,128]{1,0:T(1,128)}', space=vmem, size = 0x12000, scoped, tag = 'internal scratch']
  %s0 = inlined_call_operand.vmem [shape: f32[2,2,256], index: 0, kind: input, shape index: {}]
  %s1 = inlined_call_operand.vmem [shape: f32[2,4,18,18], index: 1, kind: input, shape index: {}]
  %s2 = inlined_call_operand.hbm [shape: f32[2,4,256], index: 2, kind: output, shape index: {}]
  %s3 = sld [smem:[#allocation0]]
  $region41: #{tpu_custom_call.1} parent=0
    _
  %s5 = ssub.s32 1, %s3
  %s6 = scalar_select 0, %s5, %s3
  $region1: #{tpu_custom_call.1} parent=0
    #allocation2 [shape = 'u8[8192]{0}', space=vmem, size = 0x2000, scoped, tag = 'output window, operand 0']
    #allocation3 [shape = 's32[2]{0}', space=sflag, size = 0x8, scoped, tag = 'scoped memory for tpu_custom_call.1']
    %7 = vsyncpa [#allocation3], 0
    %s8 = scalar_lea.sflag [#allocation3], 1
    %9 = vsyncpa %s8, 0
    loop: start=0, step=1, limit=4
    $region2: #{tpu_custom_call.1} parent=1 // loop_pre_header
      _
    $region3: #{tpu_custom_call.1} parent=1 // loop_header
      %s11 = sphi 0, %s15
      %p12 = scmp.ge.s32.totalorder %s11, 4
      %s18 = sphi 0, %s30
      %s19 = sphi 0, %s26
      %s20 = sphi 0, %s18
      %s21 = sphi 0, %s19
      %s22 = sphi 0, %s20
      %s23 = sphi 0, %s21
      %s35 = sphi 0, %s37
      %s38 = sphi 0, %s35
      %s39 = sphi 0, %s38
      %s55 = sphi 0, %s39
      %s61 = sphi 0, %s63
      %s64 = sphi 0, %s61
      %s65 = sphi 0, %s64
      %s81 = sphi 0, %s65
      %s89 = sphi 0, %s91
      %s92 = sphi 0, %s89
      %s93 = sphi 0, %s92
      %s109 = sphi 0, %s93
    $region4: #{tpu_custom_call.1} parent=1 // loop_header_branch
      %14 = sbr.rel (%p12) target = $region8
    $region5: #{tpu_custom_call.1} parent=1 // loop_body
      %s16 = ssub.s32 %s11, 1
      %s17 = ssub.s32 %s11, 2
      %s24 = sadd.s32 1, %s19
      %p25 = scmp.ge.s32.totalorder %s24, 1
      %s26 = scalar_select %p25, 0, %s24
      %s27 = sadd.s32 1, %s18
      %s28 = scalar_select %p25, %s27, %s18
      %p29 = scmp.ge.s32.totalorder %s28, 2
      %s30 = scalar_select %p29, 0, %s28
      %s31 = ssub.s32 %s18, %s30
      %s32 = ssub.s32 %s19, %s26
      %s33 = sor.u32 %s31, %s32
      %p34 = scmp.eq.s32.totalorder %s33, 0
      %s36 = sadd.s32 %s35, 1
      %s37 = scalar_select %p34, %s35, %s36
      %p40 = pneg %p34
      %p41 = scmp.eq.s32.totalorder %s11, 1
      %p42 = por %p40, %p41
      %p43 = scmp.ne.s32.totalorder %s35, %s38
      %p44 = scmp.eq.s32.totalorder %s11, 0
      %p45 = por %p43, %p44
      %p46 = scmp.ne.s32.totalorder %s35, %s38
      %p47 = scmp.eq.s32.totalorder %s16, 1
      %p48 = por %p46, %p47
      %p49 = scmp.ne.s32.totalorder %s38, %s39
      %p50 = scmp.eq.s32.totalorder %s16, 0
      %p51 = por %p49, %p50
      %p52 = scmp.ne.s32.totalorder %s38, %s39
      %p53 = scmp.eq.s32.totalorder %s17, 1
      %p54 = por %p52, %p53
      %p56 = scmp.ne.s32.totalorder %s39, %s55
      %p57 = scmp.eq.s32.totalorder %s17, 0
      %p58 = por %p56, %p57
      %s59 = ssub.s32 %s18, %s30
      %p60 = scmp.eq.s32.totalorder %s59, 0
      %s62 = sadd.s32 %s61, 1
      %s63 = scalar_select %p60, %s61, %s62
      %p66 = pneg %p60
      %p67 = scmp.eq.s32.totalorder %s11, 1
      %p68 = por %p66, %p67
      %p69 = scmp.ne.s32.totalorder %s61, %s64
      %p70 = scmp.eq.s32.totalorder %s11, 0
      %p71 = por %p69, %p70
      %p72 = scmp.ne.s32.totalorder %s61, %s64
      %p73 = scmp.eq.s32.totalorder %s16, 1
      %p74 = por %p72, %p73
      %p75 = scmp.ne.s32.totalorder %s64, %s65
      %p76 = scmp.eq.s32.totalorder %s16, 0
      %p77 = por %p75, %p76
      %p78 = scmp.ne.s32.totalorder %s64, %s65
      %p79 = scmp.eq.s32.totalorder %s17, 1
      %p80 = por %p78, %p79
      %p82 = scmp.ne.s32.totalorder %s65, %s81
      %p83 = scmp.eq.s32.totalorder %s17, 0
      %p84 = por %p82, %p83
      %s85 = ssub.s32 %s18, %s30
      %s86 = ssub.s32 %s19, %s26
      %s87 = sor.u32 %s85, %s86
      %p88 = scmp.eq.s32.totalorder %s87, 0
      %s90 = sadd.s32 %s89, 1
      %s91 = scalar_select %p88, %s89, %s90
      %p94 = pneg %p88
      %p95 = scmp.eq.s32.totalorder %s11, 1
      %p96 = por %p94, %p95
      %p97 = scmp.ne.s32.totalorder %s89, %s92
      %p98 = scmp.eq.s32.totalorder %s11, 0
      %p99 = por %p97, %p98
      %p100 = scmp.ne.s32.totalorder %s89, %s92
      %p101 = scmp.eq.s32.totalorder %s16, 1
      %p102 = por %p100, %p101
      %p103 = scmp.ne.s32.totalorder %s92, %s93
      %p104 = scmp.eq.s32.totalorder %s16, 0
      %p105 = por %p103, %p104
      %p106 = scmp.ne.s32.totalorder %s92, %s93
      %p107 = scmp.eq.s32.totalorder %s17, 1
      %p108 = por %p106, %p107
      %p110 = scmp.ne.s32.totalorder %s93, %s109
      %p111 = scmp.eq.s32.totalorder %s17, 0
      %p112 = por %p110, %p111
      %p113 = scmp.le.s32.totalorder 1, %s11
      %p114 = scmp.lt.s32.totalorder %s11, 3
      %p115 = pnand %p113, %p114
      %p116 = pneg %p115
      // Predicated region
      $region9: #{tpu_custom_call.1} parent=5 // pred_check
        _
      $region10: #{tpu_custom_call.1} parent=5 // pred_check_branch
        %118 = sbr.rel (%p115) target = $region12
      $region11: #{tpu_custom_call.1} parent=5 // pred_region
        %s119 = ssub.s32 %s11, 1
      $region12: #{tpu_custom_call.1} parent=5 // pred_fallthru
        _
      %p120 = scmp.lt.s32.totalorder %s11, 2
      // Predicated region
      $region13: #{tpu_custom_call.1} parent=5 // pred_check
        %p121 = pneg %p120
      $region14: #{tpu_custom_call.1} parent=5 // pred_check_branch
        %123 = sbr.rel (%p121) target = $region16
      $region15: #{tpu_custom_call.1} parent=5 // pred_region
        // Predicated region
        $region17: #{tpu_custom_call.1} parent=15 // pred_check
          %p124 = pneg %p45
        $region18: #{tpu_custom_call.1} parent=15 // pred_check_branch
          %126 = sbr.rel (%p124) target = $region20
        $region19: #{tpu_custom_call.1} parent=15 // pred_region
          %s127 = smul.u32 2, %s19
          %p128 = scmp.lt.s32.totalorder %s18, 1
          %s129 = scalar_select %p128, %s18, 1
          %p130 = scmp.lt.s32.totalorder %s127, 1
          %s131 = scalar_select %p130, %s127, 1
          %s132 = smul.addr %s129, 2
          %s133 = sadd.s32 %s131, %s132
          %s134 = smul.addr %s133, 2
          %s135 = scalar_lea.vmem %s0, %s134
          %s136 = smul.u32 2, %s19
        $region20: #{tpu_custom_call.1} parent=15 // pred_fallthru
          _
        // Predicated region
        $region21: #{tpu_custom_call.1} parent=15 // pred_check
          %p137 = pneg %p71
        $region22: #{tpu_custom_call.1} parent=15 // pred_check_branch
          %139 = sbr.rel (%p137) target = $region24
        $region23: #{tpu_custom_call.1} parent=15 // pred_region
          %p140 = scmp.lt.s32.totalorder %s18, 1
          %s141 = scalar_select %p140, %s18, 1
          %s142 = smul.addr %s141, 12
          %s143 = smul.addr %s142, 8
          %s144 = scalar_lea.vmem %s1, %s143
        $region24: #{tpu_custom_call.1} parent=15 // pred_fallthru
          _
      $region16: #{tpu_custom_call.1} parent=5 // pred_fallthru
        _
      %p145 = scmp.le.s32.totalorder 1, %s11
      %p146 = scmp.lt.s32.totalorder %s11, 3
      %p147 = pnand %p145, %p146
      %p148 = pneg %p147
      // Predicated region
      $region25: #{tpu_custom_call.1} parent=5 // pred_check
        _
      $region26: #{tpu_custom_call.1} parent=5 // pred_check_branch
        %150 = sbr.rel (%p147) target = $region28
      $region27: #{tpu_custom_call.1} parent=5 // pred_region
        %s151 = ssub.s32 %s11, 1
        %s152 = smul.u32 2, %s21
        %p153 = scmp.lt.s32.totalorder %s20, 1
        %s154 = scalar_select %p153, %s20, 1
        %p155 = scmp.lt.s32.totalorder %s152, 1
        %s156 = scalar_select %p155, %s152, 1
        %s157 = smul.addr %s154, 2
        %s158 = sadd.s32 %s156, %s157
        %s159 = smul.addr %s158, 2
        %s160 = scalar_lea.vmem %s0, %s159
        %p161 = pneg %p51
        %p162 = pneg %p48
        %p163 = scmp.lt.s32.totalorder %s20, 1
        %s164 = scalar_select %p163, %s20, 1
        %s165 = smul.addr %s164, 12
        %s166 = smul.addr %s165, 8
        %s167 = scalar_lea.vmem %s1, %s166
        %p168 = pneg %p77
        %p169 = pneg %p74
        %p170 = pneg %p105
        %p171 = pneg %p102
        %s172 = sand.u32 %s92, 1
        %s173 = scalar_lea.sflag [#allocation3], %s172
        %s174 = sand.u32 %s92, 1
        %s175 = smul.addr %s174, 8
        %s176 = scalar_lea.vmem [#allocation2], %s175
        %s177 = smul.u32 2, %s21
        %p178 = scmp.lt.s32.totalorder %s20, 1
        %s179 = scalar_select %p178, %s20, 1
        %p180 = scmp.lt.s32.totalorder %s177, 1
        %s181 = scalar_select %p180, %s177, 1
        %s182 = smul.addr %s179, 2
        %s183 = sadd.s32 %s181, %s182
        %s184 = smul.addr %s183, 2
        %s185 = scalar_lea.vmem %s0, %s184
        %s186 = smul.u32 2, %s21
        %p187 = scmp.lt.s32.totalorder %s20, 1
        %s188 = scalar_select %p187, %s20, 1
        %s189 = smul.addr %s188, 12
        %s190 = smul.addr %s189, 8
        %s191 = scalar_lea.vmem %s1, %s190
        %s192 = smul.u32 2, %s21
        %v193 = vld [vmem:[%s185] sm:$0xf]
        %v194 = vfloor.f32 %v193
        %v195 = vadd.f32 %v194, 1.0
        %v196 = vmax.f32 %v194, 0.0
        %v197 = vmin.f32 %v196, 17.0
        %v198 = vmax.f32 %v195, 0.0
        %v199 = vmin.f32 %v198, 17.0
        %v200 = vsub.f32 %v199, %v193
        %v201 = vcvt.f32.s32.to.zero.pseudo %v197
        %v202 = vcvt.f32.s32.to.zero.pseudo %v199
        %v203 = vlaneseq
        %v204 = vshrl.u32 %v203, 7
        %v205 = vadd.s32 %v204, 8
        %v206 = vadd.s32 %v204, 16
        %v207 = vlaneseq
        %v208 = vshrl.u32 %v207, 7
        %v209 = vsub.s32 1, %v208
        %v210 = vrot.slane %v201, %v209
        %v211 = vlaneseq
        %v212 = vshrl.u32 %v211, 7
        %v213 = vsub.s32 3, %v212
        %v214 = vrot.slane %v201, %v213
        %v215 = vlaneseq
        %v216 = vshrl.u32 %v215, 7
        %v217 = vsub.s32 1, %v216
        %v218 = vrot.slane %v210, %v217
        %v219 = vlaneseq
        %v220 = vshrl.u32 %v219, 7
        %v221 = vsub.s32 1, %v220
        %v222 = vrot.slane %v214, %v221
        %vm223 = vcmp.eq.s32.totalorder %v204, %v218
        %vm224 = vcmp.eq.s32.totalorder %v204, %v222
        %vm225 = vcmp.eq.s32.totalorder %v205, %v218
        %vm226 = vcmp.eq.s32.totalorder %v205, %v222
        %vm227 = vcmp.eq.s32.totalorder %v206, %v218
        %vm228 = vcmp.eq.s32.totalorder %v206, %v222
        %v230 = vlaneseq
        %v231 = vshrl.u32 %v230, 7
        %v232 = vsub.s32 1, %v231
        %v233 = vrot.slane %v200, %v232
        %v234 = vlaneseq
        %v235 = vshrl.u32 %v234, 7
        %v236 = vsub.s32 3, %v235
        %v237 = vrot.slane %v200, %v236
        %v240 = vlaneseq
        %v241 = vshrl.u32 %v240, 7
        %v242 = vsub.s32 1, %v241
        %v243 = vrot.slane %v233, %v242
        %v244 = vlaneseq
        %v245 = vshrl.u32 %v244, 7
        %v246 = vsub.s32 1, %v245
        %v247 = vrot.slane %v237, %v246
        %v248 = vsel %vm223, %v243, 0.0
        %v249 = vsel %vm224, %v247, 0.0
        %v250 = vsel %vm225, %v243, 0.0
        %v251 = vsel %vm226, %v247, 0.0
        %v252 = vsel %vm227, %v243, 0.0
        %v253 = vsel %vm228, %v247, 0.0
        %v254 = vlaneseq
        %v255 = vshrl.u32 %v254, 7
        %v256 = vsub.s32 1, %v255
        %v257 = vrot.slane %v202, %v256
        %v258 = vlaneseq
        %v259 = vshrl.u32 %v258, 7
        %v260 = vsub.s32 3, %v259
        %v261 = vrot.slane %v202, %v260
        %v262 = vlaneseq
        %v263 = vshrl.u32 %v262, 7
        %v264 = vsub.s32 1, %v263
        %v265 = vrot.slane %v257, %v264
        %v266 = vlaneseq
        %v267 = vshrl.u32 %v266, 7
        %v268 = vsub.s32 1, %v267
        %v269 = vrot.slane %v261, %v268
        %vm270 = vcmp.eq.s32.totalorder %v204, %v265
        %vm271 = vcmp.eq.s32.totalorder %v204, %v269
        %vm272 = vcmp.eq.s32.totalorder %v205, %v265
        %vm273 = vcmp.eq.s32.totalorder %v205, %v269
        %vm274 = vcmp.eq.s32.totalorder %v206, %v265
        %vm275 = vcmp.eq.s32.totalorder %v206, %v269
        %v276 = vsub.f32 1.0, %v200
        %v278 = vlaneseq
        %v279 = vshrl.u32 %v278, 7
        %v280 = vsub.s32 1, %v279
        %v281 = vrot.slane %v276, %v280
        %v282 = vlaneseq
        %v283 = vshrl.u32 %v282, 7
        %v284 = vsub.s32 3, %v283
        %v285 = vrot.slane %v276, %v284
        %v288 = vlaneseq
        %v289 = vshrl.u32 %v288, 7
        %v290 = vsub.s32 1, %v289
        %v291 = vrot.slane %v281, %v290
        %v292 = vlaneseq
        %v293 = vshrl.u32 %v292, 7
        %v294 = vsub.s32 1, %v293
        %v295 = vrot.slane %v285, %v294
        %v296 = vsel %vm270, %v291, 0.0
        %v297 = vsel %vm271, %v295, 0.0
        %v298 = vsel %vm272, %v291, 0.0
        %v299 = vsel %vm273, %v295, 0.0
        %v300 = vsel %vm274, %v291, 0.0
        %v301 = vsel %vm275, %v295, 0.0
        %v302 = vadd.f32 %v248, %v296
        %v303 = vadd.f32 %v249, %v297
        %v304 = vadd.f32 %v250, %v298
        %v305 = vadd.f32 %v251, %v299
        %v306 = vadd.f32 %v252, %v300
        %v307 = vadd.f32 %v253, %v301
        %v308 = vlaneseq
        %v309 = vshrl.u32 %v308, 7
        %v310 = vsub.s32 0, %v309
        %v311 = vrot.slane %v201, %v310
        %v312 = vlaneseq
        %v313 = vshrl.u32 %v312, 7
        %v314 = vsub.s32 2, %v313
        %v315 = vrot.slane %v201, %v314
        %v316 = vlaneseq
        %v317 = vshrl.u32 %v316, 7
        %v318 = vsub.s32 0, %v317
        %v319 = vrot.slane %v311, %v318
        %v320 = vlaneseq
        %v321 = vshrl.u32 %v320, 7
        %v322 = vsub.s32 0, %v321
        %v323 = vrot.slane %v315, %v322
        %vm324 = vcmp.eq.s32.totalorder %v204, %v319
        %vm325 = vcmp.eq.s32.totalorder %v204, %v323
        %vm326 = vcmp.eq.s32.totalorder %v205, %v319
        %vm327 = vcmp.eq.s32.totalorder %v205, %v323
        %vm328 = vcmp.eq.s32.totalorder %v206, %v319
        %vm329 = vcmp.eq.s32.totalorder %v206, %v323
        %v330 = vlaneseq
        %v331 = vshrl.u32 %v330, 7
        %v332 = vsub.s32 0, %v331
        %v333 = vrot.slane %v200, %v332
        %v334 = vlaneseq
        %v335 = vshrl.u32 %v334, 7
        %v336 = vsub.s32 2, %v335
        %v337 = vrot.slane %v200, %v336
        %v340 = vlaneseq
        %v341 = vshrl.u32 %v340, 7
        %v342 = vsub.s32 0, %v341
        %v343 = vrot.slane %v333, %v342
        %v344 = vlaneseq
        %v345 = vshrl.u32 %v344, 7
        %v346 = vsub.s32 0, %v345
        %v347 = vrot.slane %v337, %v346
        %v348 = vsel %vm324, %v343, 0.0
        %v349 = vsel %vm325, %v347, 0.0
        %v350 = vsel %vm326, %v343, 0.0
        %v351 = vsel %vm327, %v347, 0.0
        %v352 = vsel %vm328, %v343, 0.0
        %v353 = vsel %vm329, %v347, 0.0
        %v354 = vlaneseq
        %v355 = vshrl.u32 %v354, 7
        %v356 = vsub.s32 0, %v355
        %v357 = vrot.slane %v202, %v356
        %v358 = vlaneseq
        %v359 = vshrl.u32 %v358, 7
        %v360 = vsub.s32 2, %v359
        %v361 = vrot.slane %v202, %v360
        %v362 = vlaneseq
        %v363 = vshrl.u32 %v362, 7
        %v364 = vsub.s32 0, %v363
        %v365 = vrot.slane %v357, %v364
        %v366 = vlaneseq
        %v367 = vshrl.u32 %v366, 7
        %v368 = vsub.s32 0, %v367
        %v369 = vrot.slane %v361, %v368
        %vm370 = vcmp.eq.s32.totalorder %v204, %v365
        %vm371 = vcmp.eq.s32.totalorder %v204, %v369
        %vm372 = vcmp.eq.s32.totalorder %v205, %v365
        %vm373 = vcmp.eq.s32.totalorder %v205, %v369
        %vm374 = vcmp.eq.s32.totalorder %v206, %v365
        %vm375 = vcmp.eq.s32.totalorder %v206, %v369
        %v376 = vlaneseq
        %v377 = vshrl.u32 %v376, 7
        %v378 = vsub.s32 0, %v377
        %v379 = vrot.slane %v276, %v378
        %v380 = vlaneseq
        %v381 = vshrl.u32 %v380, 7
        %v382 = vsub.s32 2, %v381
        %v383 = vrot.slane %v276, %v382
        %v386 = vlaneseq
        %v387 = vshrl.u32 %v386, 7
        %v388 = vsub.s32 0, %v387
        %v389 = vrot.slane %v379, %v388
        %v390 = vlaneseq
        %v391 = vshrl.u32 %v390, 7
        %v392 = vsub.s32 0, %v391
        %v393 = vrot.slane %v383, %v392
        %v394 = vsel %vm370, %v389, 0.0
        %v395 = vsel %vm371, %v393, 0.0
        %v396 = vsel %vm372, %v389, 0.0
        %v397 = vsel %vm373, %v393, 0.0
        %v398 = vsel %vm374, %v389, 0.0
        %v399 = vsel %vm375, %v393, 0.0
        %v400 = vadd.f32 %v348, %v394
        %v401 = vadd.f32 %v349, %v395
        %v402 = vadd.f32 %v350, %v396
        %v403 = vadd.f32 %v351, %v397
        %v404 = vadd.f32 %v352, %v398
        %v405 = vadd.f32 %v353, %v399
        %v406 = vld [vmem:[%s191] sm:$0xff]
        %v407 = vld [vmem:[%s191 + $0x8] sm:$0xff]
        %v408 = vld [vmem:[%s191 + $0x10] sm:$0x3]
        %vm409 = vcmask 146432
        %v411 = vsel %vm409, %v406, 0
        %v414 = vsel %vm409, %v407, 0
        %v417 = vsel %vm409, %v408, 0
        %vm419 = vcmask 1041408
        %v421 = vsel %vm419, %v306, 0
        %v424 = vsel %vm419, %v307, 0
        %v426 = vand.u32 %v303, 4294901760
        %427 = vmatprep.subr.mxu0 %v426
        %v428 = vand.u32 %v302, 4294901760
        %429 = vmatpush1.msra.mxu0 %v428
        %v430 = vand.u32 %v305, 4294901760
        %431 = vmatprep.subr.mxu0 %v430
        %v432 = vand.u32 %v304, 4294901760
        %433 = vmatpush1.msra.mxu0 %v432
        %v434 = vand.u32 %v424, 4294901760
        %435 = vmatprep.subr.mxu0 %v434
        %v436 = vand.u32 %v421, 4294901760
        %437 = vmatpush1.msra.mxu0 %v436
        %438 = vmatprep.subr.mxu0 0.0
        %439 = vmatpush1.msra.mxu0 0.0
        %440 = vmatprep.subr.mxu0 0.0
        %441 = vmatpush1.msra.mxu0 0.0
        %442 = vmatprep.subr.mxu0 0.0
        %443 = vmatpush1.msra.mxu0 0.0
        %444 = vmatprep.subr.mxu0 0.0
        %445 = vmatpush1.msra.mxu0 0.0
        %446 = vmatprep.subr.mxu0 0.0
        %447 = vmatpush1.msra.mxu0 0.0
        %448 = vmatprep.subr.mxu0 0.0
        %449 = vmatpush1.msra.mxu0 0.0
        %450 = vmatprep.subr.mxu0 0.0
        %451 = vmatpush1.msra.mxu0 0.0
        %452 = vmatprep.subr.mxu0 0.0
        %453 = vmatpush1.msra.mxu0 0.0
        %454 = vmatprep.subr.mxu0 0.0
        %455 = vmatpush1.msra.mxu0 0.0
        %456 = vmatprep.subr.mxu0 0.0
        %457 = vmatpush1.msra.mxu0 0.0
        %458 = vmatprep.subr.mxu0 0.0
        %459 = vmatpush1.msra.mxu0 0.0
        %460 = vmatprep.subr.mxu0 0.0
        %461 = vmatpush1.msra.mxu0 0.0
        %462 = vmatprep.subr.mxu0 0.0
        %463 = vmatpush1.msra.mxu0 0.0
        %464 = vmatprep.subr.mxu0 0.0
        %465 = vmatpush1.msra.mxu0 0.0
        %466 = vmatprep.subr.mxu0 0.0
        %467 = vmatpush1.msra.mxu0 0.0
        %468 = vmatprep.subr.mxu0 0.0
        %469 = vmatpush1.msra.mxu0 0.0
        %470 = vmatprep.subr.mxu0 0.0
        %471 = vmatpush1.msra.mxu0 0.0
        %472 = vmatprep.subr.mxu0 0.0
        %473 = vmatpush1.msra.mxu0 0.0
        %474 = vmatprep.subr.mxu0 0.0
        %475 = vmatpush1.msra.mxu0 0.0
        %476 = vmatprep.subr.mxu0 0.0
        %477 = vmatpush1.msra.mxu0 0.0
        %478 = vmatprep.subr.mxu0 0.0
        %479 = vmatpush1.msra.mxu0 0.0
        %480 = vmatprep.subr.mxu0 0.0
        %481 = vmatpush1.msra.mxu0 0.0
        %482 = vmatprep.subr.mxu0 0.0
        %483 = vmatpush1.msra.mxu0 0.0
        %484 = vmatprep.subr.mxu0 0.0
        %485 = vmatpush1.msra.mxu0 0.0
        %486 = vmatprep.subr.mxu0 0.0
        %487 = vmatpush1.msra.mxu0 0.0
        %488 = vmatprep.subr.mxu0 0.0
        %489 = vmatpush1.msra.mxu0 0.0
        %490 = vmatprep.subr.mxu0 0.0
        %491 = vmatpush1.msra.mxu0 0.0
        %492 = vmatprep.subr.mxu0 0.0
        %493 = vmatpush1.msra.mxu0 0.0
        %494 = vmatprep.subr.mxu0 0.0
        %495 = vmatpush1.msra.mxu0 0.0
        %496 = vmatprep.mubr.f32.mxu0 0.0
        %v497 = vand.u32 %v411, 4294901760
        %v498 = vsub.f32 %v411, %v497
        %v499 = vand.u32 %v498, 4294901760
        %v500 = vsub.f32 %v498, %v499
        %v501 = vand.u32 %v500, 4294901760
        %502 = vmatmul.mubr.f32.gmra.mrb[0].mxu0 %v501
        %v503 = vpop.f32.mrb[0].mxu0
        %v504 = vadd.f32 0.0, %v503
        %v505 = vpop.f32.mrb[0].mxu0
        %v506 = vadd.f32 0.0, %v505
        %507 = vmatprep.mubr.f32.mxu0 0.0
        %v508 = vand.u32 %v414, 4294901760
        %v509 = vsub.f32 %v414, %v508
        %v510 = vand.u32 %v509, 4294901760
        %v511 = vsub.f32 %v509, %v510
        %v512 = vand.u32 %v511, 4294901760
        %513 = vmatmul.mubr.f32.gmra.mrb[0].mxu0 %v512
        %v514 = vpop.f32.mrb[0].mxu0
        %v515 = vadd.f32 0.0, %v514
        %v516 = vpop.f32.mrb[0].mxu0
        %v517 = vadd.f32 0.0, %v516
        %518 = vmatprep.mubr.f32.mxu0 0.0
        %v519 = vand.u32 %v417, 4294901760
        %v520 = vsub.f32 %v417, %v519
        %v521 = vand.u32 %v520, 4294901760
        %v522 = vsub.f32 %v520, %v521
        %v523 = vand.u32 %v522, 4294901760
        %524 = vmatmul.mubr.f32.gmra.mrb[0].mxu0 %v523
        %v525 = vpop.f32.mrb[0].mxu0
        %v526 = vadd.f32 0.0, %v525
        %v527 = vpop.f32.mrb[0].mxu0
        %v528 = vadd.f32 0.0, %v527
        %529 = vdwg.mxu0
        %v530 = vand.u32 %v303, 4294901760
        %v531 = vsub.f32 %v303, %v530
        %v532 = vand.u32 %v531, 4294901760
        %v533 = vsub.f32 %v531, %v532
        %v534 = vand.u32 %v533, 4294901760
        %535 = vmatprep.subr.mxu0 %v534
        %v536 = vand.u32 %v302, 4294901760
        %v537 = vsub.f32 %v302, %v536
        %v538 = vand.u32 %v537, 4294901760
        %v539 = vsub.f32 %v537, %v538
        %v540 = vand.u32 %v539, 4294901760
        %541 = vmatpush1.msra.mxu0 %v540
        %v542 = vand.u32 %v305, 4294901760
        %v543 = vsub.f32 %v305, %v542
        %v544 = vand.u32 %v543, 4294901760
        %v545 = vsub.f32 %v543, %v544
        %v546 = vand.u32 %v545, 4294901760
        %547 = vmatprep.subr.mxu0 %v546
        %v548 = vand.u32 %v304, 4294901760
        %v549 = vsub.f32 %v304, %v548
        %v550 = vand.u32 %v549, 4294901760
        %v551 = vsub.f32 %v549, %v550
        %v552 = vand.u32 %v551, 4294901760
        %553 = vmatpush1.msra.mxu0 %v552
        %v554 = vand.u32 %v424, 4294901760
        %v555 = vsub.f32 %v424, %v554
        %v556 = vand.u32 %v555, 4294901760
        %v557 = vsub.f32 %v555, %v556
        %v558 = vand.u32 %v557, 4294901760
        %559 = vmatprep.subr.mxu0 %v558
        %v560 = vand.u32 %v421, 4294901760
        %v561 = vsub.f32 %v421, %v560
        %v562 = vand.u32 %v561, 4294901760
        %v563 = vsub.f32 %v561, %v562
        %v564 = vand.u32 %v563, 4294901760
        %565 = vmatpush1.msra.mxu0 %v564
        %566 = vmatprep.subr.mxu0 0.0
        %567 = vmatpush1.msra.mxu0 0.0
        %568 = vmatprep.subr.mxu0 0.0
        %569 = vmatpush1.msra.mxu0 0.0
        %570 = vmatprep.subr.mxu0 0.0
        %571 = vmatpush1.msra.mxu0 0.0
        %572 = vmatprep.subr.mxu0 0.0
        %573 = vmatpush1.msra.mxu0 0.0
        %574 = vmatprep.subr.mxu0 0.0
        %575 = vmatpush1.msra.mxu0 0.0
        %576 = vmatprep.subr.mxu0 0.0
        %577 = vmatpush1.msra.mxu0 0.0
        %578 = vmatprep.subr.mxu0 0.0
        %579 = vmatpush1.msra.mxu0 0.0
        %580 = vmatprep.subr.mxu0 0.0
        %581 = vmatpush1.msra.mxu0 0.0
        %582 = vmatprep.subr.mxu0 0.0
        %583 = vmatpush1.msra.mxu0 0.0
        %584 = vmatprep.subr.mxu0 0.0
        %585 = vmatpush1.msra.mxu0 0.0
        %586 = vmatprep.subr.mxu0 0.0
        %587 = vmatpush1.msra.mxu0 0.0
        %588 = vmatprep.subr.mxu0 0.0
        %589 = vmatpush1.msra.mxu0 0.0
        %590 = vmatprep.subr.mxu0 0.0
        %591 = vmatpush1.msra.mxu0 0.0
        %592 = vmatprep.subr.mxu0 0.0
        %593 = vmatpush1.msra.mxu0 0.0
        %594 = vmatprep.subr.mxu0 0.0
        %595 = vmatpush1.msra.mxu0 0.0
        %596 = vmatprep.subr.mxu0 0.0
        %597 = vmatpush1.msra.mxu0 0.0
        %598 = vmatprep.subr.mxu0 0.0
        %599 = vmatpush1.msra.mxu0 0.0
        %600 = vmatprep.subr.mxu0 0.0
        %601 = vmatpush1.msra.mxu0 0.0
        %602 = vmatprep.subr.mxu0 0.0
        %603 = vmatpush1.msra.mxu0 0.0
        %604 = vmatprep.subr.mxu0 0.0
        %605 = vmatpush1.msra.mxu0 0.0
        %606 = vmatprep.subr.mxu0 0.0
        %607 = vmatpush1.msra.mxu0 0.0
        %608 = vmatprep.subr.mxu0 0.0
        %609 = vmatpush1.msra.mxu0 0.0
        %610 = vmatprep.subr.mxu0 0.0
        %611 = vmatpush1.msra.mxu0 0.0
        %612 = vmatprep.subr.mxu0 0.0
        %613 = vmatpush1.msra.mxu0 0.0
        %614 = vmatprep.subr.mxu0 0.0
        %615 = vmatpush1.msra.mxu0 0.0
        %616 = vmatprep.subr.mxu0 0.0
        %617 = vmatpush1.msra.mxu0 0.0
        %618 = vmatprep.subr.mxu0 0.0
        %619 = vmatpush1.msra.mxu0 0.0
        %620 = vmatprep.subr.mxu0 0.0
        %621 = vmatpush1.msra.mxu0 0.0
        %622 = vmatprep.subr.mxu0 0.0
        %623 = vmatpush1.msra.mxu0 0.0
        %624 = vmatprep.mubr.f32.mxu0 0.0
        %v625 = vand.u32 %v411, 4294901760
        %626 = vmatmul.mubr.f32.gmra.mrb[0].mxu0 %v625
        %v627 = vpop.f32.mrb[0].mxu0
        %v628 = vadd.f32 %v504, %v627
        %v629 = vpop.f32.mrb[0].mxu0
        %v630 = vadd.f32 %v506, %v629
        %631 = vmatprep.mubr.f32.mxu0 0.0
        %v632 = vand.u32 %v414, 4294901760
        %633 = vmatmul.mubr.f32.gmra.mrb[0].mxu0 %v632
        %v634 = vpop.f32.mrb[0].mxu0
        %v635 = vadd.f32 %v515, %v634
        %v636 = vpop.f32.mrb[0].mxu0
        %v637 = vadd.f32 %v517, %v636
        %638 = vmatprep.mubr.f32.mxu0 0.0
        %v639 = vand.u32 %v417, 4294901760
        %640 = vmatmul.mubr.f32.gmra.mrb[0].mxu0 %v639
        %v641 = vpop.f32.mrb[0].mxu0
        %v642 = vadd.f32 %v526, %v641
        %v643 = vpop.f32.mrb[0].mxu0
        %v644 = vadd.f32 %v528, %v643
        %645 = vdwg.mxu0
        %v646 = vand.u32 %v303, 4294901760
        %v647 = vsub.f32 %v303, %v646
        %648 = vmatprep.subr.mxu0 %v647
        %v649 = vand.u32 %v302, 4294901760
        %v650 = vsub.f32 %v302, %v649
        %651 = vmatpush1.msra.mxu0 %v650
        %v652 = vand.u32 %v305, 4294901760
        %v653 = vsub.f32 %v305, %v652
        %654 = vmatprep.subr.mxu0 %v653
        %v655 = vand.u32 %v304, 4294901760
        %v656 = vsub.f32 %v304, %v655
        %657 = vmatpush1.msra.mxu0 %v656
        %v658 = vand.u32 %v424, 4294901760
        %v659 = vsub.f32 %v424, %v658
        %660 = vmatprep.subr.mxu0 %v659
        %v661 = vand.u32 %v421, 4294901760
        %v662 = vsub.f32 %v421, %v661
        %663 = vmatpush1.msra.mxu0 %v662
        %664 = vmatprep.subr.mxu0 0.0
        %665 = vmatpush1.msra.mxu0 0.0
        %666 = vmatprep.subr.mxu0 0.0
        %667 = vmatpush1.msra.mxu0 0.0
        %668 = vmatprep.subr.mxu0 0.0
        %669 = vmatpush1.msra.mxu0 0.0
        %670 = vmatprep.subr.mxu0 0.0
        %671 = vmatpush1.msra.mxu0 0.0
        %672 = vmatprep.subr.mxu0 0.0
        %673 = vmatpush1.msra.mxu0 0.0
        %674 = vmatprep.subr.mxu0 0.0
        %675 = vmatpush1.msra.mxu0 0.0
        %676 = vmatprep.subr.mxu0 0.0
        %677 = vmatpush1.msra.mxu0 0.0
        %678 = vmatprep.subr.mxu0 0.0
        %679 = vmatpush1.msra.mxu0 0.0
        %680 = vmatprep.subr.mxu0 0.0
        %681 = vmatpush1.msra.mxu0 0.0
        %682 = vmatprep.subr.mxu0 0.0
        %683 = vmatpush1.msra.mxu0 0.0
        %684 = vmatprep.subr.mxu0 0.0
        %685 = vmatpush1.msra.mxu0 0.0
        %686 = vmatprep.subr.mxu0 0.0
        %687 = vmatpush1.msra.mxu0 0.0
        %688 = vmatprep.subr.mxu0 0.0
        %689 = vmatpush1.msra.mxu0 0.0
        %690 = vmatprep.subr.mxu0 0.0
        %691 = vmatpush1.msra.mxu0 0.0
        %692 = vmatprep.subr.mxu0 0.0
        %693 = vmatpush1.msra.mxu0 0.0
        %694 = vmatprep.subr.mxu0 0.0
        %695 = vmatpush1.msra.mxu0 0.0
        %696 = vmatprep.subr.mxu0 0.0
        %697 = vmatpush1.msra.mxu0 0.0
        %698 = vmatprep.subr.mxu0 0.0
        %699 = vmatpush1.msra.mxu0 0.0
        %700 = vmatprep.subr.mxu0 0.0
        %701 = vmatpush1.msra.mxu0 0.0
        %702 = vmatprep.subr.mxu0 0.0
        %703 = vmatpush1.msra.mxu0 0.0
        %704 = vmatprep.subr.mxu0 0.0
        %705 = vmatpush1.msra.mxu0 0.0
        %706 = vmatprep.subr.mxu0 0.0
        %707 = vmatpush1.msra.mxu0 0.0
        %708 = vmatprep.subr.mxu0 0.0
        %709 = vmatpush1.msra.mxu0 0.0
        %710 = vmatprep.subr.mxu0 0.0
        %711 = vmatpush1.msra.mxu0 0.0
        %712 = vmatprep.subr.mxu0 0.0
        %713 = vmatpush1.msra.mxu0 0.0
        %714 = vmatprep.subr.mxu0 0.0
        %715 = vmatpush1.msra.mxu0 0.0
        %716 = vmatprep.subr.mxu0 0.0
        %717 = vmatpush1.msra.mxu0 0.0
        %718 = vmatprep.subr.mxu0 0.0
        %719 = vmatpush1.msra.mxu0 0.0
        %720 = vmatprep.subr.mxu0 0.0
        %721 = vmatpush1.msra.mxu0 0.0
        %722 = vmatprep.mubr.f32.mxu0 0.0
        %v723 = vand.u32 %v411, 4294901760
        %v724 = vsub.f32 %v411, %v723
        %725 = vmatmul.mubr.f32.gmra.mrb[0].mxu0 %v724
        %v726 = vpop.f32.mrb[0].mxu0
        %v727 = vadd.f32 %v628, %v726
        %v728 = vpop.f32.mrb[0].mxu0
        %v729 = vadd.f32 %v630, %v728
        %730 = vmatprep.mubr.f32.mxu0 0.0
        %v731 = vand.u32 %v414, 4294901760
        %v732 = vsub.f32 %v414, %v731
        %733 = vmatmul.mubr.f32.gmra.mrb[0].mxu0 %v732
        %v734 = vpop.f32.mrb[0].mxu0
        %v735 = vadd.f32 %v635, %v734
        %v736 = vpop.f32.mrb[0].mxu0
        %v737 = vadd.f32 %v637, %v736
        %738 = vmatprep.mubr.f32.mxu0 0.0
        %v739 = vand.u32 %v417, 4294901760
        %v740 = vsub.f32 %v417, %v739
        %741 = vmatmul.mubr.f32.gmra.mrb[0].mxu0 %v740
        %v742 = vpop.f32.mrb[0].mxu0
        %v743 = vadd.f32 %v642, %v742
        %v744 = vpop.f32.mrb[0].mxu0
        %v745 = vadd.f32 %v644, %v744
        %746 = vdwg.mxu0
        %v747 = vand.u32 %v303, 4294901760
        %748 = vmatprep.subr.mxu0 %v747
        %v749 = vand.u32 %v302, 4294901760
        %750 = vmatpush1.msra.mxu0 %v749
        %v751 = vand.u32 %v305, 4294901760
        %752 = vmatprep.subr.mxu0 %v751
        %v753 = vand.u32 %v304, 4294901760
        %754 = vmatpush1.msra.mxu0 %v753
        %v755 = vand.u32 %v424, 4294901760
        %756 = vmatprep.subr.mxu0 %v755
        %v757 = vand.u32 %v421, 4294901760
        %758 = vmatpush1.msra.mxu0 %v757
        %759 = vmatprep.subr.mxu0 0.0
        %760 = vmatpush1.msra.mxu0 0.0
        %761 = vmatprep.subr.mxu0 0.0
        %762 = vmatpush1.msra.mxu0 0.0
        %763 = vmatprep.subr.mxu0 0.0
        %764 = vmatpush1.msra.mxu0 0.0
        %765 = vmatprep.subr.mxu0 0.0
        %766 = vmatpush1.msra.mxu0 0.0
        %767 = vmatprep.subr.mxu0 0.0
        %768 = vmatpush1.msra.mxu0 0.0
        %769 = vmatprep.subr.mxu0 0.0
        %770 = vmatpush1.msra.mxu0 0.0
        %771 = vmatprep.subr.mxu0 0.0
        %772 = vmatpush1.msra.mxu0 0.0
        %773 = vmatprep.subr.mxu0 0.0
        %774 = vmatpush1.msra.mxu0 0.0
        %775 = vmatprep.subr.mxu0 0.0
        %776 = vmatpush1.msra.mxu0 0.0
        %777 = vmatprep.subr.mxu0 0.0
        %778 = vmatpush1.msra.mxu0 0.0
        %779 = vmatprep.subr.mxu0 0.0
        %780 = vmatpush1.msra.mxu0 0.0
        %781 = vmatprep.subr.mxu0 0.0
        %782 = vmatpush1.msra.mxu0 0.0
        %783 = vmatprep.subr.mxu0 0.0
        %784 = vmatpush1.msra.mxu0 0.0
        %785 = vmatprep.subr.mxu0 0.0
        %786 = vmatpush1.msra.mxu0 0.0
        %787 = vmatprep.subr.mxu0 0.0
        %788 = vmatpush1.msra.mxu0 0.0
        %789 = vmatprep.subr.mxu0 0.0
        %790 = vmatpush1.msra.mxu0 0.0
        %791 = vmatprep.subr.mxu0 0.0
        %792 = vmatpush1.msra.mxu0 0.0
        %793 = vmatprep.subr.mxu0 0.0
        %794 = vmatpush1.msra.mxu0 0.0
        %795 = vmatprep.subr.mxu0 0.0
        %796 = vmatpush1.msra.mxu0 0.0
        %797 = vmatprep.subr.mxu0 0.0
        %798 = vmatpush1.msra.mxu0 0.0
        %799 = vmatprep.subr.mxu0 0.0
        %800 = vmatpush1.msra.mxu0 0.0
        %801 = vmatprep.subr.mxu0 0.0
        %802 = vmatpush1.msra.mxu0 0.0
        %803 = vmatprep.subr.mxu0 0.0
        %804 = vmatpush1.msra.mxu0 0.0
        %805 = vmatprep.subr.mxu0 0.0
        %806 = vmatpush1.msra.mxu0 0.0
        %807 = vmatprep.subr.mxu0 0.0
        %808 = vmatpush1.msra.mxu0 0.0
        %809 = vmatprep.subr.mxu0 0.0
        %810 = vmatpush1.msra.mxu0 0.0
        %811 = vmatprep.subr.mxu0 0.0
        %812 = vmatpush1.msra.mxu0 0.0
        %813 = vmatprep.subr.mxu0 0.0
        %814 = vmatpush1.msra.mxu0 0.0
        %815 = vmatprep.subr.mxu0 0.0
        %816 = vmatpush1.msra.mxu0 0.0
        %817 = vmatprep.mubr.f32.mxu0 0.0
        %v818 = vand.u32 %v411, 4294901760
        %v819 = vsub.f32 %v411, %v818
        %v820 = vand.u32 %v819, 4294901760
        %821 = vmatmul.mubr.f32.gmra.mrb[0].mxu0 %v820
        %v822 = vpop.f32.mrb[0].mxu0
        %v823 = vadd.f32 %v727, %v822
        %v824 = vpop.f32.mrb[0].mxu0
        %v825 = vadd.f32 %v729, %v824
        %826 = vmatprep.mubr.f32.mxu0 0.0
        %v827 = vand.u32 %v414, 4294901760
        %v828 = vsub.f32 %v414, %v827
        %v829 = vand.u32 %v828, 4294901760
        %830 = vmatmul.mubr.f32.gmra.mrb[0].mxu0 %v829
        %v831 = vpop.f32.mrb[0].mxu0
        %v832 = vadd.f32 %v735, %v831
        %v833 = vpop.f32.mrb[0].mxu0
        %v834 = vadd.f32 %v737, %v833
        %835 = vmatprep.mubr.f32.mxu0 0.0
        %v836 = vand.u32 %v417, 4294901760
        %v837 = vsub.f32 %v417, %v836
        %v838 = vand.u32 %v837, 4294901760
        %839 = vmatmul.mubr.f32.gmra.mrb[0].mxu0 %v838
        %v840 = vpop.f32.mrb[0].mxu0
        %v841 = vadd.f32 %v743, %v840
        %v842 = vpop.f32.mrb[0].mxu0
        %v843 = vadd.f32 %v745, %v842
        %844 = vdwg.mxu0
        %v845 = vand.u32 %v303, 4294901760
        %v846 = vsub.f32 %v303, %v845
        %v847 = vand.u32 %v846, 4294901760
        %848 = vmatprep.subr.mxu0 %v847
        %v849 = vand.u32 %v302, 4294901760
        %v850 = vsub.f32 %v302, %v849
        %v851 = vand.u32 %v850, 4294901760
        %852 = vmatpush1.msra.mxu0 %v851
        %v853 = vand.u32 %v305, 4294901760
        %v854 = vsub.f32 %v305, %v853
        %v855 = vand.u32 %v854, 4294901760
        %856 = vmatprep.subr.mxu0 %v855
        %v857 = vand.u32 %v304, 4294901760
        %v858 = vsub.f32 %v304, %v857
        %v859 = vand.u32 %v858, 4294901760
        %860 = vmatpush1.msra.mxu0 %v859
        %v861 = vand.u32 %v424, 4294901760
        %v862 = vsub.f32 %v424, %v861
        %v863 = vand.u32 %v862, 4294901760
        %864 = vmatprep.subr.mxu0 %v863
        %v865 = vand.u32 %v421, 4294901760
        %v866 = vsub.f32 %v421, %v865
        %v867 = vand.u32 %v866, 4294901760
        %868 = vmatpush1.msra.mxu0 %v867
        %869 = vmatprep.subr.mxu0 0.0
        %870 = vmatpush1.msra.mxu0 0.0
        %871 = vmatprep.subr.mxu0 0.0
        %872 = vmatpush1.msra.mxu0 0.0
        %873 = vmatprep.subr.mxu0 0.0
        %874 = vmatpush1.msra.mxu0 0.0
        %875 = vmatprep.subr.mxu0 0.0
        %876 = vmatpush1.msra.mxu0 0.0
        %877 = vmatprep.subr.mxu0 0.0
        %878 = vmatpush1.msra.mxu0 0.0
        %879 = vmatprep.subr.mxu0 0.0
        %880 = vmatpush1.msra.mxu0 0.0
        %881 = vmatprep.subr.mxu0 0.0
        %882 = vmatpush1.msra.mxu0 0.0
        %883 = vmatprep.subr.mxu0 0.0
        %884 = vmatpush1.msra.mxu0 0.0
        %885 = vmatprep.subr.mxu0 0.0
        %886 = vmatpush1.msra.mxu0 0.0
        %887 = vmatprep.subr.mxu0 0.0
        %888 = vmatpush1.msra.mxu0 0.0
        %889 = vmatprep.subr.mxu0 0.0
        %890 = vmatpush1.msra.mxu0 0.0
        %891 = vmatprep.subr.mxu0 0.0
        %892 = vmatpush1.msra.mxu0 0.0
        %893 = vmatprep.subr.mxu0 0.0
        %894 = vmatpush1.msra.mxu0 0.0
        %895 = vmatprep.subr.mxu0 0.0
        %896 = vmatpush1.msra.mxu0 0.0
        %897 = vmatprep.subr.mxu0 0.0
        %898 = vmatpush1.msra.mxu0 0.0
        %899 = vmatprep.subr.mxu0 0.0
        %900 = vmatpush1.msra.mxu0 0.0
        %901 = vmatprep.subr.mxu0 0.0
        %902 = vmatpush1.msra.mxu0 0.0
        %903 = vmatprep.subr.mxu0 0.0
        %904 = vmatpush1.msra.mxu0 0.0
        %905 = vmatprep.subr.mxu0 0.0
        %906 = vmatpush1.msra.mxu0 0.0
        %907 = vmatprep.subr.mxu0 0.0
        %908 = vmatpush1.msra.mxu0 0.0
        %909 = vmatprep.subr.mxu0 0.0
        %910 = vmatpush1.msra.mxu0 0.0
        %911 = vmatprep.subr.mxu0 0.0
        %912 = vmatpush1.msra.mxu0 0.0
        %913 = vmatprep.subr.mxu0 0.0
        %914 = vmatpush1.msra.mxu0 0.0
        %915 = vmatprep.subr.mxu0 0.0
        %916 = vmatpush1.msra.mxu0 0.0
        %917 = vmatprep.subr.mxu0 0.0
        %918 = vmatpush1.msra.mxu0 0.0
        %919 = vmatprep.subr.mxu0 0.0
        %920 = vmatpush1.msra.mxu0 0.0
        %921 = vmatprep.subr.mxu0 0.0
        %922 = vmatpush1.msra.mxu0 0.0
        %923 = vmatprep.subr.mxu0 0.0
        %924 = vmatpush1.msra.mxu0 0.0
        %925 = vmatprep.subr.mxu0 0.0
        %926 = vmatpush1.msra.mxu0 0.0
        %927 = vmatprep.mubr.f32.mxu0 0.0
        %v928 = vand.u32 %v411, 4294901760
        %929 = vmatmul.mubr.f32.gmra.mrb[0].mxu0 %v928
        %v930 = vpop.f32.mrb[0].mxu0
        %v931 = vadd.f32 %v823, %v930
        %v932 = vpop.f32.mrb[0].mxu0
        %v933 = vadd.f32 %v825, %v932
        %934 = vmatprep.mubr.f32.mxu0 0.0
        %v935 = vand.u32 %v414, 4294901760
        %936 = vmatmul.mubr.f32.gmra.mrb[0].mxu0 %v935
        %v937 = vpop.f32.mrb[0].mxu0
        %v938 = vadd.f32 %v832, %v937
        %v939 = vpop.f32.mrb[0].mxu0
        %v940 = vadd.f32 %v834, %v939
        %941 = vmatprep.mubr.f32.mxu0 0.0
        %v942 = vand.u32 %v417, 4294901760
        %943 = vmatmul.mubr.f32.gmra.mrb[0].mxu0 %v942
        %v944 = vpop.f32.mrb[0].mxu0
        %v945 = vadd.f32 %v841, %v944
        %v946 = vpop.f32.mrb[0].mxu0
        %v947 = vadd.f32 %v843, %v946
        %948 = vdwg.mxu0
        %v949 = vand.u32 %v303, 4294901760
        %950 = vmatprep.subr.mxu0 %v949
        %v951 = vand.u32 %v302, 4294901760
        %952 = vmatpush1.msra.mxu0 %v951
        %v953 = vand.u32 %v305, 4294901760
        %954 = vmatprep.subr.mxu0 %v953
        %v955 = vand.u32 %v304, 4294901760
        %956 = vmatpush1.msra.mxu0 %v955
        %v957 = vand.u32 %v424, 4294901760
        %958 = vmatprep.subr.mxu0 %v957
        %v959 = vand.u32 %v421, 4294901760
        %960 = vmatpush1.msra.mxu0 %v959
        %961 = vmatprep.subr.mxu0 0.0
        %962 = vmatpush1.msra.mxu0 0.0
        %963 = vmatprep.subr.mxu0 0.0
        %964 = vmatpush1.msra.mxu0 0.0
        %965 = vmatprep.subr.mxu0 0.0
        %966 = vmatpush1.msra.mxu0 0.0
        %967 = vmatprep.subr.mxu0 0.0
        %968 = vmatpush1.msra.mxu0 0.0
        %969 = vmatprep.subr.mxu0 0.0
        %970 = vmatpush1.msra.mxu0 0.0
        %971 = vmatprep.subr.mxu0 0.0
        %972 = vmatpush1.msra.mxu0 0.0
        %973 = vmatprep.subr.mxu0 0.0
        %974 = vmatpush1.msra.mxu0 0.0
        %975 = vmatprep.subr.mxu0 0.0
        %976 = vmatpush1.msra.mxu0 0.0
        %977 = vmatprep.subr.mxu0 0.0
        %978 = vmatpush1.msra.mxu0 0.0
        %979 = vmatprep.subr.mxu0 0.0
        %980 = vmatpush1.msra.mxu0 0.0
        %981 = vmatprep.subr.mxu0 0.0
        %982 = vmatpush1.msra.mxu0 0.0
        %983 = vmatprep.subr.mxu0 0.0
        %984 = vmatpush1.msra.mxu0 0.0
        %985 = vmatprep.subr.mxu0 0.0
        %986 = vmatpush1.msra.mxu0 0.0
        %987 = vmatprep.subr.mxu0 0.0
        %988 = vmatpush1.msra.mxu0 0.0
        %989 = vmatprep.subr.mxu0 0.0
        %990 = vmatpush1.msra.mxu0 0.0
        %991 = vmatprep.subr.mxu0 0.0
        %992 = vmatpush1.msra.mxu0 0.0
        %993 = vmatprep.subr.mxu0 0.0
        %994 = vmatpush1.msra.mxu0 0.0
        %995 = vmatprep.subr.mxu0 0.0
        %996 = vmatpush1.msra.mxu0 0.0
        %997 = vmatprep.subr.mxu0 0.0
        %998 = vmatpush1.msra.mxu0 0.0
        %999 = vmatprep.subr.mxu0 0.0
        %1000 = vmatpush1.msra.mxu0 0.0
        %1001 = vmatprep.subr.mxu0 0.0
        %1002 = vmatpush1.msra.mxu0 0.0
        %1003 = vmatprep.subr.mxu0 0.0
        %1004 = vmatpush1.msra.mxu0 0.0
        %1005 = vmatprep.subr.mxu0 0.0
        %1006 = vmatpush1.msra.mxu0 0.0
        %1007 = vmatprep.subr.mxu0 0.0
        %1008 = vmatpush1.msra.mxu0 0.0
        %1009 = vmatprep.subr.mxu0 0.0
        %1010 = vmatpush1.msra.mxu0 0.0
        %1011 = vmatprep.subr.mxu0 0.0
        %1012 = vmatpush1.msra.mxu0 0.0
        %1013 = vmatprep.subr.mxu0 0.0
        %1014 = vmatpush1.msra.mxu0 0.0
        %1015 = vmatprep.subr.mxu0 0.0
        %1016 = vmatpush1.msra.mxu0 0.0
        %1017 = vmatprep.subr.mxu0 0.0
        %1018 = vmatpush1.msra.mxu0 0.0
        %1019 = vmatprep.mubr.f32.mxu0 0.0
        %v1020 = vand.u32 %v411, 4294901760
        %1021 = vmatmul.mubr.f32.gmra.mrb[0].mxu0 %v1020
        %v1022 = vpop.f32.mrb[0].mxu0
        %v1023 = vadd.f32 %v931, %v1022
        %v1024 = vpop.f32.mrb[0].mxu0
        %v1025 = vadd.f32 %v933, %v1024
        %1026 = vmatprep.mubr.f32.mxu0 0.0
        %v1027 = vand.u32 %v414, 4294901760
        %1028 = vmatmul.mubr.f32.gmra.mrb[0].mxu0 %v1027
        %v1029 = vpop.f32.mrb[0].mxu0
        %v1030 = vadd.f32 %v938, %v1029
        %v1031 = vpop.f32.mrb[0].mxu0
        %v1032 = vadd.f32 %v940, %v1031
        %1033 = vmatprep.mubr.f32.mxu0 0.0
        %v1034 = vand.u32 %v417, 4294901760
        %1035 = vmatmul.mubr.f32.gmra.mrb[0].mxu0 %v1034
        %v1036 = vpop.f32.mrb[0].mxu0
        %v1037 = vadd.f32 %v945, %v1036
        %v1038 = vpop.f32.mrb[0].mxu0
        %v1039 = vadd.f32 %v947, %v1038
        %1040 = vdwg.mxu0
        %v1041 = vmul.f32 %v1023, %v400
        %v1042 = vmul.f32 %v1025, %v401
        %v1043 = vmul.f32 %v1030, %v402
        %v1044 = vmul.f32 %v1032, %v403
        %v1045 = vmul.f32 %v1037, %v404
        %v1046 = vmul.f32 %v1039, %v405
        %v1047 = vadd.f32 %v1041, %v1043
        %v1048 = vsel %vm419, %v1045, 0.0
        %v1049 = vadd.f32 %v1047, %v1048
        %v1050 = vrot.slane %v1049, 4
        %v1051 = vadd.f32 %v1049, %v1050
        %v1052 = vrot.slane %v1051, 2
        %v1053 = vadd.f32 %v1051, %v1052
        %v1054 = vrot.slane %v1053, 1
        %v1055 = vadd.f32 %v1053, %v1054
        %v1056 = vadd.f32 %v1042, %v1044
        %v1057 = vsel %vm419, %v1046, 0.0
        %v1058 = vadd.f32 %v1056, %v1057
        %v1059 = vrot.slane %v1058, 4
        %v1060 = vadd.f32 %v1058, %v1059
        %v1061 = vrot.slane %v1060, 2
        %v1062 = vadd.f32 %v1060, %v1061
        %v1063 = vrot.slane %v1062, 1
        %v1064 = vadd.f32 %v1062, %v1063
        %s1065 = scalar_lea.vmem %s191, 24
        %v1066 = vld [vmem:[%s1065] sm:$0xff]
        %v1067 = vld [vmem:[%s1065 + $0x8] sm:$0xff]
        %v1068 = vld [vmem:[%s1065 + $0x10] sm:$0x3]
        %v1070 = vsel %vm409, %v1066, 0
        %v1073 = vsel %vm409, %v1067, 0
        %v1076 = vsel %vm409, %v1068, 0
        %v1078 = vand.u32 %v303, 4294901760
        %1079 = vmatprep.subr.mxu0 %v1078
        %v1080 = vand.u32 %v302, 4294901760
        %1081 = vmatpush1.msra.mxu0 %v1080
        %v1082 = vand.u32 %v305, 4294901760
        %1083 = vmatprep.subr.mxu0 %v1082
        %v1084 = vand.u32 %v304, 4294901760
        %1085 = vmatpush1.msra.mxu0 %v1084
        %v1086 = vand.u32 %v424, 4294901760
        %1087 = vmatprep.subr.mxu0 %v1086
        %v1088 = vand.u32 %v421, 4294901760
        %1089 = vmatpush1.msra.mxu0 %v1088
        %1090 = vmatprep.subr.mxu0 0.0
        %1091 = vmatpush1.msra.mxu0 0.0
        %1092 = vmatprep.subr.mxu0 0.0
        %1093 = vmatpush1.msra.mxu0 0.0
        %1094 = vmatprep.subr.mxu0 0.0
        %1095 = vmatpush1.msra.mxu0 0.0
        %1096 = vmatprep.subr.mxu0 0.0
        %1097 = vmatpush1.msra.mxu0 0.0
        %1098 = vmatprep.subr.mxu0 0.0
        %1099 = vmatpush1.msra.mxu0 0.0
        %1100 = vmatprep.subr.mxu0 0.0
        %1101 = vmatpush1.msra.mxu0 0.0
        %1102 = vmatprep.subr.mxu0 0.0
        %1103 = vmatpush1.msra.mxu0 0.0
        %1104 = vmatprep.subr.mxu0 0.0
        %1105 = vmatpush1.msra.mxu0 0.0
        %1106 = vmatprep.subr.mxu0 0.0
        %1107 = vmatpush1.msra.mxu0 0.0
        %1108 = vmatprep.subr.mxu0 0.0
        %1109 = vmatpush1.msra.mxu0 0.0
        %1110 = vmatprep.subr.mxu0 0.0
        %1111 = vmatpush1.msra.mxu0 0.0
        %1112 = vmatprep.subr.mxu0 0.0
        %1113 = vmatpush1.msra.mxu0 0.0
        %1114 = vmatprep.subr.mxu0 0.0
        %1115 = vmatpush1.msra.mxu0 0.0
        %1116 = vmatprep.subr.mxu0 0.0
        %1117 = vmatpush1.msra.mxu0 0.0
        %1118 = vmatprep.subr.mxu0 0.0
        %1119 = vmatpush1.msra.mxu0 0.0
        %1120 = vmatprep.subr.mxu0 0.0
        %1121 = vmatpush1.msra.mxu0 0.0
        %1122 = vmatprep.subr.mxu0 0.0
        %1123 = vmatpush1.msra.mxu0 0.0
        %1124 = vmatprep.subr.mxu0 0.0
        %1125 = vmatpush1.msra.mxu0 0.0
        %1126 = vmatprep.subr.mxu0 0.0
        %1127 = vmatpush1.msra.mxu0 0.0
        %1128 = vmatprep.subr.mxu0 0.0
        %1129 = vmatpush1.msra.mxu0 0.0
        %1130 = vmatprep.subr.mxu0 0.0
        %1131 = vmatpush1.msra.mxu0 0.0
        %1132 = vmatprep.subr.mxu0 0.0
        %1133 = vmatpush1.msra.mxu0 0.0
        %1134 = vmatprep.subr.mxu0 0.0
        %1135 = vmatpush1.msra.mxu0 0.0
        %1136 = vmatprep.subr.mxu0 0.0
        %1137 = vmatpush1.msra.mxu0 0.0
        %1138 = vmatprep.subr.mxu0 0.0
        %1139 = vmatpush1.msra.mxu0 0.0
        %1140 = vmatprep.subr.mxu0 0.0
        %1141 = vmatpush1.msra.mxu0 0.0
        %1142 = vmatprep.subr.mxu0 0.0
        %1143 = vmatpush1.msra.mxu0 0.0
        %1144 = vmatprep.subr.mxu0 0.0
        %1145 = vmatpush1.msra.mxu0 0.0
        %1146 = vmatprep.subr.mxu0 0.0
        %1147 = vmatpush1.msra.mxu0 0.0
        %1148 = vmatprep.mubr.f32.mxu0 0.0
        %v1149 = vand.u32 %v1070, 4294901760
        %v1150 = vsub.f32 %v1070, %v1149
        %v1151 = vand.u32 %v1150, 4294901760
        %v1152 = vsub.f32 %v1150, %v1151
        %v1153 = vand.u32 %v1152, 4294901760
        %1154 = vmatmul.mubr.f32.gmra.mrb[0].mxu0 %v1153
        %v1155 = vpop.f32.mrb[0].mxu0
        %v1156 = vadd.f32 0.0, %v1155
        %v1157 = vpop.f32.mrb[0].mxu0
        %v1158 = vadd.f32 0.0, %v1157
        %1159 = vmatprep.mubr.f32.mxu0 0.0
        %v1160 = vand.u32 %v1073, 4294901760
        %v1161 = vsub.f32 %v1073, %v1160
        %v1162 = vand.u32 %v1161, 4294901760
        %v1163 = vsub.f32 %v1161, %v1162
        %v1164 = vand.u32 %v1163, 4294901760
        %1165 = vmatmul.mubr.f32.gmra.mrb[0].mxu0 %v1164
        %v1166 = vpop.f32.mrb[0].mxu0
        %v1167 = vadd.f32 0.0, %v1166
        %v1168 = vpop.f32.mrb[0].mxu0
        %v1169 = vadd.f32 0.0, %v1168
        %1170 = vmatprep.mubr.f32.mxu0 0.0
        %v1171 = vand.u32 %v1076, 4294901760
        %v1172 = vsub.f32 %v1076, %v1171
        %v1173 = vand.u32 %v1172, 4294901760
        %v1174 = vsub.f32 %v1172, %v1173
        %v1175 = vand.u32 %v1174, 4294901760
        %1176 = vmatmul.mubr.f32.gmra.mrb[0].mxu0 %v1175
        %v1177 = vpop.f32.mrb[0].mxu0
        %v1178 = vadd.f32 0.0, %v1177
        %v1179 = vpop.f32.mrb[0].mxu0
        %v1180 = vadd.f32 0.0, %v1179
        %1181 = vdwg.mxu0
        %v1182 = vand.u32 %v303, 4294901760
        %v1183 = vsub.f32 %v303, %v1182
        %v1184 = vand.u32 %v1183, 4294901760
        %v1185 = vsub.f32 %v1183, %v1184
        %v1186 = vand.u32 %v1185, 4294901760
        %1187 = vmatprep.subr.mxu0 %v1186
        %v1188 = vand.u32 %v302, 4294901760
        %v1189 = vsub.f32 %v302, %v1188
        %v1190 = vand.u32 %v1189, 4294901760
        %v1191 = vsub.f32 %v1189, %v1190
        %v1192 = vand.u32 %v1191, 4294901760
        %1193 = vmatpush1.msra.mxu0 %v1192
        %v1194 = vand.u32 %v305, 4294901760
        %v1195 = vsub.f32 %v305, %v1194
        %v1196 = vand.u32 %v1195, 4294901760
        %v1197 = vsub.f32 %v1195, %v1196
        %v1198 = vand.u32 %v1197, 4294901760
        %1199 = vmatprep.subr.mxu0 %v1198
        %v1200 = vand.u32 %v304, 4294901760
        %v1201 = vsub.f32 %v304, %v1200
        %v1202 = vand.u32 %v1201, 4294901760
        %v1203 = vsub.f32 %v1201, %v1202
        %v1204 = vand.u32 %v1203, 4294901760
        %1205 = vmatpush1.msra.mxu0 %v1204
        %v1206 = vand.u32 %v424, 4294901760
        %v1207 = vsub.f32 %v424, %v1206
        %v1208 = vand.u32 %v1207, 4294901760
        %v1209 = vsub.f32 %v1207, %v1208
        %v1210 = vand.u32 %v1209, 4294901760
        %1211 = vmatprep.subr.mxu0 %v1210
        %v1212 = vand.u32 %v421, 4294901760
        %v1213 = vsub.f32 %v421, %v1212
        %v1214 = vand.u32 %v1213, 4294901760
        %v1215 = vsub.f32 %v1213, %v1214
        %v1216 = vand.u32 %v1215, 4294901760
        %1217 = vmatpush1.msra.mxu0 %v1216
        %1218 = vmatprep.subr.mxu0 0.0
        %1219 = vmatpush1.msra.mxu0 0.0
        %1220 = vmatprep.subr.mxu0 0.0
        %1221 = vmatpush1.msra.mxu0 0.0
        %1222 = vmatprep.subr.mxu0 0.0
        %1223 = vmatpush1.msra.mxu0 0.0
        %1224 = vmatprep.subr.mxu0 0.0
        %1225 = vmatpush1.msra.mxu0 0.0
        %1226 = vmatprep.subr.mxu0 0.0
        %1227 = vmatpush1.msra.mxu0 0.0
        %1228 = vmatprep.subr.mxu0 0.0
        %1229 = vmatpush1.msra.mxu0 0.0
        %1230 = vmatprep.subr.mxu0 0.0
        %1231 = vmatpush1.msra.mxu0 0.0
        %1232 = vmatprep.subr.mxu0 0.0
        %1233 = vmatpush1.msra.mxu0 0.0
        %1234 = vmatprep.subr.mxu0 0.0
        %1235 = vmatpush1.msra.mxu0 0.0
        %1236 = vmatprep.subr.mxu0 0.0
        %1237 = vmatpush1.msra.mxu0 0.0
        %1238 = vmatprep.subr.mxu0 0.0
        %1239 = vmatpush1.msra.mxu0 0.0
        %1240 = vmatprep.subr.mxu0 0.0
        %1241 = vmatpush1.msra.mxu0 0.0
        %1242 = vmatprep.subr.mxu0 0.0
        %1243 = vmatpush1.msra.mxu0 0.0
        %1244 = vmatprep.subr.mxu0 0.0
        %1245 = vmatpush1.msra.mxu0 0.0
        %1246 = vmatprep.subr.mxu0 0.0
        %1247 = vmatpush1.msra.mxu0 0.0
        %1248 = vmatprep.subr.mxu0 0.0
        %1249 = vmatpush1.msra.mxu0 0.0
        %1250 = vmatprep.subr.mxu0 0.0
        %1251 = vmatpush1.msra.mxu0 0.0
        %1252 = vmatprep.subr.mxu0 0.0
        %1253 = vmatpush1.msra.mxu0 0.0
        %1254 = vmatprep.subr.mxu0 0.0
        %1255 = vmatpush1.msra.mxu0 0.0
        %1256 = vmatprep.subr.mxu0 0.0
        %1257 = vmatpush1.msra.mxu0 0.0
        %1258 = vmatprep.subr.mxu0 0.0
        %1259 = vmatpush1.msra.mxu0 0.0
        %1260 = vmatprep.subr.mxu0 0.0
        %1261 = vmatpush1.msra.mxu0 0.0
        %1262 = vmatprep.subr.mxu0 0.0
        %1263 = vmatpush1.msra.mxu0 0.0
        %1264 = vmatprep.subr.mxu0 0.0
        %1265 = vmatpush1.msra.mxu0 0.0
        %1266 = vmatprep.subr.mxu0 0.0
        %1267 = vmatpush1.msra.mxu0 0.0
        %1268 = vmatprep.subr.mxu0 0.0
        %1269 = vmatpush1.msra.mxu0 0.0
        %1270 = vmatprep.subr.mxu0 0.0
        %1271 = vmatpush1.msra.mxu0 0.0
        %1272 = vmatprep.subr.mxu0 0.0
        %1273 = vmatpush1.msra.mxu0 0.0
        %1274 = vmatprep.subr.mxu0 0.0
        %1275 = vmatpush1.msra.mxu0 0.0
        %1276 = vmatprep.mubr.f32.mxu0 0.0
        %v1277 = vand.u32 %v1070, 4294901760
        %1278 = vmatmul.mubr.f32.gmra.mrb[0].mxu0 %v1277
        %v1279 = vpop.f32.mrb[0].mxu0
        %v1280 = vadd.f32 %v1156, %v1279
        %v1281 = vpop.f32.mrb[0].mxu0
        %v1282 = vadd.f32 %v1158, %v1281
        %1283 = vmatprep.mubr.f32.mxu0 0.0
        %v1284 = vand.u32 %v1073, 4294901760
        %1285 = vmatmul.mubr.f32.gmra.mrb[0].mxu0 %v1284
        %v1286 = vpop.f32.mrb[0].mxu0
        %v1287 = vadd.f32 %v1167, %v1286
        %v1288 = vpop.f32.mrb[0].mxu0
        %v1289 = vadd.f32 %v1169, %v1288
        %1290 = vmatprep.mubr.f32.mxu0 0.0
        %v1291 = vand.u32 %v1076, 4294901760
        %1292 = vmatmul.mubr.f32.gmra.mrb[0].mxu0 %v1291
        %v1293 = vpop.f32.mrb[0].mxu0
        %v1294 = vadd.f32 %v1178, %v1293
        %v1295 = vpop.f32.mrb[0].mxu0
        %v1296 = vadd.f32 %v1180, %v1295
        %1297 = vdwg.mxu0
        %v1298 = vand.u32 %v303, 4294901760
        %v1299 = vsub.f32 %v303, %v1298
        %1300 = vmatprep.subr.mxu0 %v1299
        %v1301 = vand.u32 %v302, 4294901760
        %v1302 = vsub.f32 %v302, %v1301
        %1303 = vmatpush1.msra.mxu0 %v1302
        %v1304 = vand.u32 %v305, 4294901760
        %v1305 = vsub.f32 %v305, %v1304
        %1306 = vmatprep.subr.mxu0 %v1305
        %v1307 = vand.u32 %v304, 4294901760
        %v1308 = vsub.f32 %v304, %v1307
        %1309 = vmatpush1.msra.mxu0 %v1308
        %v1310 = vand.u32 %v424, 4294901760
        %v1311 = vsub.f32 %v424, %v1310
        %1312 = vmatprep.subr.mxu0 %v1311
        %v1313 = vand.u32 %v421, 4294901760
        %v1314 = vsub.f32 %v421, %v1313
        %1315 = vmatpush1.msra.mxu0 %v1314
        %1316 = vmatprep.subr.mxu0 0.0
        %1317 = vmatpush1.msra.mxu0 0.0
        %1318 = vmatprep.subr.mxu0 0.0
        %1319 = vmatpush1.msra.mxu0 0.0
        %1320 = vmatprep.subr.mxu0 0.0
        %1321 = vmatpush1.msra.mxu0 0.0
        %1322 = vmatprep.subr.mxu0 0.0
        %1323 = vmatpush1.msra.mxu0 0.0
        %1324 = vmatprep.subr.mxu0 0.0
        %1325 = vmatpush1.msra.mxu0 0.0
        %1326 = vmatprep.subr.mxu0 0.0
        %1327 = vmatpush1.msra.mxu0 0.0
        %1328 = vmatprep.subr.mxu0 0.0
        %1329 = vmatpush1.msra.mxu0 0.0
        %1330 = vmatprep.subr.mxu0 0.0
        %1331 = vmatpush1.msra.mxu0 0.0
        %1332 = vmatprep.subr.mxu0 0.0
        %1333 = vmatpush1.msra.mxu0 0.0
        %1334 = vmatprep.subr.mxu0 0.0
        %1335 = vmatpush1.msra.mxu0 0.0
        %1336 = vmatprep.subr.mxu0 0.0
        %1337 = vmatpush1.msra.mxu0 0.0
        %1338 = vmatprep.subr.mxu0 0.0
        %1339 = vmatpush1.msra.mxu0 0.0
        %1340 = vmatprep.subr.mxu0 0.0
        %1341 = vmatpush1.msra.mxu0 0.0
        %1342 = vmatprep.subr.mxu0 0.0
        %1343 = vmatpush1.msra.mxu0 0.0
        %1344 = vmatprep.subr.mxu0 0.0
        %1345 = vmatpush1.msra.mxu0 0.0
        %1346 = vmatprep.subr.mxu0 0.0
        %1347 = vmatpush1.msra.mxu0 0.0
        %1348 = vmatprep.subr.mxu0 0.0
        %1349 = vmatpush1.msra.mxu0 0.0
        %1350 = vmatprep.subr.mxu0 0.0
        %1351 = vmatpush1.msra.mxu0 0.0
        %1352 = vmatprep.subr.mxu0 0.0
        %1353 = vmatpush1.msra.mxu0 0.0
        %1354 = vmatprep.subr.mxu0 0.0
        %1355 = vmatpush1.msra.mxu0 0.0
        %1356 = vmatprep.subr.mxu0 0.0
        %1357 = vmatpush1.msra.mxu0 0.0
        %1358 = vmatprep.subr.mxu0 0.0
        %1359 = vmatpush1.msra.mxu0 0.0
        %1360 = vmatprep.subr.mxu0 0.0
        %1361 = vmatpush1.msra.mxu0 0.0
        %1362 = vmatprep.subr.mxu0 0.0
        %1363 = vmatpush1.msra.mxu0 0.0
        %1364 = vmatprep.subr.mxu0 0.0
        %1365 = vmatpush1.msra.mxu0 0.0
        %1366 = vmatprep.subr.mxu0 0.0
        %1367 = vmatpush1.msra.mxu0 0.0
        %1368 = vmatprep.subr.mxu0 0.0
        %1369 = vmatpush1.msra.mxu0 0.0
        %1370 = vmatprep.subr.mxu0 0.0
        %1371 = vmatpush1.msra.mxu0 0.0
        %1372 = vmatprep.subr.mxu0 0.0
        %1373 = vmatpush1.msra.mxu0 0.0
        %1374 = vmatprep.mubr.f32.mxu0 0.0
        %v1375 = vand.u32 %v1070, 4294901760
        %v1376 = vsub.f32 %v1070, %v1375
        %1377 = vmatmul.mubr.f32.gmra.mrb[0].mxu0 %v1376
        %v1378 = vpop.f32.mrb[0].mxu0
        %v1379 = vadd.f32 %v1280, %v1378
        %v1380 = vpop.f32.mrb[0].mxu0
        %v1381 = vadd.f32 %v1282, %v1380
        %1382 = vmatprep.mubr.f32.mxu0 0.0
        %v1383 = vand.u32 %v1073, 4294901760
        %v1384 = vsub.f32 %v1073, %v1383
        %1385 = vmatmul.mubr.f32.gmra.mrb[0].mxu0 %v1384
        %v1386 = vpop.f32.mrb[0].mxu0
        %v1387 = vadd.f32 %v1287, %v1386
        %v1388 = vpop.f32.mrb[0].mxu0
        %v1389 = vadd.f32 %v1289, %v1388
        %1390 = vmatprep.mubr.f32.mxu0 0.0
        %v1391 = vand.u32 %v1076, 4294901760
        %v1392 = vsub.f32 %v1076, %v1391
        %1393 = vmatmul.mubr.f32.gmra.mrb[0].mxu0 %v1392
        %v1394 = vpop.f32.mrb[0].mxu0
        %v1395 = vadd.f32 %v1294, %v1394
        %v1396 = vpop.f32.mrb[0].mxu0
        %v1397 = vadd.f32 %v1296, %v1396
        %1398 = vdwg.mxu0
        %v1399 = vand.u32 %v303, 4294901760
        %1400 = vmatprep.subr.mxu0 %v1399
        %v1401 = vand.u32 %v302, 4294901760
        %1402 = vmatpush1.msra.mxu0 %v1401
        %v1403 = vand.u32 %v305, 4294901760
        %1404 = vmatprep.subr.mxu0 %v1403
        %v1405 = vand.u32 %v304, 4294901760
        %1406 = vmatpush1.msra.mxu0 %v1405
        %v1407 = vand.u32 %v424, 4294901760
        %1408 = vmatprep.subr.mxu0 %v1407
        %v1409 = vand.u32 %v421, 4294901760
        %1410 = vmatpush1.msra.mxu0 %v1409
        %1411 = vmatprep.subr.mxu0 0.0
        %1412 = vmatpush1.msra.mxu0 0.0
        %1413 = vmatprep.subr.mxu0 0.0
        %1414 = vmatpush1.msra.mxu0 0.0
        %1415 = vmatprep.subr.mxu0 0.0
        %1416 = vmatpush1.msra.mxu0 0.0
        %1417 = vmatprep.subr.mxu0 0.0
        %1418 = vmatpush1.msra.mxu0 0.0
        %1419 = vmatprep.subr.mxu0 0.0
        %1420 = vmatpush1.msra.mxu0 0.0
        %1421 = vmatprep.subr.mxu0 0.0
        %1422 = vmatpush1.msra.mxu0 0.0
        %1423 = vmatprep.subr.mxu0 0.0
        %1424 = vmatpush1.msra.mxu0 0.0
        %1425 = vmatprep.subr.mxu0 0.0
        %1426 = vmatpush1.msra.mxu0 0.0
        %1427 = vmatprep.subr.mxu0 0.0
        %1428 = vmatpush1.msra.mxu0 0.0
        %1429 = vmatprep.subr.mxu0 0.0
        %1430 = vmatpush1.msra.mxu0 0.0
        %1431 = vmatprep.subr.mxu0 0.0
        %1432 = vmatpush1.msra.mxu0 0.0
        %1433 = vmatprep.subr.mxu0 0.0
        %1434 = vmatpush1.msra.mxu0 0.0
        %1435 = vmatprep.subr.mxu0 0.0
        %1436 = vmatpush1.msra.mxu0 0.0
        %1437 = vmatprep.subr.mxu0 0.0
        %1438 = vmatpush1.msra.mxu0 0.0
        %1439 = vmatprep.subr.mxu0 0.0
        %1440 = vmatpush1.msra.mxu0 0.0
        %1441 = vmatprep.subr.mxu0 0.0
        %1442 = vmatpush1.msra.mxu0 0.0
        %1443 = vmatprep.subr.mxu0 0.0
        %1444 = vmatpush1.msra.mxu0 0.0
        %1445 = vmatprep.subr.mxu0 0.0
        %1446 = vmatpush1.msra.mxu0 0.0
        %1447 = vmatprep.subr.mxu0 0.0
        %1448 = vmatpush1.msra.mxu0 0.0
        %1449 = vmatprep.subr.mxu0 0.0
        %1450 = vmatpush1.msra.mxu0 0.0
        %1451 = vmatprep.subr.mxu0 0.0
        %1452 = vmatpush1.msra.mxu0 0.0
        %1453 = vmatprep.subr.mxu0 0.0
        %1454 = vmatpush1.msra.mxu0 0.0
        %1455 = vmatprep.subr.mxu0 0.0
        %1456 = vmatpush1.msra.mxu0 0.0
        %1457 = vmatprep.subr.mxu0 0.0
        %1458 = vmatpush1.msra.mxu0 0.0
        %1459 = vmatprep.subr.mxu0 0.0
        %1460 = vmatpush1.msra.mxu0 0.0
        %1461 = vmatprep.subr.mxu0 0.0
        %1462 = vmatpush1.msra.mxu0 0.0
        %1463 = vmatprep.subr.mxu0 0.0
        %1464 = vmatpush1.msra.mxu0 0.0
        %1465 = vmatprep.subr.mxu0 0.0
        %1466 = vmatpush1.msra.mxu0 0.0
        %1467 = vmatprep.subr.mxu0 0.0
        %1468 = vmatpush1.msra.mxu0 0.0
        %1469 = vmatprep.mubr.f32.mxu0 0.0
        %v1470 = vand.u32 %v1070, 4294901760
        %v1471 = vsub.f32 %v1070, %v1470
        %v1472 = vand.u32 %v1471, 4294901760
        %1473 = vmatmul.mubr.f32.gmra.mrb[0].mxu0 %v1472
        %v1474 = vpop.f32.mrb[0].mxu0
        %v1475 = vadd.f32 %v1379, %v1474
        %v1476 = vpop.f32.mrb[0].mxu0
        %v1477 = vadd.f32 %v1381, %v1476
        %1478 = vmatprep.mubr.f32.mxu0 0.0
        %v1479 = vand.u32 %v1073, 4294901760
        %v1480 = vsub.f32 %v1073, %v1479
        %v1481 = vand.u32 %v1480, 4294901760
        %1482 = vmatmul.mubr.f32.gmra.mrb[0].mxu0 %v1481
        %v1483 = vpop.f32.mrb[0].mxu0
        %v1484 = vadd.f32 %v1387, %v1483
        %v1485 = vpop.f32.mrb[0].mxu0
        %v1486 = vadd.f32 %v1389, %v1485
        %1487 = vmatprep.mubr.f32.mxu0 0.0
        %v1488 = vand.u32 %v1076, 4294901760
        %v1489 = vsub.f32 %v1076, %v1488
        %v1490 = vand.u32 %v1489, 4294901760
        %1491 = vmatmul.mubr.f32.gmra.mrb[0].mxu0 %v1490
        %v1492 = vpop.f32.mrb[0].mxu0
        %v1493 = vadd.f32 %v1395, %v1492
        %v1494 = vpop.f32.mrb[0].mxu0
        %v1495 = vadd.f32 %v1397, %v1494
        %1496 = vdwg.mxu0
        %v1497 = vand.u32 %v303, 4294901760
        %v1498 = vsub.f32 %v303, %v1497
        %v1499 = vand.u32 %v1498, 4294901760
        %1500 = vmatprep.subr.mxu0 %v1499
        %v1501 = vand.u32 %v302, 4294901760
        %v1502 = vsub.f32 %v302, %v1501
        %v1503 = vand.u32 %v1502, 4294901760
        %1504 = vmatpush1.msra.mxu0 %v1503
        %v1505 = vand.u32 %v305, 4294901760
        %v1506 = vsub.f32 %v305, %v1505
        %v1507 = vand.u32 %v1506, 4294901760
        %1508 = vmatprep.subr.mxu0 %v1507
        %v1509 = vand.u32 %v304, 4294901760
        %v1510 = vsub.f32 %v304, %v1509
        %v1511 = vand.u32 %v1510, 4294901760
        %1512 = vmatpush1.msra.mxu0 %v1511
        %v1513 = vand.u32 %v424, 4294901760
        %v1514 = vsub.f32 %v424, %v1513
        %v1515 = vand.u32 %v1514, 4294901760
        %1516 = vmatprep.subr.mxu0 %v1515
        %v1517 = vand.u32 %v421, 4294901760
        %v1518 = vsub.f32 %v421, %v1517
        %v1519 = vand.u32 %v1518, 4294901760
        %1520 = vmatpush1.msra.mxu0 %v1519
        %1521 = vmatprep.subr.mxu0 0.0
        %1522 = vmatpush1.msra.mxu0 0.0
        %1523 = vmatprep.subr.mxu0 0.0
        %1524 = vmatpush1.msra.mxu0 0.0
        %1525 = vmatprep.subr.mxu0 0.0
        %1526 = vmatpush1.msra.mxu0 0.0
        %1527 = vmatprep.subr.mxu0 0.0
        %1528 = vmatpush1.msra.mxu0 0.0
        %1529 = vmatprep.subr.mxu0 0.0
        %1530 = vmatpush1.msra.mxu0 0.0
        %1531 = vmatprep.subr.mxu0 0.0
        %1532 = vmatpush1.msra.mxu0 0.0
        %1533 = vmatprep.subr.mxu0 0.0
        %1534 = vmatpush1.msra.mxu0 0.0
        %1535 = vmatprep.subr.mxu0 0.0
        %1536 = vmatpush1.msra.mxu0 0.0
        %1537 = vmatprep.subr.mxu0 0.0
        %1538 = vmatpush1.msra.mxu0 0.0
        %1539 = vmatprep.subr.mxu0 0.0
        %1540 = vmatpush1.msra.mxu0 0.0
        %1541 = vmatprep.subr.mxu0 0.0
        %1542 = vmatpush1.msra.mxu0 0.0
        %1543 = vmatprep.subr.mxu0 0.0
        %1544 = vmatpush1.msra.mxu0 0.0
        %1545 = vmatprep.subr.mxu0 0.0
        %1546 = vmatpush1.msra.mxu0 0.0
        %1547 = vmatprep.subr.mxu0 0.0
        %1548 = vmatpush1.msra.mxu0 0.0
        %1549 = vmatprep.subr.mxu0 0.0
        %1550 = vmatpush1.msra.mxu0 0.0
        %1551 = vmatprep.subr.mxu0 0.0
        %1552 = vmatpush1.msra.mxu0 0.0
        %1553 = vmatprep.subr.mxu0 0.0
        %1554 = vmatpush1.msra.mxu0 0.0
        %1555 = vmatprep.subr.mxu0 0.0
        %1556 = vmatpush1.msra.mxu0 0.0
        %1557 = vmatprep.subr.mxu0 0.0
        %1558 = vmatpush1.msra.mxu0 0.0
        %1559 = vmatprep.subr.mxu0 0.0
        %1560 = vmatpush1.msra.mxu0 0.0
        %1561 = vmatprep.subr.mxu0 0.0
        %1562 = vmatpush1.msra.mxu0 0.0
        %1563 = vmatprep.subr.mxu0 0.0
        %1564 = vmatpush1.msra.mxu0 0.0
        %1565 = vmatprep.subr.mxu0 0.0
        %1566 = vmatpush1.msra.mxu0 0.0
        %1567 = vmatprep.subr.mxu0 0.0
        %1568 = vmatpush1.msra.mxu0 0.0
        %1569 = vmatprep.subr.mxu0 0.0
        %1570 = vmatpush1.msra.mxu0 0.0
        %1571 = vmatprep.subr.mxu0 0.0
        %1572 = vmatpush1.msra.mxu0 0.0
        %1573 = vmatprep.subr.mxu0 0.0
        %1574 = vmatpush1.msra.mxu0 0.0
        %1575 = vmatprep.subr.mxu0 0.0
        %1576 = vmatpush1.msra.mxu0 0.0
        %1577 = vmatprep.subr.mxu0 0.0
        %1578 = vmatpush1.msra.mxu0 0.0
        %1579 = vmatprep.mubr.f32.mxu0 0.0
        %v1580 = vand.u32 %v1070, 4294901760
        %1581 = vmatmul.mubr.f32.gmra.mrb[0].mxu0 %v1580
        %v1582 = vpop.f32.mrb[0].mxu0
        %v1583 = vadd.f32 %v1475, %v1582
        %v1584 = vpop.f32.mrb[0].mxu0
        %v1585 = vadd.f32 %v1477, %v1584
        %1586 = vmatprep.mubr.f32.mxu0 0.0
        %v1587 = vand.u32 %v1073, 4294901760
        %1588 = vmatmul.mubr.f32.gmra.mrb[0].mxu0 %v1587
        %v1589 = vpop.f32.mrb[0].mxu0
        %v1590 = vadd.f32 %v1484, %v1589
        %v1591 = vpop.f32.mrb[0].mxu0
        %v1592 = vadd.f32 %v1486, %v1591
        %1593 = vmatprep.mubr.f32.mxu0 0.0
        %v1594 = vand.u32 %v1076, 4294901760
        %1595 = vmatmul.mubr.f32.gmra.mrb[0].mxu0 %v1594
        %v1596 = vpop.f32.mrb[0].mxu0
        %v1597 = vadd.f32 %v1493, %v1596
        %v1598 = vpop.f32.mrb[0].mxu0
        %v1599 = vadd.f32 %v1495, %v1598
        %1600 = vdwg.mxu0
        %v1601 = vand.u32 %v303, 4294901760
        %1602 = vmatprep.subr.mxu0 %v1601
        %v1603 = vand.u32 %v302, 4294901760
        %1604 = vmatpush1.msra.mxu0 %v1603
        %v1605 = vand.u32 %v305, 4294901760
        %1606 = vmatprep.subr.mxu0 %v1605
        %v1607 = vand.u32 %v304, 4294901760
        %1608 = vmatpush1.msra.mxu0 %v1607
        %v1609 = vand.u32 %v424, 4294901760
        %1610 = vmatprep.subr.mxu0 %v1609
        %v1611 = vand.u32 %v421, 4294901760
        %1612 = vmatpush1.msra.mxu0 %v1611
        %1613 = vmatprep.subr.mxu0 0.0
        %1614 = vmatpush1.msra.mxu0 0.0
        %1615 = vmatprep.subr.mxu0 0.0
        %1616 = vmatpush1.msra.mxu0 0.0
        %1617 = vmatprep.subr.mxu0 0.0
        %1618 = vmatpush1.msra.mxu0 0.0
        %1619 = vmatprep.subr.mxu0 0.0
        %1620 = vmatpush1.msra.mxu0 0.0
        %1621 = vmatprep.subr.mxu0 0.0
        %1622 = vmatpush1.msra.mxu0 0.0
        %1623 = vmatprep.subr.mxu0 0.0
        %1624 = vmatpush1.msra.mxu0 0.0
        %1625 = vmatprep.subr.mxu0 0.0
        %1626 = vmatpush1.msra.mxu0 0.0
        %1627 = vmatprep.subr.mxu0 0.0
        %1628 = vmatpush1.msra.mxu0 0.0
        %1629 = vmatprep.subr.mxu0 0.0
        %1630 = vmatpush1.msra.mxu0 0.0
        %1631 = vmatprep.subr.mxu0 0.0
        %1632 = vmatpush1.msra.mxu0 0.0
        %1633 = vmatprep.subr.mxu0 0.0
        %1634 = vmatpush1.msra.mxu0 0.0
        %1635 = vmatprep.subr.mxu0 0.0
        %1636 = vmatpush1.msra.mxu0 0.0
        %1637 = vmatprep.subr.mxu0 0.0
        %1638 = vmatpush1.msra.mxu0 0.0
        %1639 = vmatprep.subr.mxu0 0.0
        %1640 = vmatpush1.msra.mxu0 0.0
        %1641 = vmatprep.subr.mxu0 0.0
        %1642 = vmatpush1.msra.mxu0 0.0
        %1643 = vmatprep.subr.mxu0 0.0
        %1644 = vmatpush1.msra.mxu0 0.0
        %1645 = vmatprep.subr.mxu0 0.0
        %1646 = vmatpush1.msra.mxu0 0.0
        %1647 = vmatprep.subr.mxu0 0.0
        %1648 = vmatpush1.msra.mxu0 0.0
        %1649 = vmatprep.subr.mxu0 0.0
        %1650 = vmatpush1.msra.mxu0 0.0
        %1651 = vmatprep.subr.mxu0 0.0
        %1652 = vmatpush1.msra.mxu0 0.0
        %1653 = vmatprep.subr.mxu0 0.0
        %1654 = vmatpush1.msra.mxu0 0.0
        %1655 = vmatprep.subr.mxu0 0.0
        %1656 = vmatpush1.msra.mxu0 0.0
        %1657 = vmatprep.subr.mxu0 0.0
        %1658 = vmatpush1.msra.mxu0 0.0
        %1659 = vmatprep.subr.mxu0 0.0
        %1660 = vmatpush1.msra.mxu0 0.0
        %1661 = vmatprep.subr.mxu0 0.0
        %1662 = vmatpush1.msra.mxu0 0.0
        %1663 = vmatprep.subr.mxu0 0.0
        %1664 = vmatpush1.msra.mxu0 0.0
        %1665 = vmatprep.subr.mxu0 0.0
        %1666 = vmatpush1.msra.mxu0 0.0
        %1667 = vmatprep.subr.mxu0 0.0
        %1668 = vmatpush1.msra.mxu0 0.0
        %1669 = vmatprep.subr.mxu0 0.0
        %1670 = vmatpush1.msra.mxu0 0.0
        %1671 = vmatprep.mubr.f32.mxu0 0.0
        %v1672 = vand.u32 %v1070, 4294901760
        %1673 = vmatmul.mubr.f32.gmra.mrb[0].mxu0 %v1672
        %v1674 = vpop.f32.mrb[0].mxu0
        %v1675 = vadd.f32 %v1583, %v1674
        %v1676 = vpop.f32.mrb[0].mxu0
        %v1677 = vadd.f32 %v1585, %v1676
        %1678 = vmatprep.mubr.f32.mxu0 0.0
        %v1679 = vand.u32 %v1073, 4294901760
        %1680 = vmatmul.mubr.f32.gmra.mrb[0].mxu0 %v1679
        %v1681 = vpop.f32.mrb[0].mxu0
        %v1682 = vadd.f32 %v1590, %v1681
        %v1683 = vpop.f32.mrb[0].mxu0
        %v1684 = vadd.f32 %v1592, %v1683
        %1685 = vmatprep.mubr.f32.mxu0 0.0
        %v1686 = vand.u32 %v1076, 4294901760
        %1687 = vmatmul.mubr.f32.gmra.mrb[0].mxu0 %v1686
        %v1688 = vpop.f32.mrb[0].mxu0
        %v1689 = vadd.f32 %v1597, %v1688
        %v1690 = vpop.f32.mrb[0].mxu0
        %v1691 = vadd.f32 %v1599, %v1690
        %1692 = vdwg.mxu0
        %v1693 = vmul.f32 %v1675, %v400
        %v1694 = vmul.f32 %v1677, %v401
        %v1695 = vmul.f32 %v1682, %v402
        %v1696 = vmul.f32 %v1684, %v403
        %v1697 = vmul.f32 %v1689, %v404
        %v1698 = vmul.f32 %v1691, %v405
        %v1699 = vadd.f32 %v1693, %v1695
        %v1700 = vsel %vm419, %v1697, 0.0
        %v1701 = vadd.f32 %v1699, %v1700
        %v1702 = vrot.slane %v1701, 4
        %v1703 = vadd.f32 %v1701, %v1702
        %v1704 = vrot.slane %v1703, 2
        %v1705 = vadd.f32 %v1703, %v1704
        %v1706 = vrot.slane %v1705, 1
        %v1707 = vadd.f32 %v1705, %v1706
        %v1708 = vadd.f32 %v1694, %v1696
        %v1709 = vsel %vm419, %v1698, 0.0
        %v1710 = vadd.f32 %v1708, %v1709
        %v1711 = vrot.slane %v1710, 4
        %v1712 = vadd.f32 %v1710, %v1711
        %v1713 = vrot.slane %v1712, 2
        %v1714 = vadd.f32 %v1712, %v1713
        %v1715 = vrot.slane %v1714, 1
        %v1716 = vadd.f32 %v1714, %v1715
        %s1717 = scalar_lea.vmem %s191, 48
        %v1718 = vld [vmem:[%s1717] sm:$0xff]
        %v1719 = vld [vmem:[%s1717 + $0x8] sm:$0xff]
        %v1720 = vld [vmem:[%s1717 + $0x10] sm:$0x3]
        %v1722 = vsel %vm409, %v1718, 0
        %v1725 = vsel %vm409, %v1719, 0
        %v1728 = vsel %vm409, %v1720, 0
        %v1730 = vand.u32 %v303, 4294901760
        %1731 = vmatprep.subr.mxu0 %v1730
        %v1732 = vand.u32 %v302, 4294901760
        %1733 = vmatpush1.msra.mxu0 %v1732
        %v1734 = vand.u32 %v305, 4294901760
        %1735 = vmatprep.subr.mxu0 %v1734
        %v1736 = vand.u32 %v304, 4294901760
        %1737 = vmatpush1.msra.mxu0 %v1736
        %v1738 = vand.u32 %v424, 4294901760
        %1739 = vmatprep.subr.mxu0 %v1738
        %v1740 = vand.u32 %v421, 4294901760
        %1741 = vmatpush1.msra.mxu0 %v1740
        %1742 = vmatprep.subr.mxu0 0.0
        %1743 = vmatpush1.msra.mxu0 0.0
        %1744 = vmatprep.subr.mxu0 0.0
        %1745 = vmatpush1.msra.mxu0 0.0
        %1746 = vmatprep.subr.mxu0 0.0
        %1747 = vmatpush1.msra.mxu0 0.0
        %1748 = vmatprep.subr.mxu0 0.0
        %1749 = vmatpush1.msra.mxu0 0.0
        %1750 = vmatprep.subr.mxu0 0.0
        %1751 = vmatpush1.msra.mxu0 0.0
        %1752 = vmatprep.subr.mxu0 0.0
        %1753 = vmatpush1.msra.mxu0 0.0
        %1754 = vmatprep.subr.mxu0 0.0
        %1755 = vmatpush1.msra.mxu0 0.0
        %1756 = vmatprep.subr.mxu0 0.0
        %1757 = vmatpush1.msra.mxu0 0.0
        %1758 = vmatprep.subr.mxu0 0.0
        %1759 = vmatpush1.msra.mxu0 0.0
        %1760 = vmatprep.subr.mxu0 0.0
        %1761 = vmatpush1.msra.mxu0 0.0
        %1762 = vmatprep.subr.mxu0 0.0
        %1763 = vmatpush1.msra.mxu0 0.0
        %1764 = vmatprep.subr.mxu0 0.0
        %1765 = vmatpush1.msra.mxu0 0.0
        %1766 = vmatprep.subr.mxu0 0.0
        %1767 = vmatpush1.msra.mxu0 0.0
        %1768 = vmatprep.subr.mxu0 0.0
        %1769 = vmatpush1.msra.mxu0 0.0
        %1770 = vmatprep.subr.mxu0 0.0
        %1771 = vmatpush1.msra.mxu0 0.0
        %1772 = vmatprep.subr.mxu0 0.0
        %1773 = vmatpush1.msra.mxu0 0.0
        %1774 = vmatprep.subr.mxu0 0.0
        %1775 = vmatpush1.msra.mxu0 0.0
        %1776 = vmatprep.subr.mxu0 0.0
        %1777 = vmatpush1.msra.mxu0 0.0
        %1778 = vmatprep.subr.mxu0 0.0
        %1779 = vmatpush1.msra.mxu0 0.0
        %1780 = vmatprep.subr.mxu0 0.0
        %1781 = vmatpush1.msra.mxu0 0.0
        %1782 = vmatprep.subr.mxu0 0.0
        %1783 = vmatpush1.msra.mxu0 0.0
        %1784 = vmatprep.subr.mxu0 0.0
        %1785 = vmatpush1.msra.mxu0 0.0
        %1786 = vmatprep.subr.mxu0 0.0
        %1787 = vmatpush1.msra.mxu0 0.0
        %1788 = vmatprep.subr.mxu0 0.0
        %1789 = vmatpush1.msra.mxu0 0.0
        %1790 = vmatprep.subr.mxu0 0.0
        %1791 = vmatpush1.msra.mxu0 0.0
        %1792 = vmatprep.subr.mxu0 0.0
        %1793 = vmatpush1.msra.mxu0 0.0
        %1794 = vmatprep.subr.mxu0 0.0
        %1795 = vmatpush1.msra.mxu0 0.0
        %1796 = vmatprep.subr.mxu0 0.0
        %1797 = vmatpush1.msra.mxu0 0.0
        %1798 = vmatprep.subr.mxu0 0.0
        %1799 = vmatpush1.msra.mxu0 0.0
        %1800 = vmatprep.mubr.f32.mxu0 0.0
        %v1801 = vand.u32 %v1722, 4294901760
        %v1802 = vsub.f32 %v1722, %v1801
        %v1803 = vand.u32 %v1802, 4294901760
        %v1804 = vsub.f32 %v1802, %v1803
        %v1805 = vand.u32 %v1804, 4294901760
        %1806 = vmatmul.mubr.f32.gmra.mrb[0].mxu0 %v1805
        %v1807 = vpop.f32.mrb[0].mxu0
        %v1808 = vadd.f32 0.0, %v1807
        %v1809 = vpop.f32.mrb[0].mxu0
        %v1810 = vadd.f32 0.0, %v1809
        %1811 = vmatprep.mubr.f32.mxu0 0.0
        %v1812 = vand.u32 %v1725, 4294901760
        %v1813 = vsub.f32 %v1725, %v1812
        %v1814 = vand.u32 %v1813, 4294901760
        %v1815 = vsub.f32 %v1813, %v1814
        %v1816 = vand.u32 %v1815, 4294901760
        %1817 = vmatmul.mubr.f32.gmra.mrb[0].mxu0 %v1816
        %v1818 = vpop.f32.mrb[0].mxu0
        %v1819 = vadd.f32 0.0, %v1818
        %v1820 = vpop.f32.mrb[0].mxu0
        %v1821 = vadd.f32 0.0, %v1820
        %1822 = vmatprep.mubr.f32.mxu0 0.0
        %v1823 = vand.u32 %v1728, 4294901760
        %v1824 = vsub.f32 %v1728, %v1823
        %v1825 = vand.u32 %v1824, 4294901760
        %v1826 = vsub.f32 %v1824, %v1825
        %v1827 = vand.u32 %v1826, 4294901760
        %1828 = vmatmul.mubr.f32.gmra.mrb[0].mxu0 %v1827
        %v1829 = vpop.f32.mrb[0].mxu0
        %v1830 = vadd.f32 0.0, %v1829
        %v1831 = vpop.f32.mrb[0].mxu0
        %v1832 = vadd.f32 0.0, %v1831
        %1833 = vdwg.mxu0
        %v1834 = vand.u32 %v303, 4294901760
        %v1835 = vsub.f32 %v303, %v1834
        %v1836 = vand.u32 %v1835, 4294901760
        %v1837 = vsub.f32 %v1835, %v1836
        %v1838 = vand.u32 %v1837, 4294901760
        %1839 = vmatprep.subr.mxu0 %v1838
        %v1840 = vand.u32 %v302, 4294901760
        %v1841 = vsub.f32 %v302, %v1840
        %v1842 = vand.u32 %v1841, 4294901760
        %v1843 = vsub.f32 %v1841, %v1842
        %v1844 = vand.u32 %v1843, 4294901760
        %1845 = vmatpush1.msra.mxu0 %v1844
        %v1846 = vand.u32 %v305, 4294901760
        %v1847 = vsub.f32 %v305, %v1846
        %v1848 = vand.u32 %v1847, 4294901760
        %v1849 = vsub.f32 %v1847, %v1848
        %v1850 = vand.u32 %v1849, 4294901760
        %1851 = vmatprep.subr.mxu0 %v1850
        %v1852 = vand.u32 %v304, 4294901760
        %v1853 = vsub.f32 %v304, %v1852
        %v1854 = vand.u32 %v1853, 4294901760
        %v1855 = vsub.f32 %v1853, %v1854
        %v1856 = vand.u32 %v1855, 4294901760
        %1857 = vmatpush1.msra.mxu0 %v1856
        %v1858 = vand.u32 %v424, 4294901760
        %v1859 = vsub.f32 %v424, %v1858
        %v1860 = vand.u32 %v1859, 4294901760
        %v1861 = vsub.f32 %v1859, %v1860
        %v1862 = vand.u32 %v1861, 4294901760
        %1863 = vmatprep.subr.mxu0 %v1862
        %v1864 = vand.u32 %v421, 4294901760
        %v1865 = vsub.f32 %v421, %v1864
        %v1866 = vand.u32 %v1865, 4294901760
        %v1867 = vsub.f32 %v1865, %v1866
        %v1868 = vand.u32 %v1867, 4294901760
        %1869 = vmatpush1.msra.mxu0 %v1868
        %1870 = vmatprep.subr.mxu0 0.0
        %1871 = vmatpush1.msra.mxu0 0.0
        %1872 = vmatprep.subr.mxu0 0.0
        %1873 = vmatpush1.msra.mxu0 0.0
        %1874 = vmatprep.subr.mxu0 0.0
        %1875 = vmatpush1.msra.mxu0 0.0
        %1876 = vmatprep.subr.mxu0 0.0
        %1877 = vmatpush1.msra.mxu0 0.0
        %1878 = vmatprep.subr.mxu0 0.0
        %1879 = vmatpush1.msra.mxu0 0.0
        %1880 = vmatprep.subr.mxu0 0.0
        %1881 = vmatpush1.msra.mxu0 0.0
        %1882 = vmatprep.subr.mxu0 0.0
        %1883 = vmatpush1.msra.mxu0 0.0
        %1884 = vmatprep.subr.mxu0 0.0
        %1885 = vmatpush1.msra.mxu0 0.0
        %1886 = vmatprep.subr.mxu0 0.0
        %1887 = vmatpush1.msra.mxu0 0.0
        %1888 = vmatprep.subr.mxu0 0.0
        %1889 = vmatpush1.msra.mxu0 0.0
        %1890 = vmatprep.subr.mxu0 0.0
        %1891 = vmatpush1.msra.mxu0 0.0
        %1892 = vmatprep.subr.mxu0 0.0
        %1893 = vmatpush1.msra.mxu0 0.0
        %1894 = vmatprep.subr.mxu0 0.0
        %1895 = vmatpush1.msra.mxu0 0.0
        %1896 = vmatprep.subr.mxu0 0.0
        %1897 = vmatpush1.msra.mxu0 0.0
        %1898 = vmatprep.subr.mxu0 0.0
        %1899 = vmatpush1.msra.mxu0 0.0
        %1900 = vmatprep.subr.mxu0 0.0
        %1901 = vmatpush1.msra.mxu0 0.0
        %1902 = vmatprep.subr.mxu0 0.0
        %1903 = vmatpush1.msra.mxu0 0.0
        %1904 = vmatprep.subr.mxu0 0.0
        %1905 = vmatpush1.msra.mxu0 0.0
        %1906 = vmatprep.subr.mxu0 0.0
        %1907 = vmatpush1.msra.mxu0 0.0
        %1908 = vmatprep.subr.mxu0 0.0
        %1909 = vmatpush1.msra.mxu0 0.0
        %1910 = vmatprep.subr.mxu0 0.0
        %1911 = vmatpush1.msra.mxu0 0.0
        %1912 = vmatprep.subr.mxu0 0.0
        %1913 = vmatpush1.msra.mxu0 0.0
        %1914 = vmatprep.subr.mxu0 0.0
        %1915 = vmatpush1.msra.mxu0 0.0
        %1916 = vmatprep.subr.mxu0 0.0
        %1917 = vmatpush1.msra.mxu0 0.0
        %1918 = vmatprep.subr.mxu0 0.0
        %1919 = vmatpush1.msra.mxu0 0.0
        %1920 = vmatprep.subr.mxu0 0.0
        %1921 = vmatpush1.msra.mxu0 0.0
        %1922 = vmatprep.subr.mxu0 0.0
        %1923 = vmatpush1.msra.mxu0 0.0
        %1924 = vmatprep.subr.mxu0 0.0
        %1925 = vmatpush1.msra.mxu0 0.0
        %1926 = vmatprep.subr.mxu0 0.0
        %1927 = vmatpush1.msra.mxu0 0.0
        %1928 = vmatprep.mubr.f32.mxu0 0.0
        %v1929 = vand.u32 %v1722, 4294901760
        %1930 = vmatmul.mubr.f32.gmra.mrb[0].mxu0 %v1929
        %v1931 = vpop.f32.mrb[0].mxu0
        %v1932 = vadd.f32 %v1808, %v1931
        %v1933 = vpop.f32.mrb[0].mxu0
        %v1934 = vadd.f32 %v1810, %v1933
        %1935 = vmatprep.mubr.f32.mxu0 0.0
        %v1936 = vand.u32 %v1725, 4294901760
        %1937 = vmatmul.mubr.f32.gmra.mrb[0].mxu0 %v1936
        %v1938 = vpop.f32.mrb[0].mxu0
        %v1939 = vadd.f32 %v1819, %v1938
        %v1940 = vpop.f32.mrb[0].mxu0
        %v1941 = vadd.f32 %v1821, %v1940
        %1942 = vmatprep.mubr.f32.mxu0 0.0
        %v1943 = vand.u32 %v1728, 4294901760
        %1944 = vmatmul.mubr.f32.gmra.mrb[0].mxu0 %v1943
        %v1945 = vpop.f32.mrb[0].mxu0
        %v1946 = vadd.f32 %v1830, %v1945
        %v1947 = vpop.f32.mrb[0].mxu0
        %v1948 = vadd.f32 %v1832, %v1947
        %1949 = vdwg.mxu0
        %v1950 = vand.u32 %v303, 4294901760
        %v1951 = vsub.f32 %v303, %v1950
        %1952 = vmatprep.subr.mxu0 %v1951
        %v1953 = vand.u32 %v302, 4294901760
        %v1954 = vsub.f32 %v302, %v1953
        %1955 = vmatpush1.msra.mxu0 %v1954
        %v1956 = vand.u32 %v305, 4294901760
        %v1957 = vsub.f32 %v305, %v1956
        %1958 = vmatprep.subr.mxu0 %v1957
        %v1959 = vand.u32 %v304, 4294901760
        %v1960 = vsub.f32 %v304, %v1959
        %1961 = vmatpush1.msra.mxu0 %v1960
        %v1962 = vand.u32 %v424, 4294901760
        %v1963 = vsub.f32 %v424, %v1962
        %1964 = vmatprep.subr.mxu0 %v1963
        %v1965 = vand.u32 %v421, 4294901760
        %v1966 = vsub.f32 %v421, %v1965
        %1967 = vmatpush1.msra.mxu0 %v1966
        %1968 = vmatprep.subr.mxu0 0.0
        %1969 = vmatpush1.msra.mxu0 0.0
        %1970 = vmatprep.subr.mxu0 0.0
        %1971 = vmatpush1.msra.mxu0 0.0
        %1972 = vmatprep.subr.mxu0 0.0
        %1973 = vmatpush1.msra.mxu0 0.0
        %1974 = vmatprep.subr.mxu0 0.0
        %1975 = vmatpush1.msra.mxu0 0.0
        %1976 = vmatprep.subr.mxu0 0.0
        %1977 = vmatpush1.msra.mxu0 0.0
        %1978 = vmatprep.subr.mxu0 0.0
        %1979 = vmatpush1.msra.mxu0 0.0
        %1980 = vmatprep.subr.mxu0 0.0
        %1981 = vmatpush1.msra.mxu0 0.0
        %1982 = vmatprep.subr.mxu0 0.0
        %1983 = vmatpush1.msra.mxu0 0.0
        %1984 = vmatprep.subr.mxu0 0.0
        %1985 = vmatpush1.msra.mxu0 0.0
        %1986 = vmatprep.subr.mxu0 0.0
        %1987 = vmatpush1.msra.mxu0 0.0
        %1988 = vmatprep.subr.mxu0 0.0
        %1989 = vmatpush1.msra.mxu0 0.0
        %1990 = vmatprep.subr.mxu0 0.0
        %1991 = vmatpush1.msra.mxu0 0.0
        %1992 = vmatprep.subr.mxu0 0.0
        %1993 = vmatpush1.msra.mxu0 0.0
        %1994 = vmatprep.subr.mxu0 0.0
        %1995 = vmatpush1.msra.mxu0 0.0
        %1996 = vmatprep.subr.mxu0 0.0
        %1997 = vmatpush1.msra.mxu0 0.0
        %1998 = vmatprep.subr.mxu0 0.0
        %1999 = vmatpush1.msra.mxu0 0.0
        %2000 = vmatprep.subr.mxu0 0.0
        %2001 = vmatpush1.msra.mxu0 0.0
        %2002 = vmatprep.subr.mxu0 0.0
        %2003 = vmatpush1.msra.mxu0 0.0
        %2004 = vmatprep.subr.mxu0 0.0
        %2005 = vmatpush1.msra.mxu0 0.0
        %2006 = vmatprep.subr.mxu0 0.0
        %2007 = vmatpush1.msra.mxu0 0.0
        %2008 = vmatprep.subr.mxu0 0.0
        %2009 = vmatpush1.msra.mxu0 0.0
        %2010 = vmatprep.subr.mxu0 0.0
        %2011 = vmatpush1.msra.mxu0 0.0
        %2012 = vmatprep.subr.mxu0 0.0
        %2013 = vmatpush1.msra.mxu0 0.0
        %2014 = vmatprep.subr.mxu0 0.0
        %2015 = vmatpush1.msra.mxu0 0.0
        %2016 = vmatprep.subr.mxu0 0.0
        %2017 = vmatpush1.msra.mxu0 0.0
        %2018 = vmatprep.subr.mxu0 0.0
        %2019 = vmatpush1.msra.mxu0 0.0
        %2020 = vmatprep.subr.mxu0 0.0
        %2021 = vmatpush1.msra.mxu0 0.0
        %2022 = vmatprep.subr.mxu0 0.0
        %2023 = vmatpush1.msra.mxu0 0.0
        %2024 = vmatprep.subr.mxu0 0.0
        %2025 = vmatpush1.msra.mxu0 0.0
        %2026 = vmatprep.mubr.f32.mxu0 0.0
        %v2027 = vand.u32 %v1722, 4294901760
        %v2028 = vsub.f32 %v1722, %v2027
        %2029 = vmatmul.mubr.f32.gmra.mrb[0].mxu0 %v2028
        %v2030 = vpop.f32.mrb[0].mxu0
        %v2031 = vadd.f32 %v1932, %v2030
        %v2032 = vpop.f32.mrb[0].mxu0
        %v2033 = vadd.f32 %v1934, %v2032
        %2034 = vmatprep.mubr.f32.mxu0 0.0
        %v2035 = vand.u32 %v1725, 4294901760
        %v2036 = vsub.f32 %v1725, %v2035
        %2037 = vmatmul.mubr.f32.gmra.mrb[0].mxu0 %v2036
        %v2038 = vpop.f32.mrb[0].mxu0
        %v2039 = vadd.f32 %v1939, %v2038
        %v2040 = vpop.f32.mrb[0].mxu0
        %v2041 = vadd.f32 %v1941, %v2040
        %2042 = vmatprep.mubr.f32.mxu0 0.0
        %v2043 = vand.u32 %v1728, 4294901760
        %v2044 = vsub.f32 %v1728, %v2043
        %2045 = vmatmul.mubr.f32.gmra.mrb[0].mxu0 %v2044
        %v2046 = vpop.f32.mrb[0].mxu0
        %v2047 = vadd.f32 %v1946, %v2046
        %v2048 = vpop.f32.mrb[0].mxu0
        %v2049 = vadd.f32 %v1948, %v2048
        %2050 = vdwg.mxu0
        %v2051 = vand.u32 %v303, 4294901760
        %2052 = vmatprep.subr.mxu0 %v2051
        %v2053 = vand.u32 %v302, 4294901760
        %2054 = vmatpush1.msra.mxu0 %v2053
        %v2055 = vand.u32 %v305, 4294901760
        %2056 = vmatprep.subr.mxu0 %v2055
        %v2057 = vand.u32 %v304, 4294901760
        %2058 = vmatpush1.msra.mxu0 %v2057
        %v2059 = vand.u32 %v424, 4294901760
        %2060 = vmatprep.subr.mxu0 %v2059
        %v2061 = vand.u32 %v421, 4294901760
        %2062 = vmatpush1.msra.mxu0 %v2061
        %2063 = vmatprep.subr.mxu0 0.0
        %2064 = vmatpush1.msra.mxu0 0.0
        %2065 = vmatprep.subr.mxu0 0.0
        %2066 = vmatpush1.msra.mxu0 0.0
        %2067 = vmatprep.subr.mxu0 0.0
        %2068 = vmatpush1.msra.mxu0 0.0
        %2069 = vmatprep.subr.mxu0 0.0
        %2070 = vmatpush1.msra.mxu0 0.0
        %2071 = vmatprep.subr.mxu0 0.0
        %2072 = vmatpush1.msra.mxu0 0.0
        %2073 = vmatprep.subr.mxu0 0.0
        %2074 = vmatpush1.msra.mxu0 0.0
        %2075 = vmatprep.subr.mxu0 0.0
        %2076 = vmatpush1.msra.mxu0 0.0
        %2077 = vmatprep.subr.mxu0 0.0
        %2078 = vmatpush1.msra.mxu0 0.0
        %2079 = vmatprep.subr.mxu0 0.0
        %2080 = vmatpush1.msra.mxu0 0.0
        %2081 = vmatprep.subr.mxu0 0.0
        %2082 = vmatpush1.msra.mxu0 0.0
        %2083 = vmatprep.subr.mxu0 0.0
        %2084 = vmatpush1.msra.mxu0 0.0
        %2085 = vmatprep.subr.mxu0 0.0
        %2086 = vmatpush1.msra.mxu0 0.0
        %2087 = vmatprep.subr.mxu0 0.0
        %2088 = vmatpush1.msra.mxu0 0.0
        %2089 = vmatprep.subr.mxu0 0.0
        %2090 = vmatpush1.msra.mxu0 0.0
        %2091 = vmatprep.subr.mxu0 0.0
        %2092 = vmatpush1.msra.mxu0 0.0
        %2093 = vmatprep.subr.mxu0 0.0
        %2094 = vmatpush1.msra.mxu0 0.0
        %2095 = vmatprep.subr.mxu0 0.0
        %2096 = vmatpush1.msra.mxu0 0.0
        %2097 = vmatprep.subr.mxu0 0.0
        %2098 = vmatpush1.msra.mxu0 0.0
        %2099 = vmatprep.subr.mxu0 0.0
        %2100 = vmatpush1.msra.mxu0 0.0
        %2101 = vmatprep.subr.mxu0 0.0
        %2102 = vmatpush1.msra.mxu0 0.0
        %2103 = vmatprep.subr.mxu0 0.0
        %2104 = vmatpush1.msra.mxu0 0.0
        %2105 = vmatprep.subr.mxu0 0.0
        %2106 = vmatpush1.msra.mxu0 0.0
        %2107 = vmatprep.subr.mxu0 0.0
        %2108 = vmatpush1.msra.mxu0 0.0
        %2109 = vmatprep.subr.mxu0 0.0
        %2110 = vmatpush1.msra.mxu0 0.0
        %2111 = vmatprep.subr.mxu0 0.0
        %2112 = vmatpush1.msra.mxu0 0.0
        %2113 = vmatprep.subr.mxu0 0.0
        %2114 = vmatpush1.msra.mxu0 0.0
        %2115 = vmatprep.subr.mxu0 0.0
        %2116 = vmatpush1.msra.mxu0 0.0
        %2117 = vmatprep.subr.mxu0 0.0
        %2118 = vmatpush1.msra.mxu0 0.0
        %2119 = vmatprep.subr.mxu0 0.0
        %2120 = vmatpush1.msra.mxu0 0.0
        %2121 = vmatprep.mubr.f32.mxu0 0.0
        %v2122 = vand.u32 %v1722, 4294901760
        %v2123 = vsub.f32 %v1722, %v2122
        %v2124 = vand.u32 %v2123, 4294901760
        %2125 = vmatmul.mubr.f32.gmra.mrb[0].mxu0 %v2124
        %v2126 = vpop.f32.mrb[0].mxu0
        %v2127 = vadd.f32 %v2031, %v2126
        %v2128 = vpop.f32.mrb[0].mxu0
        %v2129 = vadd.f32 %v2033, %v2128
        %2130 = vmatprep.mubr.f32.mxu0 0.0
        %v2131 = vand.u32 %v1725, 4294901760
        %v2132 = vsub.f32 %v1725, %v2131
        %v2133 = vand.u32 %v2132, 4294901760
        %2134 = vmatmul.mubr.f32.gmra.mrb[0].mxu0 %v2133
        %v2135 = vpop.f32.mrb[0].mxu0
        %v2136 = vadd.f32 %v2039, %v2135
        %v2137 = vpop.f32.mrb[0].mxu0
        %v2138 = vadd.f32 %v2041, %v2137
        %2139 = vmatprep.mubr.f32.mxu0 0.0
        %v2140 = vand.u32 %v1728, 4294901760
        %v2141 = vsub.f32 %v1728, %v2140
        %v2142 = vand.u32 %v2141, 4294901760
        %2143 = vmatmul.mubr.f32.gmra.mrb[0].mxu0 %v2142
        %v2144 = vpop.f32.mrb[0].mxu0
        %v2145 = vadd.f32 %v2047, %v2144
        %v2146 = vpop.f32.mrb[0].mxu0
        %v2147 = vadd.f32 %v2049, %v2146
        %2148 = vdwg.mxu0
        %v2149 = vand.u32 %v303, 4294901760
        %v2150 = vsub.f32 %v303, %v2149
        %v2151 = vand.u32 %v2150, 4294901760
        %2152 = vmatprep.subr.mxu0 %v2151
        %v2153 = vand.u32 %v302, 4294901760
        %v2154 = vsub.f32 %v302, %v2153
        %v2155 = vand.u32 %v2154, 4294901760
        %2156 = vmatpush1.msra.mxu0 %v2155
        %v2157 = vand.u32 %v305, 4294901760
        %v2158 = vsub.f32 %v305, %v2157
        %v2159 = vand.u32 %v2158, 4294901760
        %2160 = vmatprep.subr.mxu0 %v2159
        %v2161 = vand.u32 %v304, 4294901760
        %v2162 = vsub.f32 %v304, %v2161
        %v2163 = vand.u32 %v2162, 4294901760
        %2164 = vmatpush1.msra.mxu0 %v2163
        %v2165 = vand.u32 %v424, 4294901760
        %v2166 = vsub.f32 %v424, %v2165
        %v2167 = vand.u32 %v2166, 4294901760
        %2168 = vmatprep.subr.mxu0 %v2167
        %v2169 = vand.u32 %v421, 4294901760
        %v2170 = vsub.f32 %v421, %v2169
        %v2171 = vand.u32 %v2170, 4294901760
        %2172 = vmatpush1.msra.mxu0 %v2171
        %2173 = vmatprep.subr.mxu0 0.0
        %2174 = vmatpush1.msra.mxu0 0.0
        %2175 = vmatprep.subr.mxu0 0.0
        %2176 = vmatpush1.msra.mxu0 0.0
        %2177 = vmatprep.subr.mxu0 0.0
        %2178 = vmatpush1.msra.mxu0 0.0
        %2179 = vmatprep.subr.mxu0 0.0
        %2180 = vmatpush1.msra.mxu0 0.0
        %2181 = vmatprep.subr.mxu0 0.0
        %2182 = vmatpush1.msra.mxu0 0.0
        %2183 = vmatprep.subr.mxu0 0.0
        %2184 = vmatpush1.msra.mxu0 0.0
        %2185 = vmatprep.subr.mxu0 0.0
        %2186 = vmatpush1.msra.mxu0 0.0
        %2187 = vmatprep.subr.mxu0 0.0
        %2188 = vmatpush1.msra.mxu0 0.0
        %2189 = vmatprep.subr.mxu0 0.0
        %2190 = vmatpush1.msra.mxu0 0.0
        %2191 = vmatprep.subr.mxu0 0.0
        %2192 = vmatpush1.msra.mxu0 0.0
        %2193 = vmatprep.subr.mxu0 0.0
        %2194 = vmatpush1.msra.mxu0 0.0
        %2195 = vmatprep.subr.mxu0 0.0
        %2196 = vmatpush1.msra.mxu0 0.0
        %2197 = vmatprep.subr.mxu0 0.0
        %2198 = vmatpush1.msra.mxu0 0.0
        %2199 = vmatprep.subr.mxu0 0.0
        %2200 = vmatpush1.msra.mxu0 0.0
        %2201 = vmatprep.subr.mxu0 0.0
        %2202 = vmatpush1.msra.mxu0 0.0
        %2203 = vmatprep.subr.mxu0 0.0
        %2204 = vmatpush1.msra.mxu0 0.0
        %2205 = vmatprep.subr.mxu0 0.0
        %2206 = vmatpush1.msra.mxu0 0.0
        %2207 = vmatprep.subr.mxu0 0.0
        %2208 = vmatpush1.msra.mxu0 0.0
        %2209 = vmatprep.subr.mxu0 0.0
        %2210 = vmatpush1.msra.mxu0 0.0
        %2211 = vmatprep.subr.mxu0 0.0
        %2212 = vmatpush1.msra.mxu0 0.0
        %2213 = vmatprep.subr.mxu0 0.0
        %2214 = vmatpush1.msra.mxu0 0.0
        %2215 = vmatprep.subr.mxu0 0.0
        %2216 = vmatpush1.msra.mxu0 0.0
        %2217 = vmatprep.subr.mxu0 0.0
        %2218 = vmatpush1.msra.mxu0 0.0
        %2219 = vmatprep.subr.mxu0 0.0
        %2220 = vmatpush1.msra.mxu0 0.0
        %2221 = vmatprep.subr.mxu0 0.0
        %2222 = vmatpush1.msra.mxu0 0.0
        %2223 = vmatprep.subr.mxu0 0.0
        %2224 = vmatpush1.msra.mxu0 0.0
        %2225 = vmatprep.subr.mxu0 0.0
        %2226 = vmatpush1.msra.mxu0 0.0
        %2227 = vmatprep.subr.mxu0 0.0
        %2228 = vmatpush1.msra.mxu0 0.0
        %2229 = vmatprep.subr.mxu0 0.0
        %2230 = vmatpush1.msra.mxu0 0.0
        %2231 = vmatprep.mubr.f32.mxu0 0.0
        %v2232 = vand.u32 %v1722, 4294901760
        %2233 = vmatmul.mubr.f32.gmra.mrb[0].mxu0 %v2232
        %v2234 = vpop.f32.mrb[0].mxu0
        %v2235 = vadd.f32 %v2127, %v2234
        %v2236 = vpop.f32.mrb[0].mxu0
        %v2237 = vadd.f32 %v2129, %v2236
        %2238 = vmatprep.mubr.f32.mxu0 0.0
        %v2239 = vand.u32 %v1725, 4294901760
        %2240 = vmatmul.mubr.f32.gmra.mrb[0].mxu0 %v2239
        %v2241 = vpop.f32.mrb[0].mxu0
        %v2242 = vadd.f32 %v2136, %v2241
        %v2243 = vpop.f32.mrb[0].mxu0
        %v2244 = vadd.f32 %v2138, %v2243
        %2245 = vmatprep.mubr.f32.mxu0 0.0
        %v2246 = vand.u32 %v1728, 4294901760
        %2247 = vmatmul.mubr.f32.gmra.mrb[0].mxu0 %v2246
        %v2248 = vpop.f32.mrb[0].mxu0
        %v2249 = vadd.f32 %v2145, %v2248
        %v2250 = vpop.f32.mrb[0].mxu0
        %v2251 = vadd.f32 %v2147, %v2250
        %2252 = vdwg.mxu0
        %v2253 = vand.u32 %v303, 4294901760
        %2254 = vmatprep.subr.mxu0 %v2253
        %v2255 = vand.u32 %v302, 4294901760
        %2256 = vmatpush1.msra.mxu0 %v2255
        %v2257 = vand.u32 %v305, 4294901760
        %2258 = vmatprep.subr.mxu0 %v2257
        %v2259 = vand.u32 %v304, 4294901760
        %2260 = vmatpush1.msra.mxu0 %v2259
        %v2261 = vand.u32 %v424, 4294901760
        %2262 = vmatprep.subr.mxu0 %v2261
        %v2263 = vand.u32 %v421, 4294901760
        %2264 = vmatpush1.msra.mxu0 %v2263
        %2265 = vmatprep.subr.mxu0 0.0
        %2266 = vmatpush1.msra.mxu0 0.0
        %2267 = vmatprep.subr.mxu0 0.0
        %2268 = vmatpush1.msra.mxu0 0.0
        %2269 = vmatprep.subr.mxu0 0.0
        %2270 = vmatpush1.msra.mxu0 0.0
        %2271 = vmatprep.subr.mxu0 0.0
        %2272 = vmatpush1.msra.mxu0 0.0
        %2273 = vmatprep.subr.mxu0 0.0
        %2274 = vmatpush1.msra.mxu0 0.0
        %2275 = vmatprep.subr.mxu0 0.0
        %2276 = vmatpush1.msra.mxu0 0.0
        %2277 = vmatprep.subr.mxu0 0.0
        %2278 = vmatpush1.msra.mxu0 0.0
        %2279 = vmatprep.subr.mxu0 0.0
        %2280 = vmatpush1.msra.mxu0 0.0
        %2281 = vmatprep.subr.mxu0 0.0
        %2282 = vmatpush1.msra.mxu0 0.0
        %2283 = vmatprep.subr.mxu0 0.0
        %2284 = vmatpush1.msra.mxu0 0.0
        %2285 = vmatprep.subr.mxu0 0.0
        %2286 = vmatpush1.msra.mxu0 0.0
        %2287 = vmatprep.subr.mxu0 0.0
        %2288 = vmatpush1.msra.mxu0 0.0
        %2289 = vmatprep.subr.mxu0 0.0
        %2290 = vmatpush1.msra.mxu0 0.0
        %2291 = vmatprep.subr.mxu0 0.0
        %2292 = vmatpush1.msra.mxu0 0.0
        %2293 = vmatprep.subr.mxu0 0.0
        %2294 = vmatpush1.msra.mxu0 0.0
        %2295 = vmatprep.subr.mxu0 0.0
        %2296 = vmatpush1.msra.mxu0 0.0
        %2297 = vmatprep.subr.mxu0 0.0
        %2298 = vmatpush1.msra.mxu0 0.0
        %2299 = vmatprep.subr.mxu0 0.0
        %2300 = vmatpush1.msra.mxu0 0.0
        %2301 = vmatprep.subr.mxu0 0.0
        %2302 = vmatpush1.msra.mxu0 0.0
        %2303 = vmatprep.subr.mxu0 0.0
        %2304 = vmatpush1.msra.mxu0 0.0
        %2305 = vmatprep.subr.mxu0 0.0
        %2306 = vmatpush1.msra.mxu0 0.0
        %2307 = vmatprep.subr.mxu0 0.0
        %2308 = vmatpush1.msra.mxu0 0.0
        %2309 = vmatprep.subr.mxu0 0.0
        %2310 = vmatpush1.msra.mxu0 0.0
        %2311 = vmatprep.subr.mxu0 0.0
        %2312 = vmatpush1.msra.mxu0 0.0
        %2313 = vmatprep.subr.mxu0 0.0
        %2314 = vmatpush1.msra.mxu0 0.0
        %2315 = vmatprep.subr.mxu0 0.0
        %2316 = vmatpush1.msra.mxu0 0.0
        %2317 = vmatprep.subr.mxu0 0.0
        %2318 = vmatpush1.msra.mxu0 0.0
        %2319 = vmatprep.subr.mxu0 0.0
        %2320 = vmatpush1.msra.mxu0 0.0
        %2321 = vmatprep.subr.mxu0 0.0
        %2322 = vmatpush1.msra.mxu0 0.0
        %2323 = vmatprep.mubr.f32.mxu0 0.0
        %v2324 = vand.u32 %v1722, 4294901760
        %2325 = vmatmul.mubr.f32.gmra.mrb[0].mxu0 %v2324
        %v2326 = vpop.f32.mrb[0].mxu0
        %v2327 = vadd.f32 %v2235, %v2326
        %v2328 = vpop.f32.mrb[0].mxu0
        %v2329 = vadd.f32 %v2237, %v2328
        %2330 = vmatprep.mubr.f32.mxu0 0.0
        %v2331 = vand.u32 %v1725, 4294901760
        %2332 = vmatmul.mubr.f32.gmra.mrb[0].mxu0 %v2331
        %v2333 = vpop.f32.mrb[0].mxu0
        %v2334 = vadd.f32 %v2242, %v2333
        %v2335 = vpop.f32.mrb[0].mxu0
        %v2336 = vadd.f32 %v2244, %v2335
        %2337 = vmatprep.mubr.f32.mxu0 0.0
        %v2338 = vand.u32 %v1728, 4294901760
        %2339 = vmatmul.mubr.f32.gmra.mrb[0].mxu0 %v2338
        %v2340 = vpop.f32.mrb[0].mxu0
        %v2341 = vadd.f32 %v2249, %v2340
        %v2342 = vpop.f32.mrb[0].mxu0
        %v2343 = vadd.f32 %v2251, %v2342
        %2344 = vdwg.mxu0
        %v2345 = vmul.f32 %v2327, %v400
        %v2346 = vmul.f32 %v2329, %v401
        %v2347 = vmul.f32 %v2334, %v402
        %v2348 = vmul.f32 %v2336, %v403
        %v2349 = vmul.f32 %v2341, %v404
        %v2350 = vmul.f32 %v2343, %v405
        %v2351 = vadd.f32 %v2345, %v2347
        %v2352 = vsel %vm419, %v2349, 0.0
        %v2353 = vadd.f32 %v2351, %v2352
        %v2354 = vrot.slane %v2353, 4
        %v2355 = vadd.f32 %v2353, %v2354
        %v2356 = vrot.slane %v2355, 2
        %v2357 = vadd.f32 %v2355, %v2356
        %v2358 = vrot.slane %v2357, 1
        %v2359 = vadd.f32 %v2357, %v2358
        %v2360 = vadd.f32 %v2346, %v2348
        %v2361 = vsel %vm419, %v2350, 0.0
        %v2362 = vadd.f32 %v2360, %v2361
        %v2363 = vrot.slane %v2362, 4
        %v2364 = vadd.f32 %v2362, %v2363
        %v2365 = vrot.slane %v2364, 2
        %v2366 = vadd.f32 %v2364, %v2365
        %v2367 = vrot.slane %v2366, 1
        %v2368 = vadd.f32 %v2366, %v2367
        %s2369 = scalar_lea.vmem %s191, 72
        %v2370 = vld [vmem:[%s2369] sm:$0xff]
        %v2371 = vld [vmem:[%s2369 + $0x8] sm:$0xff]
        %v2372 = vld [vmem:[%s2369 + $0x10] sm:$0x3]
        %v2374 = vsel %vm409, %v2370, 0
        %v2377 = vsel %vm409, %v2371, 0
        %v2380 = vsel %vm409, %v2372, 0
        %v2382 = vand.u32 %v303, 4294901760
        %2383 = vmatprep.subr.mxu0 %v2382
        %v2384 = vand.u32 %v302, 4294901760
        %2385 = vmatpush1.msra.mxu0 %v2384
        %v2386 = vand.u32 %v305, 4294901760
        %2387 = vmatprep.subr.mxu0 %v2386
        %v2388 = vand.u32 %v304, 4294901760
        %2389 = vmatpush1.msra.mxu0 %v2388
        %v2390 = vand.u32 %v424, 4294901760
        %2391 = vmatprep.subr.mxu0 %v2390
        %v2392 = vand.u32 %v421, 4294901760
        %2393 = vmatpush1.msra.mxu0 %v2392
        %2394 = vmatprep.subr.mxu0 0.0
        %2395 = vmatpush1.msra.mxu0 0.0
        %2396 = vmatprep.subr.mxu0 0.0
        %2397 = vmatpush1.msra.mxu0 0.0
        %2398 = vmatprep.subr.mxu0 0.0
        %2399 = vmatpush1.msra.mxu0 0.0
        %2400 = vmatprep.subr.mxu0 0.0
        %2401 = vmatpush1.msra.mxu0 0.0
        %2402 = vmatprep.subr.mxu0 0.0
        %2403 = vmatpush1.msra.mxu0 0.0
        %2404 = vmatprep.subr.mxu0 0.0
        %2405 = vmatpush1.msra.mxu0 0.0
        %2406 = vmatprep.subr.mxu0 0.0
        %2407 = vmatpush1.msra.mxu0 0.0
        %2408 = vmatprep.subr.mxu0 0.0
        %2409 = vmatpush1.msra.mxu0 0.0
        %2410 = vmatprep.subr.mxu0 0.0
        %2411 = vmatpush1.msra.mxu0 0.0
        %2412 = vmatprep.subr.mxu0 0.0
        %2413 = vmatpush1.msra.mxu0 0.0
        %2414 = vmatprep.subr.mxu0 0.0
        %2415 = vmatpush1.msra.mxu0 0.0
        %2416 = vmatprep.subr.mxu0 0.0
        %2417 = vmatpush1.msra.mxu0 0.0
        %2418 = vmatprep.subr.mxu0 0.0
        %2419 = vmatpush1.msra.mxu0 0.0
        %2420 = vmatprep.subr.mxu0 0.0
        %2421 = vmatpush1.msra.mxu0 0.0
        %2422 = vmatprep.subr.mxu0 0.0
        %2423 = vmatpush1.msra.mxu0 0.0
        %2424 = vmatprep.subr.mxu0 0.0
        %2425 = vmatpush1.msra.mxu0 0.0
        %2426 = vmatprep.subr.mxu0 0.0
        %2427 = vmatpush1.msra.mxu0 0.0
        %2428 = vmatprep.subr.mxu0 0.0
        %2429 = vmatpush1.msra.mxu0 0.0
        %2430 = vmatprep.subr.mxu0 0.0
        %2431 = vmatpush1.msra.mxu0 0.0
        %2432 = vmatprep.subr.mxu0 0.0
        %2433 = vmatpush1.msra.mxu0 0.0
        %2434 = vmatprep.subr.mxu0 0.0
        %2435 = vmatpush1.msra.mxu0 0.0
        %2436 = vmatprep.subr.mxu0 0.0
        %2437 = vmatpush1.msra.mxu0 0.0
        %2438 = vmatprep.subr.mxu0 0.0
        %2439 = vmatpush1.msra.mxu0 0.0
        %2440 = vmatprep.subr.mxu0 0.0
        %2441 = vmatpush1.msra.mxu0 0.0
        %2442 = vmatprep.subr.mxu0 0.0
        %2443 = vmatpush1.msra.mxu0 0.0
        %2444 = vmatprep.subr.mxu0 0.0
        %2445 = vmatpush1.msra.mxu0 0.0
        %2446 = vmatprep.subr.mxu0 0.0
        %2447 = vmatpush1.msra.mxu0 0.0
        %2448 = vmatprep.subr.mxu0 0.0
        %2449 = vmatpush1.msra.mxu0 0.0
        %2450 = vmatprep.subr.mxu0 0.0
        %2451 = vmatpush1.msra.mxu0 0.0
        %2452 = vmatprep.mubr.f32.mxu0 0.0
        %v2453 = vand.u32 %v2374, 4294901760
        %v2454 = vsub.f32 %v2374, %v2453
        %v2455 = vand.u32 %v2454, 4294901760
        %v2456 = vsub.f32 %v2454, %v2455
        %v2457 = vand.u32 %v2456, 4294901760
        %2458 = vmatmul.mubr.f32.gmra.mrb[0].mxu0 %v2457
        %v2459 = vpop.f32.mrb[0].mxu0
        %v2460 = vadd.f32 0.0, %v2459
        %v2461 = vpop.f32.mrb[0].mxu0
        %v2462 = vadd.f32 0.0, %v2461
        %2463 = vmatprep.mubr.f32.mxu0 0.0
        %v2464 = vand.u32 %v2377, 4294901760
        %v2465 = vsub.f32 %v2377, %v2464
        %v2466 = vand.u32 %v2465, 4294901760
        %v2467 = vsub.f32 %v2465, %v2466
        %v2468 = vand.u32 %v2467, 4294901760
        %2469 = vmatmul.mubr.f32.gmra.mrb[0].mxu0 %v2468
        %v2470 = vpop.f32.mrb[0].mxu0
        %v2471 = vadd.f32 0.0, %v2470
        %v2472 = vpop.f32.mrb[0].mxu0
        %v2473 = vadd.f32 0.0, %v2472
        %2474 = vmatprep.mubr.f32.mxu0 0.0
        %v2475 = vand.u32 %v2380, 4294901760
        %v2476 = vsub.f32 %v2380, %v2475
        %v2477 = vand.u32 %v2476, 4294901760
        %v2478 = vsub.f32 %v2476, %v2477
        %v2479 = vand.u32 %v2478, 4294901760
        %2480 = vmatmul.mubr.f32.gmra.mrb[0].mxu0 %v2479
        %v2481 = vpop.f32.mrb[0].mxu0
        %v2482 = vadd.f32 0.0, %v2481
        %v2483 = vpop.f32.mrb[0].mxu0
        %v2484 = vadd.f32 0.0, %v2483
        %2485 = vdwg.mxu0
        %v2486 = vand.u32 %v303, 4294901760
        %v2487 = vsub.f32 %v303, %v2486
        %v2488 = vand.u32 %v2487, 4294901760
        %v2489 = vsub.f32 %v2487, %v2488
        %v2490 = vand.u32 %v2489, 4294901760
        %2491 = vmatprep.subr.mxu0 %v2490
        %v2492 = vand.u32 %v302, 4294901760
        %v2493 = vsub.f32 %v302, %v2492
        %v2494 = vand.u32 %v2493, 4294901760
        %v2495 = vsub.f32 %v2493, %v2494
        %v2496 = vand.u32 %v2495, 4294901760
        %2497 = vmatpush1.msra.mxu0 %v2496
        %v2498 = vand.u32 %v305, 4294901760
        %v2499 = vsub.f32 %v305, %v2498
        %v2500 = vand.u32 %v2499, 4294901760
        %v2501 = vsub.f32 %v2499, %v2500
        %v2502 = vand.u32 %v2501, 4294901760
        %2503 = vmatprep.subr.mxu0 %v2502
        %v2504 = vand.u32 %v304, 4294901760
        %v2505 = vsub.f32 %v304, %v2504
        %v2506 = vand.u32 %v2505, 4294901760
        %v2507 = vsub.f32 %v2505, %v2506
        %v2508 = vand.u32 %v2507, 4294901760
        %2509 = vmatpush1.msra.mxu0 %v2508
        %v2510 = vand.u32 %v424, 4294901760
        %v2511 = vsub.f32 %v424, %v2510
        %v2512 = vand.u32 %v2511, 4294901760
        %v2513 = vsub.f32 %v2511, %v2512
        %v2514 = vand.u32 %v2513, 4294901760
        %2515 = vmatprep.subr.mxu0 %v2514
        %v2516 = vand.u32 %v421, 4294901760
        %v2517 = vsub.f32 %v421, %v2516
        %v2518 = vand.u32 %v2517, 4294901760
        %v2519 = vsub.f32 %v2517, %v2518
        %v2520 = vand.u32 %v2519, 4294901760
        %2521 = vmatpush1.msra.mxu0 %v2520
        %2522 = vmatprep.subr.mxu0 0.0
        %2523 = vmatpush1.msra.mxu0 0.0
        %2524 = vmatprep.subr.mxu0 0.0
        %2525 = vmatpush1.msra.mxu0 0.0
        %2526 = vmatprep.subr.mxu0 0.0
        %2527 = vmatpush1.msra.mxu0 0.0
        %2528 = vmatprep.subr.mxu0 0.0
        %2529 = vmatpush1.msra.mxu0 0.0
        %2530 = vmatprep.subr.mxu0 0.0
        %2531 = vmatpush1.msra.mxu0 0.0
        %2532 = vmatprep.subr.mxu0 0.0
        %2533 = vmatpush1.msra.mxu0 0.0
        %2534 = vmatprep.subr.mxu0 0.0
        %2535 = vmatpush1.msra.mxu0 0.0
        %2536 = vmatprep.subr.mxu0 0.0
        %2537 = vmatpush1.msra.mxu0 0.0
        %2538 = vmatprep.subr.mxu0 0.0
        %2539 = vmatpush1.msra.mxu0 0.0
        %2540 = vmatprep.subr.mxu0 0.0
        %2541 = vmatpush1.msra.mxu0 0.0
        %2542 = vmatprep.subr.mxu0 0.0
        %2543 = vmatpush1.msra.mxu0 0.0
        %2544 = vmatprep.subr.mxu0 0.0
        %2545 = vmatpush1.msra.mxu0 0.0
        %2546 = vmatprep.subr.mxu0 0.0
        %2547 = vmatpush1.msra.mxu0 0.0
        %2548 = vmatprep.subr.mxu0 0.0
        %2549 = vmatpush1.msra.mxu0 0.0
        %2550 = vmatprep.subr.mxu0 0.0
        %2551 = vmatpush1.msra.mxu0 0.0
        %2552 = vmatprep.subr.mxu0 0.0
        %2553 = vmatpush1.msra.mxu0 0.0
        %2554 = vmatprep.subr.mxu0 0.0
        %2555 = vmatpush1.msra.mxu0 0.0
        %2556 = vmatprep.subr.mxu0 0.0
        %2557 = vmatpush1.msra.mxu0 0.0
        %2558 = vmatprep.subr.mxu0 0.0
        %2559 = vmatpush1.msra.mxu0 0.0
        %2560 = vmatprep.subr.mxu0 0.0
        %2561 = vmatpush1.msra.mxu0 0.0
        %2562 = vmatprep.subr.mxu0 0.0
        %2563 = vmatpush1.msra.mxu0 0.0
        %2564 = vmatprep.subr.mxu0 0.0
        %2565 = vmatpush1.msra.mxu0 0.0
        %2566 = vmatprep.subr.mxu0 0.0
        %2567 = vmatpush1.msra.mxu0 0.0
        %2568 = vmatprep.subr.mxu0 0.0
        %2569 = vmatpush1.msra.mxu0 0.0
        %2570 = vmatprep.subr.mxu0 0.0
        %2571 = vmatpush1.msra.mxu0 0.0
        %2572 = vmatprep.subr.mxu0 0.0
        %2573 = vmatpush1.msra.mxu0 0.0
        %2574 = vmatprep.subr.mxu0 0.0
        %2575 = vmatpush1.msra.mxu0 0.0
        %2576 = vmatprep.subr.mxu0 0.0
        %2577 = vmatpush1.msra.mxu0 0.0
        %2578 = vmatprep.subr.mxu0 0.0
        %2579 = vmatpush1.msra.mxu0 0.0
        %2580 = vmatprep.mubr.f32.mxu0 0.0
        %v2581 = vand.u32 %v2374, 4294901760
        %2582 = vmatmul.mubr.f32.gmra.mrb[0].mxu0 %v2581
        %v2583 = vpop.f32.mrb[0].mxu0
        %v2584 = vadd.f32 %v2460, %v2583
        %v2585 = vpop.f32.mrb[0].mxu0
        %v2586 = vadd.f32 %v2462, %v2585
        %2587 = vmatprep.mubr.f32.mxu0 0.0
        %v2588 = vand.u32 %v2377, 4294901760
        %2589 = vmatmul.mubr.f32.gmra.mrb[0].mxu0 %v2588
        %v2590 = vpop.f32.mrb[0].mxu0
        %v2591 = vadd.f32 %v2471, %v2590
        %v2592 = vpop.f32.mrb[0].mxu0
        %v2593 = vadd.f32 %v2473, %v2592
        %2594 = vmatprep.mubr.f32.mxu0 0.0
        %v2595 = vand.u32 %v2380, 4294901760
        %2596 = vmatmul.mubr.f32.gmra.mrb[0].mxu0 %v2595
        %v2597 = vpop.f32.mrb[0].mxu0
        %v2598 = vadd.f32 %v2482, %v2597
        %v2599 = vpop.f32.mrb[0].mxu0
        %v2600 = vadd.f32 %v2484, %v2599
        %2601 = vdwg.mxu0
        %v2602 = vand.u32 %v303, 4294901760
        %v2603 = vsub.f32 %v303, %v2602
        %2604 = vmatprep.subr.mxu0 %v2603
        %v2605 = vand.u32 %v302, 4294901760
        %v2606 = vsub.f32 %v302, %v2605
        %2607 = vmatpush1.msra.mxu0 %v2606
        %v2608 = vand.u32 %v305, 4294901760
        %v2609 = vsub.f32 %v305, %v2608
        %2610 = vmatprep.subr.mxu0 %v2609
        %v2611 = vand.u32 %v304, 4294901760
        %v2612 = vsub.f32 %v304, %v2611
        %2613 = vmatpush1.msra.mxu0 %v2612
        %v2614 = vand.u32 %v424, 4294901760
        %v2615 = vsub.f32 %v424, %v2614
        %2616 = vmatprep.subr.mxu0 %v2615
        %v2617 = vand.u32 %v421, 4294901760
        %v2618 = vsub.f32 %v421, %v2617
        %2619 = vmatpush1.msra.mxu0 %v2618
        %2620 = vmatprep.subr.mxu0 0.0
        %2621 = vmatpush1.msra.mxu0 0.0
        %2622 = vmatprep.subr.mxu0 0.0
        %2623 = vmatpush1.msra.mxu0 0.0
        %2624 = vmatprep.subr.mxu0 0.0
        %2625 = vmatpush1.msra.mxu0 0.0
        %2626 = vmatprep.subr.mxu0 0.0
        %2627 = vmatpush1.msra.mxu0 0.0
        %2628 = vmatprep.subr.mxu0 0.0
        %2629 = vmatpush1.msra.mxu0 0.0
        %2630 = vmatprep.subr.mxu0 0.0
        %2631 = vmatpush1.msra.mxu0 0.0
        %2632 = vmatprep.subr.mxu0 0.0
        %2633 = vmatpush1.msra.mxu0 0.0
        %2634 = vmatprep.subr.mxu0 0.0
        %2635 = vmatpush1.msra.mxu0 0.0
        %2636 = vmatprep.subr.mxu0 0.0
        %2637 = vmatpush1.msra.mxu0 0.0
        %2638 = vmatprep.subr.mxu0 0.0
        %2639 = vmatpush1.msra.mxu0 0.0
        %2640 = vmatprep.subr.mxu0 0.0
        %2641 = vmatpush1.msra.mxu0 0.0
        %2642 = vmatprep.subr.mxu0 0.0
        %2643 = vmatpush1.msra.mxu0 0.0
        %2644 = vmatprep.subr.mxu0 0.0
        %2645 = vmatpush1.msra.mxu0 0.0
        %2646 = vmatprep.subr.mxu0 0.0
        %2647 = vmatpush1.msra.mxu0 0.0
        %2648 = vmatprep.subr.mxu0 0.0
        %2649 = vmatpush1.msra.mxu0 0.0
        %2650 = vmatprep.subr.mxu0 0.0
        %2651 = vmatpush1.msra.mxu0 0.0
        %2652 = vmatprep.subr.mxu0 0.0
        %2653 = vmatpush1.msra.mxu0 0.0
        %2654 = vmatprep.subr.mxu0 0.0
        %2655 = vmatpush1.msra.mxu0 0.0
        %2656 = vmatprep.subr.mxu0 0.0
        %2657 = vmatpush1.msra.mxu0 0.0
        %2658 = vmatprep.subr.mxu0 0.0
        %2659 = vmatpush1.msra.mxu0 0.0
        %2660 = vmatprep.subr.mxu0 0.0
        %2661 = vmatpush1.msra.mxu0 0.0
        %2662 = vmatprep.subr.mxu0 0.0
        %2663 = vmatpush1.msra.mxu0 0.0
        %2664 = vmatprep.subr.mxu0 0.0
        %2665 = vmatpush1.msra.mxu0 0.0
        %2666 = vmatprep.subr.mxu0 0.0
        %2667 = vmatpush1.msra.mxu0 0.0
        %2668 = vmatprep.subr.mxu0 0.0
        %2669 = vmatpush1.msra.mxu0 0.0
        %2670 = vmatprep.subr.mxu0 0.0
        %2671 = vmatpush1.msra.mxu0 0.0
        %2672 = vmatprep.subr.mxu0 0.0
        %2673 = vmatpush1.msra.mxu0 0.0
        %2674 = vmatprep.subr.mxu0 0.0
        %2675 = vmatpush1.msra.mxu0 0.0
        %2676 = vmatprep.subr.mxu0 0.0
        %2677 = vmatpush1.msra.mxu0 0.0
        %2678 = vmatprep.mubr.f32.mxu0 0.0
        %v2679 = vand.u32 %v2374, 4294901760
        %v2680 = vsub.f32 %v2374, %v2679
        %2681 = vmatmul.mubr.f32.gmra.mrb[0].mxu0 %v2680
        %v2682 = vpop.f32.mrb[0].mxu0
        %v2683 = vadd.f32 %v2584, %v2682
        %v2684 = vpop.f32.mrb[0].mxu0
        %v2685 = vadd.f32 %v2586, %v2684
        %2686 = vmatprep.mubr.f32.mxu0 0.0
        %v2687 = vand.u32 %v2377, 4294901760
        %v2688 = vsub.f32 %v2377, %v2687
        %2689 = vmatmul.mubr.f32.gmra.mrb[0].mxu0 %v2688
        %v2690 = vpop.f32.mrb[0].mxu0
        %v2691 = vadd.f32 %v2591, %v2690
        %v2692 = vpop.f32.mrb[0].mxu0
        %v2693 = vadd.f32 %v2593, %v2692
        %2694 = vmatprep.mubr.f32.mxu0 0.0
        %v2695 = vand.u32 %v2380, 4294901760
        %v2696 = vsub.f32 %v2380, %v2695
        %2697 = vmatmul.mubr.f32.gmra.mrb[0].mxu0 %v2696
        %v2698 = vpop.f32.mrb[0].mxu0
        %v2699 = vadd.f32 %v2598, %v2698
        %v2700 = vpop.f32.mrb[0].mxu0
        %v2701 = vadd.f32 %v2600, %v2700
        %2702 = vdwg.mxu0
        %v2703 = vand.u32 %v303, 4294901760
        %2704 = vmatprep.subr.mxu0 %v2703
        %v2705 = vand.u32 %v302, 4294901760
        %2706 = vmatpush1.msra.mxu0 %v2705
        %v2707 = vand.u32 %v305, 4294901760
        %2708 = vmatprep.subr.mxu0 %v2707
        %v2709 = vand.u32 %v304, 4294901760
        %2710 = vmatpush1.msra.mxu0 %v2709
        %v2711 = vand.u32 %v424, 4294901760
        %2712 = vmatprep.subr.mxu0 %v2711
        %v2713 = vand.u32 %v421, 4294901760
        %2714 = vmatpush1.msra.mxu0 %v2713
        %2715 = vmatprep.subr.mxu0 0.0
        %2716 = vmatpush1.msra.mxu0 0.0
        %2717 = vmatprep.subr.mxu0 0.0
        %2718 = vmatpush1.msra.mxu0 0.0
        %2719 = vmatprep.subr.mxu0 0.0
        %2720 = vmatpush1.msra.mxu0 0.0
        %2721 = vmatprep.subr.mxu0 0.0
        %2722 = vmatpush1.msra.mxu0 0.0
        %2723 = vmatprep.subr.mxu0 0.0
        %2724 = vmatpush1.msra.mxu0 0.0
        %2725 = vmatprep.subr.mxu0 0.0
        %2726 = vmatpush1.msra.mxu0 0.0
        %2727 = vmatprep.subr.mxu0 0.0
        %2728 = vmatpush1.msra.mxu0 0.0
        %2729 = vmatprep.subr.mxu0 0.0
        %2730 = vmatpush1.msra.mxu0 0.0
        %2731 = vmatprep.subr.mxu0 0.0
        %2732 = vmatpush1.msra.mxu0 0.0
        %2733 = vmatprep.subr.mxu0 0.0
        %2734 = vmatpush1.msra.mxu0 0.0
        %2735 = vmatprep.subr.mxu0 0.0
        %2736 = vmatpush1.msra.mxu0 0.0
        %2737 = vmatprep.subr.mxu0 0.0
        %2738 = vmatpush1.msra.mxu0 0.0
        %2739 = vmatprep.subr.mxu0 0.0
        %2740 = vmatpush1.msra.mxu0 0.0
        %2741 = vmatprep.subr.mxu0 0.0
        %2742 = vmatpush1.msra.mxu0 0.0
        %2743 = vmatprep.subr.mxu0 0.0
        %2744 = vmatpush1.msra.mxu0 0.0
        %2745 = vmatprep.subr.mxu0 0.0
        %2746 = vmatpush1.msra.mxu0 0.0
        %2747 = vmatprep.subr.mxu0 0.0
        %2748 = vmatpush1.msra.mxu0 0.0
        %2749 = vmatprep.subr.mxu0 0.0
        %2750 = vmatpush1.msra.mxu0 0.0
        %2751 = vmatprep.subr.mxu0 0.0
        %2752 = vmatpush1.msra.mxu0 0.0
        %2753 = vmatprep.subr.mxu0 0.0
        %2754 = vmatpush1.msra.mxu0 0.0
        %2755 = vmatprep.subr.mxu0 0.0
        %2756 = vmatpush1.msra.mxu0 0.0
        %2757 = vmatprep.subr.mxu0 0.0
        %2758 = vmatpush1.msra.mxu0 0.0
        %2759 = vmatprep.subr.mxu0 0.0
        %2760 = vmatpush1.msra.mxu0 0.0
        %2761 = vmatprep.subr.mxu0 0.0
        %2762 = vmatpush1.msra.mxu0 0.0
        %2763 = vmatprep.subr.mxu0 0.0
        %2764 = vmatpush1.msra.mxu0 0.0
        %2765 = vmatprep.subr.mxu0 0.0
        %2766 = vmatpush1.msra.mxu0 0.0
        %2767 = vmatprep.subr.mxu0 0.0
        %2768 = vmatpush1.msra.mxu0 0.0
        %2769 = vmatprep.subr.mxu0 0.0
        %2770 = vmatpush1.msra.mxu0 0.0
        %2771 = vmatprep.subr.mxu0 0.0
        %2772 = vmatpush1.msra.mxu0 0.0
        %2773 = vmatprep.mubr.f32.mxu0 0.0
        %v2774 = vand.u32 %v2374, 4294901760
        %v2775 = vsub.f32 %v2374, %v2774
        %v2776 = vand.u32 %v2775, 4294901760
        %2777 = vmatmul.mubr.f32.gmra.mrb[0].mxu0 %v2776
        %v2778 = vpop.f32.mrb[0].mxu0
        %v2779 = vadd.f32 %v2683, %v2778
        %v2780 = vpop.f32.mrb[0].mxu0
        %v2781 = vadd.f32 %v2685, %v2780
        %2782 = vmatprep.mubr.f32.mxu0 0.0
        %v2783 = vand.u32 %v2377, 4294901760
        %v2784 = vsub.f32 %v2377, %v2783
        %v2785 = vand.u32 %v2784, 4294901760
        %2786 = vmatmul.mubr.f32.gmra.mrb[0].mxu0 %v2785
        %v2787 = vpop.f32.mrb[0].mxu0
        %v2788 = vadd.f32 %v2691, %v2787
        %v2789 = vpop.f32.mrb[0].mxu0
        %v2790 = vadd.f32 %v2693, %v2789
        %2791 = vmatprep.mubr.f32.mxu0 0.0
        %v2792 = vand.u32 %v2380, 4294901760
        %v2793 = vsub.f32 %v2380, %v2792
        %v2794 = vand.u32 %v2793, 4294901760
        %2795 = vmatmul.mubr.f32.gmra.mrb[0].mxu0 %v2794
        %v2796 = vpop.f32.mrb[0].mxu0
        %v2797 = vadd.f32 %v2699, %v2796
        %v2798 = vpop.f32.mrb[0].mxu0
        %v2799 = vadd.f32 %v2701, %v2798
        %2800 = vdwg.mxu0
        %v2801 = vand.u32 %v303, 4294901760
        %v2802 = vsub.f32 %v303, %v2801
        %v2803 = vand.u32 %v2802, 4294901760
        %2804 = vmatprep.subr.mxu0 %v2803
        %v2805 = vand.u32 %v302, 4294901760
        %v2806 = vsub.f32 %v302, %v2805
        %v2807 = vand.u32 %v2806, 4294901760
        %2808 = vmatpush1.msra.mxu0 %v2807
        %v2809 = vand.u32 %v305, 4294901760
        %v2810 = vsub.f32 %v305, %v2809
        %v2811 = vand.u32 %v2810, 4294901760
        %2812 = vmatprep.subr.mxu0 %v2811
        %v2813 = vand.u32 %v304, 4294901760
        %v2814 = vsub.f32 %v304, %v2813
        %v2815 = vand.u32 %v2814, 4294901760
        %2816 = vmatpush1.msra.mxu0 %v2815
        %v2817 = vand.u32 %v424, 4294901760
        %v2818 = vsub.f32 %v424, %v2817
        %v2819 = vand.u32 %v2818, 4294901760
        %2820 = vmatprep.subr.mxu0 %v2819
        %v2821 = vand.u32 %v421, 4294901760
        %v2822 = vsub.f32 %v421, %v2821
        %v2823 = vand.u32 %v2822, 4294901760
        %2824 = vmatpush1.msra.mxu0 %v2823
        %2825 = vmatprep.subr.mxu0 0.0
        %2826 = vmatpush1.msra.mxu0 0.0
        %2827 = vmatprep.subr.mxu0 0.0
        %2828 = vmatpush1.msra.mxu0 0.0
        %2829 = vmatprep.subr.mxu0 0.0
        %2830 = vmatpush1.msra.mxu0 0.0
        %2831 = vmatprep.subr.mxu0 0.0
        %2832 = vmatpush1.msra.mxu0 0.0
        %2833 = vmatprep.subr.mxu0 0.0
        %2834 = vmatpush1.msra.mxu0 0.0
        %2835 = vmatprep.subr.mxu0 0.0
        %2836 = vmatpush1.msra.mxu0 0.0
        %2837 = vmatprep.subr.mxu0 0.0
        %2838 = vmatpush1.msra.mxu0 0.0
        %2839 = vmatprep.subr.mxu0 0.0
        %2840 = vmatpush1.msra.mxu0 0.0
        %2841 = vmatprep.subr.mxu0 0.0
        %2842 = vmatpush1.msra.mxu0 0.0
        %2843 = vmatprep.subr.mxu0 0.0
        %2844 = vmatpush1.msra.mxu0 0.0
        %2845 = vmatprep.subr.mxu0 0.0
        %2846 = vmatpush1.msra.mxu0 0.0
        %2847 = vmatprep.subr.mxu0 0.0
        %2848 = vmatpush1.msra.mxu0 0.0
        %2849 = vmatprep.subr.mxu0 0.0
        %2850 = vmatpush1.msra.mxu0 0.0
        %2851 = vmatprep.subr.mxu0 0.0
        %2852 = vmatpush1.msra.mxu0 0.0
        %2853 = vmatprep.subr.mxu0 0.0
        %2854 = vmatpush1.msra.mxu0 0.0
        %2855 = vmatprep.subr.mxu0 0.0
        %2856 = vmatpush1.msra.mxu0 0.0
        %2857 = vmatprep.subr.mxu0 0.0
        %2858 = vmatpush1.msra.mxu0 0.0
        %2859 = vmatprep.subr.mxu0 0.0
        %2860 = vmatpush1.msra.mxu0 0.0
        %2861 = vmatprep.subr.mxu0 0.0
        %2862 = vmatpush1.msra.mxu0 0.0
        %2863 = vmatprep.subr.mxu0 0.0
        %2864 = vmatpush1.msra.mxu0 0.0
        %2865 = vmatprep.subr.mxu0 0.0
        %2866 = vmatpush1.msra.mxu0 0.0
        %2867 = vmatprep.subr.mxu0 0.0
        %2868 = vmatpush1.msra.mxu0 0.0
        %2869 = vmatprep.subr.mxu0 0.0
        %2870 = vmatpush1.msra.mxu0 0.0
        %2871 = vmatprep.subr.mxu0 0.0
        %2872 = vmatpush1.msra.mxu0 0.0
        %2873 = vmatprep.subr.mxu0 0.0
        %2874 = vmatpush1.msra.mxu0 0.0
        %2875 = vmatprep.subr.mxu0 0.0
        %2876 = vmatpush1.msra.mxu0 0.0
        %2877 = vmatprep.subr.mxu0 0.0
        %2878 = vmatpush1.msra.mxu0 0.0
        %2879 = vmatprep.subr.mxu0 0.0
        %2880 = vmatpush1.msra.mxu0 0.0
        %2881 = vmatprep.subr.mxu0 0.0
        %2882 = vmatpush1.msra.mxu0 0.0
        %2883 = vmatprep.mubr.f32.mxu0 0.0
        %v2884 = vand.u32 %v2374, 4294901760
        %2885 = vmatmul.mubr.f32.gmra.mrb[0].mxu0 %v2884
        %v2886 = vpop.f32.mrb[0].mxu0
        %v2887 = vadd.f32 %v2779, %v2886
        %v2888 = vpop.f32.mrb[0].mxu0
        %v2889 = vadd.f32 %v2781, %v2888
        %2890 = vmatprep.mubr.f32.mxu0 0.0
        %v2891 = vand.u32 %v2377, 4294901760
        %2892 = vmatmul.mubr.f32.gmra.mrb[0].mxu0 %v2891
        %v2893 = vpop.f32.mrb[0].mxu0
        %v2894 = vadd.f32 %v2788, %v2893
        %v2895 = vpop.f32.mrb[0].mxu0
        %v2896 = vadd.f32 %v2790, %v2895
        %2897 = vmatprep.mubr.f32.mxu0 0.0
        %v2898 = vand.u32 %v2380, 4294901760
        %2899 = vmatmul.mubr.f32.gmra.mrb[0].mxu0 %v2898
        %v2900 = vpop.f32.mrb[0].mxu0
        %v2901 = vadd.f32 %v2797, %v2900
        %v2902 = vpop.f32.mrb[0].mxu0
        %v2903 = vadd.f32 %v2799, %v2902
        %2904 = vdwg.mxu0
        %v2905 = vand.u32 %v303, 4294901760
        %2906 = vmatprep.subr.mxu0 %v2905
        %v2907 = vand.u32 %v302, 4294901760
        %2908 = vmatpush1.msra.mxu0 %v2907
        %v2909 = vand.u32 %v305, 4294901760
        %2910 = vmatprep.subr.mxu0 %v2909
        %v2911 = vand.u32 %v304, 4294901760
        %2912 = vmatpush1.msra.mxu0 %v2911
        %v2913 = vand.u32 %v424, 4294901760
        %2914 = vmatprep.subr.mxu0 %v2913
        %v2915 = vand.u32 %v421, 4294901760
        %2916 = vmatpush1.msra.mxu0 %v2915
        %2917 = vmatprep.subr.mxu0 0.0
        %2918 = vmatpush1.msra.mxu0 0.0
        %2919 = vmatprep.subr.mxu0 0.0
        %2920 = vmatpush1.msra.mxu0 0.0
        %2921 = vmatprep.subr.mxu0 0.0
        %2922 = vmatpush1.msra.mxu0 0.0
        %2923 = vmatprep.subr.mxu0 0.0
        %2924 = vmatpush1.msra.mxu0 0.0
        %2925 = vmatprep.subr.mxu0 0.0
        %2926 = vmatpush1.msra.mxu0 0.0
        %2927 = vmatprep.subr.mxu0 0.0
        %2928 = vmatpush1.msra.mxu0 0.0
        %2929 = vmatprep.subr.mxu0 0.0
        %2930 = vmatpush1.msra.mxu0 0.0
        %2931 = vmatprep.subr.mxu0 0.0
        %2932 = vmatpush1.msra.mxu0 0.0
        %2933 = vmatprep.subr.mxu0 0.0
        %2934 = vmatpush1.msra.mxu0 0.0
        %2935 = vmatprep.subr.mxu0 0.0
        %2936 = vmatpush1.msra.mxu0 0.0
        %2937 = vmatprep.subr.mxu0 0.0
        %2938 = vmatpush1.msra.mxu0 0.0
        %2939 = vmatprep.subr.mxu0 0.0
        %2940 = vmatpush1.msra.mxu0 0.0
        %2941 = vmatprep.subr.mxu0 0.0
        %2942 = vmatpush1.msra.mxu0 0.0
        %2943 = vmatprep.subr.mxu0 0.0
        %2944 = vmatpush1.msra.mxu0 0.0
        %2945 = vmatprep.subr.mxu0 0.0
        %2946 = vmatpush1.msra.mxu0 0.0
        %2947 = vmatprep.subr.mxu0 0.0
        %2948 = vmatpush1.msra.mxu0 0.0
        %2949 = vmatprep.subr.mxu0 0.0
        %2950 = vmatpush1.msra.mxu0 0.0
        %2951 = vmatprep.subr.mxu0 0.0
        %2952 = vmatpush1.msra.mxu0 0.0
        %2953 = vmatprep.subr.mxu0 0.0
        %2954 = vmatpush1.msra.mxu0 0.0
        %2955 = vmatprep.subr.mxu0 0.0
        %2956 = vmatpush1.msra.mxu0 0.0
        %2957 = vmatprep.subr.mxu0 0.0
        %2958 = vmatpush1.msra.mxu0 0.0
        %2959 = vmatprep.subr.mxu0 0.0
        %2960 = vmatpush1.msra.mxu0 0.0
        %2961 = vmatprep.subr.mxu0 0.0
        %2962 = vmatpush1.msra.mxu0 0.0
        %2963 = vmatprep.subr.mxu0 0.0
        %2964 = vmatpush1.msra.mxu0 0.0
        %2965 = vmatprep.subr.mxu0 0.0
        %2966 = vmatpush1.msra.mxu0 0.0
        %2967 = vmatprep.subr.mxu0 0.0
        %2968 = vmatpush1.msra.mxu0 0.0
        %2969 = vmatprep.subr.mxu0 0.0
        %2970 = vmatpush1.msra.mxu0 0.0
        %2971 = vmatprep.subr.mxu0 0.0
        %2972 = vmatpush1.msra.mxu0 0.0
        %2973 = vmatprep.subr.mxu0 0.0
        %2974 = vmatpush1.msra.mxu0 0.0
        %2975 = vmatprep.mubr.f32.mxu0 0.0
        %v2976 = vand.u32 %v2374, 4294901760
        %2977 = vmatmul.mubr.f32.gmra.mrb[0].mxu0 %v2976
        %v2978 = vpop.f32.mrb[0].mxu0
        %v2979 = vadd.f32 %v2887, %v2978
        %v2980 = vpop.f32.mrb[0].mxu0
        %v2981 = vadd.f32 %v2889, %v2980
        %2982 = vmatprep.mubr.f32.mxu0 0.0
        %v2983 = vand.u32 %v2377, 4294901760
        %2984 = vmatmul.mubr.f32.gmra.mrb[0].mxu0 %v2983
        %v2985 = vpop.f32.mrb[0].mxu0
        %v2986 = vadd.f32 %v2894, %v2985
        %v2987 = vpop.f32.mrb[0].mxu0
        %v2988 = vadd.f32 %v2896, %v2987
        %2989 = vmatprep.mubr.f32.mxu0 0.0
        %v2990 = vand.u32 %v2380, 4294901760
        %2991 = vmatmul.mubr.f32.gmra.mrb[0].mxu0 %v2990
        %v2992 = vpop.f32.mrb[0].mxu0
        %v2993 = vadd.f32 %v2901, %v2992
        %v2994 = vpop.f32.mrb[0].mxu0
        %v2995 = vadd.f32 %v2903, %v2994
        %2996 = vdwg.mxu0
        %v2997 = vmul.f32 %v2979, %v400
        %v2998 = vmul.f32 %v2981, %v401
        %v2999 = vmul.f32 %v2986, %v402
        %v3000 = vmul.f32 %v2988, %v403
        %v3001 = vmul.f32 %v2993, %v404
        %v3002 = vmul.f32 %v2995, %v405
        %v3003 = vadd.f32 %v2997, %v2999
        %v3004 = vsel %vm419, %v3001, 0.0
        %v3005 = vadd.f32 %v3003, %v3004
        %v3006 = vrot.slane %v3005, 4
        %v3007 = vadd.f32 %v3005, %v3006
        %v3008 = vrot.slane %v3007, 2
        %v3009 = vadd.f32 %v3007, %v3008
        %v3010 = vrot.slane %v3009, 1
        %v3011 = vadd.f32 %v3009, %v3010
        %v3012 = vadd.f32 %v2998, %v3000
        %v3013 = vsel %vm419, %v3002, 0.0
        %v3014 = vadd.f32 %v3012, %v3013
        %v3015 = vrot.slane %v3014, 4
        %v3016 = vadd.f32 %v3014, %v3015
        %v3017 = vrot.slane %v3016, 2
        %v3018 = vadd.f32 %v3016, %v3017
        %v3019 = vrot.slane %v3018, 1
        %v3020 = vadd.f32 %v3018, %v3019
        %vm3021 = vcmask 1040384
        %v3022 = vsel %vm3021, %v1055, %v1707
        %v3023 = vsel %vm3021, %v1064, %v1716
        %v3024 = vsel %vm419, %v3022, %v2359
        %v3025 = vsel %vm419, %v3023, %v2368
        %vm3026 = vcmask 1042432
        %v3027 = vsel %vm3026, %v3024, %v3011
        %v3028 = vsel %vm3026, %v3025, %v3020
        %v3031 = vcombine.low %v3027, %v3028
        %3033 = vst [vmem:[%s176] sm:$0xff] %v3031
        %s3034 = sand.u32 %s92, 1
        %s3035 = scalar_lea.sflag [#allocation3], %s3034
        %s3036 = sand.u32 %s92, 1
        %s3037 = smul.addr %s3036, 8
        %s3038 = scalar_lea.vmem [#allocation2], %s3037
        // Predicated region
        $region29: #{tpu_custom_call.1} parent=27 // pred_check
          %p3039 = pneg %p102
        $region30: #{tpu_custom_call.1} parent=27 // pred_check_branch
          %3041 = sbr.rel (%p3039) target = $region32
        $region31: #{tpu_custom_call.1} parent=27 // pred_region
          %s3042 = smul.u32 2, %s21
          %s3044 = ssub.s32 128, 128
          %3045 = vsyncadd %s3035, %s3044
          %s3046 = smul.addr %s20, 2
          %s3047 = sadd.s32 %s3042, %s3046
          %s3048 = smul.addr %s3047, 64
          %s3049 = scalar_lea.hbm %s2, %s3048
          %s3051 = sshll.u32 %s3038, 4
          %s3052 = int_to_ptr.vmem [resolvable:$true] %s3051
          %3054 = dma.vmem_to_hbm [thread:$0]  %s3052, 128, %s3049, %s3035
        $region32: #{tpu_custom_call.1} parent=27 // pred_fallthru
          _
      $region28: #{tpu_custom_call.1} parent=5 // pred_fallthru
        _
      %p3055 = scmp.le.s32.totalorder 2, %s11
      // Predicated region
      $region33: #{tpu_custom_call.1} parent=5 // pred_check
        %p3056 = pneg %p3055
      $region34: #{tpu_custom_call.1} parent=5 // pred_check_branch
        %3058 = sbr.rel (%p3056) target = $region36
      $region35: #{tpu_custom_call.1} parent=5 // pred_region
        %s3059 = ssub.s32 %s11, 2
        // Predicated region
        $region37: #{tpu_custom_call.1} parent=35 // pred_check
          %p3060 = pneg %p108
        $region38: #{tpu_custom_call.1} parent=35 // pred_check_branch
          %3062 = sbr.rel (%p3060) target = $region40
        $region39: #{tpu_custom_call.1} parent=35 // pred_region
          %s3063 = sand.u32 %s93, 1
          %s3064 = scalar_lea.sflag [#allocation3], %s3063
          %s3065 = sand.u32 %s93, 1
          %s3066 = smul.addr %s3065, 8
          %s3067 = scalar_lea.vmem [#allocation2], %s3066
          %3068 = dma.done %s3064, 128
        $region40: #{tpu_custom_call.1} parent=35 // pred_fallthru
          _
      $region36: #{tpu_custom_call.1} parent=5 // pred_fallthru
        _
    $region6: #{tpu_custom_call.1} parent=1 // loop_footer
      %s15 = sadd.s32 1, %s11
    $region7: #{tpu_custom_call.1} parent=1 // loop_footer_branch
      %10 = sbr.rel target = $region3
    $region8: #{tpu_custom_call.1} parent=1 // loop_exit
      _
    %3069 = vsyncpa [#allocation3], 1
    %s3070 = scalar_lea.sflag [#allocation3], 1
    %3071 = vsyncpa %s3070, 1

</llo_original>
